<compile_context>
chip_gen: v6e
topology: v6e:2x2x1
jax: 0.10.0
libtpu: 0.0.40
codegen_flags: <defaults>
</compile_context>

<pallas_src>
import functools
import math

import jax
import jax.numpy as jnp
from jax.experimental import pallas as pl
from jax.experimental.pallas import tpu as pltpu


# ----------------------------------------------------------------------------
# helpers
# ----------------------------------------------------------------------------
def _pick_tile(dim, candidates):
    """Largest candidate tile that evenly divides `dim`, else the full dim."""
    for c in candidates:
        if c <= dim and dim % c == 0:
            return c
    return dim


def _mosaic_params(sem, est_bytes):
    """dimension_semantics + an explicit scoped-VMEM limit sized to the tiles
    (raises v5e's 16 MiB default; stays within v7x's 64 MiB physical)."""
    limit = int(min(64 << 20, max(32 << 20, 2 * est_bytes)))
    return pltpu.CompilerParams(dimension_semantics=sem,
                                vmem_limit_bytes=limit)


# exact GELU (torch.nn.GELU default = erf form).  erf via Abramowitz-Stegun
# 7.1.26 (|err| < 1.5e-7) so only mul/add/exp (EUP) appear in Mosaic.
def _erf(x):
    a1, a2, a3, a4, a5 = (0.254829592, -0.284496736, 1.421413741,
                          -1.453152027, 1.061405429)
    p = 0.3275911
    sgn = jnp.where(x >= 0.0, 1.0, -1.0)
    ax = jnp.abs(x)
    t = 1.0 / (1.0 + p * ax)
    poly = ((((a5 * t + a4) * t + a3) * t + a2) * t + a1) * t
    return sgn * (1.0 - poly * jnp.exp(-ax * ax))


def _gelu_exact(x):
    return 0.5 * x * (1.0 + _erf(x * 0.7071067811865476))


# ----------------------------------------------------------------------------
# fused (LayerNorm ->) matmul (-> bias -> GELU -> residual -> LayerNorm) kernel
# ----------------------------------------------------------------------------
def _make_linear_kernel(has_ln, has_res, has_lno, act, ln_eps, lno_eps):
    def kernel(*refs):
        it = iter(refs)
        x_ref = next(it)
        w_ref = next(it)
        b_ref = next(it)
        g_ref = beta_ref = res_ref = og_ref = ob_ref = None
        if has_ln:
            g_ref = next(it)
            beta_ref = next(it)
        if has_res:
            res_ref = next(it)
        if has_lno:
            og_ref = next(it)
            ob_ref = next(it)
        o_ref = next(it)
        acc_ref = next(it)
        xln_ref = next(it) if has_ln else None

        j = pl.program_id(1)
        k = pl.program_id(2)

        @pl.when(k == 0)
        def _():
            acc_ref[...] = jnp.zeros_like(acc_ref)

        if has_ln:
            # Normalize the (tm, K) row block ONCE per row tile (j==0) and
            # cache it in VMEM; remaining N tiles reuse it (no redundant VPU
            # work).  Grid j axis is 'arbitrary' so the cache is core-local.
            @pl.when(jnp.logical_and(j == 0, k == 0))
            def _():
                x = x_ref[...].astype(jnp.float32)
                mu = jnp.mean(x, axis=-1, keepdims=True)
                xc = x - mu
                var = jnp.mean(xc * xc, axis=-1, keepdims=True)
                xn = xc * jax.lax.rsqrt(var + ln_eps)
                xn = xn * g_ref[...] + beta_ref[...]
                xln_ref[...] = xn.astype(jnp.bfloat16)

            xmm = xln_ref[...]
        else:
            xmm = x_ref[...]

        acc_ref[...] += jnp.dot(xmm, w_ref[...],
                                preferred_element_type=jnp.float32)

        @pl.when(k == pl.num_programs(2) - 1)
        def _():
            y = acc_ref[...] + b_ref[...]
            if act == "gelu":
                y = _gelu_exact(y)
            if has_res:
                y = y + res_ref[...].astype(jnp.float32)
            if has_lno:
                # output LayerNorm over the full feature row (tn == N).
                mu = jnp.mean(y, axis=-1, keepdims=True)
                yc = y - mu
                var = jnp.mean(yc * yc, axis=-1, keepdims=True)
                y = yc * jax.lax.rsqrt(var + lno_eps) * og_ref[...] + ob_ref[...]
            o_ref[...] = y.astype(o_ref.dtype)

    return kernel


def fused_linear(x, w, b=None, *, ln=None, act=None, residual=None,
                 residual_row_period=None, ln_out=None,
                 out_dtype=jnp.bfloat16):
    """y = LNout[ residual + act( LN(x) @ w + b ) ], tiled & pipelined."""
    M, K = x.shape
    N = w.shape[1]
    if b is None:
        b = jnp.zeros((N,), jnp.float32)
    b2 = b.astype(jnp.float32).reshape(1, N)

    xb = x.astype(jnp.bfloat16)
    wb = w.astype(jnp.bfloat16)

    if residual_row_period is not None:
        tm = _pick_tile(residual_row_period, (512, 256, 128, 64, 32, 16, 8))
    else:
        tm = _pick_tile(M, (512, 256, 128, 64, 32, 16, 8))
    # Output LayerNorm needs the full output row -> single N tile.
    tn = N if ln_out is not None else _pick_tile(N, (512, 256, 128))
    # Input LayerNorm needs the full feature row -> no K tiling when fused.
    tk = K if ln is not None else _pick_tile(K, (1024, 512, 256, 128))
    grid = (M // tm, N // tn, K // tk)

    in_specs = [
        pl.BlockSpec((tm, tk), lambda i, j, k: (i, k)),
        pl.BlockSpec((tk, tn), lambda i, j, k: (k, j)),
        pl.BlockSpec((1, tn), lambda i, j, k: (0, j)),
    ]
    args = [xb, wb, b2]

    ln_eps = None
    if ln is not None:
        g, beta, ln_eps = ln
        in_specs += [pl.BlockSpec((1, K), lambda i, j, k: (0, 0)),
                     pl.BlockSpec((1, K), lambda i, j, k: (0, 0))]
        args += [g.astype(jnp.float32).reshape(1, K),
                 beta.astype(jnp.float32).reshape(1, K)]

    if residual is not None:
        if residual_row_period is not None:
            rb = residual_row_period // tm       # residual tiled modulo period
            in_specs += [pl.BlockSpec((tm, tn),
                                      lambda i, j, k, rb=rb: (i % rb, j))]
        else:
            in_specs += [pl.BlockSpec((tm, tn), lambda i, j, k: (i, j))]
        args += [residual]

    lno_eps = None
    if ln_out is not None:
        og, ob, lno_eps = ln_out
        in_specs += [pl.BlockSpec((1, N), lambda i, j, k: (0, 0)),
                     pl.BlockSpec((1, N), lambda i, j, k: (0, 0))]
        args += [og.astype(jnp.float32).reshape(1, N),
                 ob.astype(jnp.float32).reshape(1, N)]

    scratch = [pltpu.VMEM((tm, tn), jnp.float32)]
    if ln is not None:
        scratch += [pltpu.VMEM((tm, K), jnp.bfloat16)]

    est = (2 * tm * tk * 2 + 2 * tk * tn * 2 + 4 * tn * 4
           + 2 * tm * tn * 2 + tm * tn * 4)
    if residual is not None:
        est += 2 * tm * tn * 4
    if ln is not None:
        est += 4 * K * 4 + tm * K * 2

    # j must stay core-local (in-order) when the LN cache is used.
    sem = (("parallel", "arbitrary", "arbitrary") if ln is not None
           else ("parallel", "parallel", "arbitrary"))

    kernel = _make_linear_kernel(ln is not None, residual is not None,
                                 ln_out is not None, act, ln_eps, lno_eps)
    return pl.pallas_call(
        kernel,
        out_shape=jax.ShapeDtypeStruct((M, N), out_dtype),
        grid=grid,
        in_specs=in_specs,
        out_specs=pl.BlockSpec((tm, tn), lambda i, j, k: (i, j)),
        scratch_shapes=scratch,
        compiler_params=_mosaic_params(sem, est),
    )(*args)


# ----------------------------------------------------------------------------
# flash-style global multi-head attention, head axis as a grid dimension
# (qkv relaid out once in XLA to (3, B, nH, N, Dh): no per-head slicing).
# ----------------------------------------------------------------------------
def _flash_attn_kernel(q_ref, k_ref, v_ref, o_ref, m_ref, l_ref, acc_ref,
                       *, scale):
    kv = pl.program_id(3)

    @pl.when(kv == 0)
    def _():
        m_ref[...] = jnp.full_like(m_ref, -jnp.inf)
        l_ref[...] = jnp.zeros_like(l_ref)
        acc_ref[...] = jnp.zeros_like(acc_ref)

    q = q_ref[0, 0, 0]                               # (tq, Dh) bf16
    k = k_ref[0, 0, 0]                               # (tk, Dh) bf16
    v = v_ref[0, 0, 0]                               # (tk, Dh) bf16
    s = jax.lax.dot_general(q, k, (((1,), (1,)), ((), ())),
                            preferred_element_type=jnp.float32) * scale
    m_prev = m_ref[...]
    m_new = jnp.maximum(m_prev, jnp.max(s, axis=-1, keepdims=True))
    alpha = jnp.exp(m_prev - m_new)
    p = jnp.exp(s - m_new)
    l_ref[...] = alpha * l_ref[...] + jnp.sum(p, axis=-1, keepdims=True)
    acc_ref[...] = alpha * acc_ref[...] + jnp.dot(
        p.astype(jnp.bfloat16), v, preferred_element_type=jnp.float32)
    m_ref[...] = m_new

    @pl.when(kv == pl.num_programs(3) - 1)
    def _():
        inv = pl.reciprocal(l_ref[...], approx=True)       # EUP, ~free
        o_ref[0, 0] = (acc_ref[...] * inv).astype(o_ref.dtype)


def flash_attention(qkv5, scale, out_dtype=jnp.bfloat16):
    """qkv5: (3, B, nH, N, Dh)  ->  (B, nH, N, Dh)."""
    _, B, nH, N, Dh = qkv5.shape
    tq = _pick_tile(N, (256, 128))
    tk = _pick_tile(N, (512, 256, 128))
    grid = (B, nH, N // tq, N // tk)

    est = (2 * tq * Dh * 2 + 4 * tk * Dh * 2 + 2 * tq * Dh * 2
           + 2 * tq * 128 * 4 + tq * Dh * 4 + tq * tk * 4)

    kernel = functools.partial(_flash_attn_kernel, scale=scale)
    return pl.pallas_call(
        kernel,
        out_shape=jax.ShapeDtypeStruct((B, nH, N, Dh), out_dtype),
        grid=grid,
        in_specs=[
            pl.BlockSpec((1, 1, 1, tq, Dh),
                         lambda b, h, qi, ki: (0, b, h, qi, 0)),   # q
            pl.BlockSpec((1, 1, 1, tk, Dh),
                         lambda b, h, qi, ki: (1, b, h, ki, 0)),   # k
            pl.BlockSpec((1, 1, 1, tk, Dh),
                         lambda b, h, qi, ki: (2, b, h, ki, 0)),   # v
        ],
        out_specs=pl.BlockSpec((1, 1, tq, Dh),
                               lambda b, h, qi, ki: (b, h, qi, 0)),
        scratch_shapes=[pltpu.VMEM((tq, 1), jnp.float32),          # m
                        pltpu.VMEM((tq, 1), jnp.float32),          # l
                        pltpu.VMEM((tq, Dh), jnp.float32)],        # acc
        compiler_params=_mosaic_params(
            ("parallel", "parallel", "parallel", "arbitrary"), est),
    )(qkv5, qkv5, qkv5)


# ----------------------------------------------------------------------------
# attention output projection: head-concat folded into the matmul K axis,
# bias + residual fused into the epilogue.
# ----------------------------------------------------------------------------
def _attn_proj_kernel(a_ref, w_ref, b_ref, res_ref, o_ref, acc_ref):
    h = pl.program_id(3)

    @pl.when(h == 0)
    def _():
        acc_ref[...] = jnp.zeros_like(acc_ref)

    acc_ref[...] += jnp.dot(a_ref[0, 0], w_ref[...],
                            preferred_element_type=jnp.float32)

    @pl.when(h == pl.num_programs(3) - 1)
    def _():
        y = acc_ref[...] + b_ref[...] + res_ref[...].astype(jnp.float32)
        o_ref[...] = y.astype(o_ref.dtype)


def attn_proj_residual(attn, w, b, residual, out_dtype=jnp.bfloat16):
    """attn: (B, nH, N, Dh); w: (nH*Dh, D); residual: (B*N, D)."""
    B, nH, N, Dh = attn.shape
    D_out = w.shape[1]
    tm = _pick_tile(N, (512, 256, 128, 64, 32, 16, 8))
    tn = _pick_tile(D_out, (512, 256, 128))
    rb = N // tm
    grid = (B, rb, D_out // tn, nH)
    b2 = b.astype(jnp.float32).reshape(1, D_out)

    est = (2 * tm * Dh * 2 + 2 * Dh * tn * 2 + 4 * tn * 4
           + 4 * tm * tn * 2 + tm * tn * 4)

    return pl.pallas_call(
        _attn_proj_kernel,
        out_shape=jax.ShapeDtypeStruct((B * N, D_out), out_dtype),
        grid=grid,
        in_specs=[
            pl.BlockSpec((1, 1, tm, Dh),
                         lambda bb, i, j, h: (bb, h, i, 0)),
            pl.BlockSpec((Dh, tn), lambda bb, i, j, h: (h, j)),
            pl.BlockSpec((1, tn), lambda bb, i, j, h: (0, j)),
            pl.BlockSpec((tm, tn),
                         lambda bb, i, j, h, rb=rb: (bb * rb + i, j)),
        ],
        out_specs=pl.BlockSpec((tm, tn),
                               lambda bb, i, j, h, rb=rb: (bb * rb + i, j)),
        scratch_shapes=[pltpu.VMEM((tm, tn), jnp.float32)],
        compiler_params=_mosaic_params(
            ("parallel", "parallel", "parallel", "arbitrary"), est),
    )(attn.astype(jnp.bfloat16), w.astype(jnp.bfloat16), b2, residual)


# ----------------------------------------------------------------------------
# neck 3x3 conv (stride 1, pad 1, no bias) + fused LayerNorm2d:
# 9 per-tap whole-image matmuls over a row-flattened padded image (M = H*(W+2))
# so the MXU is fed large-M matmuls; LN over channels fused before the store.
# ----------------------------------------------------------------------------
def _conv3x3_ln_kernel(x_ref, w_ref, g_ref, b_ref, o_ref, acc_ref, *,
                       h_out, w_pad, eps):
    # x_ref: (1, Ltot, Cin) row-major flattened zero-padded (H+2, W+2) image.
    # w_ref: (3, 3, Cin, Cout).  acc/o: (H*(W+2), Cout); the 2 extra columns
    # per row are garbage and get dropped by the wrapper.
    L = h_out * w_pad
    acc_ref[...] = jnp.zeros_like(acc_ref)
    for kh in range(3):
        for kw in range(3):
            start = kh * w_pad + kw
            tap = x_ref[0, start:start + L, :]               # (L, Cin) bf16
            acc_ref[...] += jnp.dot(tap, w_ref[kh, kw],
                                    preferred_element_type=jnp.float32)
    y = acc_ref[...]
    mu = jnp.mean(y, axis=-1, keepdims=True)
    yc = y - mu
    var = jnp.mean(yc * yc, axis=-1, keepdims=True)
    y = yc * jax.lax.rsqrt(var + eps) * g_ref[...] + b_ref[...]
    o_ref[0] = y.astype(o_ref.dtype)


def conv3x3_ln(x_nhwc, w_oihw, gamma, beta, eps, out_dtype=jnp.float32):
    b, h, w, cin = x_nhwc.shape
    cout = w_oihw.shape[0]
    w_pad = w + 2
    L = h * w_pad
    xp = jnp.pad(x_nhwc.astype(jnp.bfloat16), ((0, 0), (1, 1), (1, 1), (0, 0)))
    xflat = xp.reshape(b, (h + 2) * w_pad, cin)
    xflat = jnp.pad(xflat, ((0, 0), (0, 8), (0, 0)))   # room for the kw shifts
    ltot = xflat.shape[1]
    w_hwio = jnp.transpose(w_oihw, (2, 3, 1, 0)).astype(jnp.bfloat16)

    kernel = functools.partial(_conv3x3_ln_kernel, h_out=h, w_pad=w_pad,
                               eps=eps)
    est = (2 * ltot * cin * 2 + 2 * 9 * cin * cout * 2
           + 2 * L * cout * 4 + L * cout * 4 + 2 * L * cin * 2)
    out = pl.pallas_call(
        kernel,
        out_shape=jax.ShapeDtypeStruct((b, L, cout), out_dtype),
        grid=(b,),
        in_specs=[pl.BlockSpec((1, ltot, cin), lambda i: (i, 0, 0)),
                  pl.BlockSpec((3, 3, cin, cout), lambda i: (0, 0, 0, 0)),
                  pl.BlockSpec((1, cout), lambda i: (0, 0)),
                  pl.BlockSpec((1, cout), lambda i: (0, 0))],
        out_specs=pl.BlockSpec((1, L, cout), lambda i: (i, 0, 0)),
        scratch_shapes=[pltpu.VMEM((L, cout), jnp.float32)],
        compiler_params=_mosaic_params(("parallel",), est),
    )(xflat, w_hwio, gamma.astype(jnp.float32).reshape(1, cout),
      beta.astype(jnp.float32).reshape(1, cout))
    # drop the 2 padded columns per image row: (B, H, W+2, Co) -> (B, H, W, Co)
    return out.reshape(b, h, w_pad, cout)[:, :, :w, :]


# ----------------------------------------------------------------------------
# parameters (deterministic, in-script; shapes follow the module's __init__)
# ----------------------------------------------------------------------------
def init_params(key, cfg):
    D = cfg["embed_dim"]
    Cin = cfg["in_channels"]
    p = cfg["patch_size"]
    Hp = cfg["img_size"] // p
    mlp = int(D * cfg["mlp_ratio"])
    Co = cfg["out_channels"]

    keys = iter(jax.random.split(key, 64))

    def nrm(shape, std=0.02):
        return std * jax.random.normal(next(keys), shape, jnp.float32)

    params = {
        "patch_w": nrm((D, Cin, p, p)),                  # Conv2d(Cin, D, k=p, s=p)
        "patch_b": jnp.zeros((D,), jnp.float32),
        "pos_embed": jnp.zeros((1, Hp, Hp, D), jnp.float32),  # torch init: zeros
        "blocks": [],
        "neck_conv1_w": nrm((Co, D, 1, 1)),              # Conv2d(D, Co, 1, bias=False)
        "neck_ln1_g": jnp.ones((Co,), jnp.float32),
        "neck_ln1_b": jnp.zeros((Co,), jnp.float32),
        "neck_conv2_w": nrm((Co, Co, 3, 3)),             # Conv2d(Co, Co, 3, pad=1, bias=False)
        "neck_ln2_g": jnp.ones((Co,), jnp.float32),
        "neck_ln2_b": jnp.zeros((Co,), jnp.float32),
    }
    for _ in range(cfg["depth"]):
        params["blocks"].append({
            "ln1_g": jnp.ones((D,), jnp.float32),
            "ln1_b": jnp.zeros((D,), jnp.float32),
            "qkv_w": nrm((D, 3 * D)),
            "qkv_b": jnp.zeros((3 * D,), jnp.float32),   # qkv_bias=True
            "proj_w": nrm((D, D)),
            "proj_b": jnp.zeros((D,), jnp.float32),
            "ln2_g": jnp.ones((D,), jnp.float32),
            "ln2_b": jnp.zeros((D,), jnp.float32),
            "fc1_w": nrm((D, mlp)),
            "fc1_b": jnp.zeros((mlp,), jnp.float32),
            "fc2_w": nrm((mlp, D)),
            "fc2_b": jnp.zeros((D,), jnp.float32),
        })
    return params


# ----------------------------------------------------------------------------
# forward
# ----------------------------------------------------------------------------
def vit_forward(params, x_nchw, cfg):
    B, Cin, H, W = x_nchw.shape
    p = cfg["patch_size"]
    D = cfg["embed_dim"]
    nH = cfg["num_heads"]
    Hp, Wp = H // p, W // p
    Ntok = Hp * Wp
    Dh = D // nH
    scale = 1.0 / math.sqrt(Dh)

    # ---- PatchEmbed1 (conv k=s=patch == per-patch matmul) + fused abs pos ----
    xr = x_nchw.reshape(B, Cin, Hp, p, Wp, p)
    xr = jnp.transpose(xr, (0, 2, 4, 1, 3, 5)).reshape(B * Ntok, Cin * p * p)
    w_pe = params["patch_w"].reshape(D, Cin * p * p).T
    pos = params["pos_embed"].reshape(Ntok, D)           # works for Hp != Wp too
    xf = fused_linear(xr, w_pe, params["patch_b"], residual=pos,
                      residual_row_period=Ntok)          # (B*Ntok, D) bf16

    # ---- ViT blocks (global attention; window_size=0, use_rel_pos=False) -----
    for blk in params["blocks"]:
        # attention branch: x = x + proj(attn(ln1(x)))
        qkv = fused_linear(xf, blk["qkv_w"], blk["qkv_b"],
                           ln=(blk["ln1_g"], blk["ln1_b"], 1e-5))
        # one-time relayout so the attention grid can carry the head axis
        qkv5 = jnp.transpose(qkv.reshape(B, Ntok, 3, nH, Dh), (2, 0, 3, 1, 4))
        attn = flash_attention(qkv5, scale)              # (B, nH, Ntok, Dh)
        xf = attn_proj_residual(attn, blk["proj_w"], blk["proj_b"], xf)
        # mlp branch: x = x + fc2(gelu(fc1(ln2(x))))
        h1 = fused_linear(xf, blk["fc1_w"], blk["fc1_b"],
                          ln=(blk["ln2_g"], blk["ln2_b"], 1e-5), act="gelu")
        xf = fused_linear(h1, blk["fc2_w"], blk["fc2_b"], residual=xf)

    # ---- neck: 1x1 conv (+LN2d fused) -> 3x3 conv (+LN2d fused) --------------
    Co = cfg["out_channels"]
    w1 = params["neck_conv1_w"].reshape(Co, D).T          # 1x1 conv == matmul
    yf = fused_linear(xf, w1, None,
                      ln_out=(params["neck_ln1_g"], params["neck_ln1_b"], 1e-6))
    y = conv3x3_ln(yf.reshape(B, Hp, Wp, Co), params["neck_conv2_w"],
                   params["neck_ln2_g"], params["neck_ln2_b"], eps=1e-6)
    return jnp.transpose(y, (0, 3, 1, 2))                 # NCHW, like torch


if __name__ == "__main__":
    cfg = dict(img_size=16, patch_size=4, in_channels=4, embed_dim=32,
               depth=2, num_heads=4, mlp_ratio=4.0, out_channels=16)
    key = jax.random.PRNGKey(0)
    pkey, xkey = jax.random.split(key)
    params = init_params(pkey, cfg)
    x = jax.random.normal(
        xkey, (2, cfg["in_channels"], cfg["img_size"], cfg["img_size"]),
        jnp.float32)

    fwd = jax.jit(functools.partial(vit_forward, cfg=cfg))
    out = jax.block_until_ready(fwd(params, x))

    Hp = cfg["img_size"] // cfg["patch_size"]
    assert out.shape == (2, cfg["out_channels"], Hp, Hp), out.shape
    assert bool(jnp.all(jnp.isfinite(out)))
    print("KERNEL_OK")
</pallas_src>

<mosaic_0001>
module attributes {stable_mosaic.version = 11 : i64} {
  func.func @kernel(%arg0: i32, %arg1: i32, %arg2: i32, %arg3: memref<16x64xbf16, #tpu.memory_space<vmem>>, %arg4: memref<64x32xbf16, #tpu.memory_space<vmem>>, %arg5: memref<1x32xf32, #tpu.memory_space<vmem>>, %arg6: memref<16x32xf32, #tpu.memory_space<vmem>>, %arg7: memref<16x32xbf16, #tpu.memory_space<vmem>>, %arg8: memref<16x32xf32, #tpu.memory_space<vmem>>) attributes {dimension_semantics = [#tpu.dimension_semantics<parallel>, #tpu.dimension_semantics<parallel>, #tpu.dimension_semantics<arbitrary>], iteration_bounds = array<i64: 2, 1, 1>, scalar_prefetch = 0 : i64, scratch_operands = 1 : i64, tpu.core_type = #tpu.core_type<tc>, window_params = [{transform_indices = @transform_0, window_bounds = array<i64: 16, 64>}, {transform_indices = @transform_1, window_bounds = array<i64: 64, 32>}, {transform_indices = @transform_2, window_bounds = array<i64: 1, 32>}, {transform_indices = @transform_3, window_bounds = array<i64: 16, 32>}, {transform_indices = @transform_4, window_bounds = array<i64: 16, 32>}]} {
    %c0_i32 = arith.constant 0 : i32
    %0 = arith.cmpi eq, %arg2, %c0_i32 : i32
    %1 = arith.extui %0 : i1 to i32
    %c0_i32_0 = arith.constant 0 : i32
    %2 = arith.cmpi ne, %1, %c0_i32_0 : i32
    scf.if %2 {
      %cst_10 = arith.constant 0.000000e+00 : f32
      %12 = vector.broadcast %cst_10 : f32 to vector<16x32xf32>
      %c0_11 = arith.constant 0 : index
      %c0_12 = arith.constant 0 : index
      %13 = vector.load %arg8[%c0_11, %c0_12] : memref<16x32xf32, #tpu.memory_space<vmem>>, vector<16x32xf32>
      tpu.vector_store %arg8[%c0_11, %c0_12], %12 {strides = array<i32>} : memref<16x32xf32, #tpu.memory_space<vmem>>, vector<16x32xf32>,
    } else {
    }
    %c0 = arith.constant 0 : index
    %c0_1 = arith.constant 0 : index
    %3 = vector.load %arg3[%c0, %c0_1] : memref<16x64xbf16, #tpu.memory_space<vmem>>, vector<16x64xbf16>
    %c0_2 = arith.constant 0 : index
    %c0_3 = arith.constant 0 : index
    %4 = vector.load %arg8[%c0_2, %c0_3] : memref<16x32xf32, #tpu.memory_space<vmem>>, vector<16x32xf32>
    %c0_4 = arith.constant 0 : index
    %c0_5 = arith.constant 0 : index
    %5 = vector.load %arg4[%c0_4, %c0_5] : memref<64x32xbf16, #tpu.memory_space<vmem>>, vector<64x32xbf16>
    %cst = arith.constant dense<0.000000e+00> : vector<16x32xf32>
    %6 = tpu.matmul %3, %5, %cst {dimension_numbers = #tpu.dot_dimension_numbers<[1], [0], [0], [1], [0, 0, 1, 1], [], []>} : vector<16x64xbf16>, vector<64x32xbf16>, vector<16x32xf32> -> vector<16x32xf32>
    %7 = arith.addf %4, %6 : vector<16x32xf32>
    %c0_6 = arith.constant 0 : index
    %c0_7 = arith.constant 0 : index
    %8 = vector.load %arg8[%c0_6, %c0_7] : memref<16x32xf32, #tpu.memory_space<vmem>>, vector<16x32xf32>
    tpu.vector_store %arg8[%c0_6, %c0_7], %7 {strides = array<i32>} : memref<16x32xf32, #tpu.memory_space<vmem>>, vector<16x32xf32>,
    %c0_i32_8 = arith.constant 0 : i32
    %9 = arith.cmpi eq, %arg2, %c0_i32_8 : i32
    %10 = arith.extui %9 : i1 to i32
    %c0_i32_9 = arith.constant 0 : i32
    %11 = arith.cmpi ne, %10, %c0_i32_9 : i32
    scf.if %11 {
      %c0_10 = arith.constant 0 : index
      %c0_11 = arith.constant 0 : index
      %12 = vector.load %arg8[%c0_10, %c0_11] : memref<16x32xf32, #tpu.memory_space<vmem>>, vector<16x32xf32>
      %c0_12 = arith.constant 0 : index
      %c0_13 = arith.constant 0 : index
      %13 = vector.load %arg5[%c0_12, %c0_13] : memref<1x32xf32, #tpu.memory_space<vmem>>, vector<1x32xf32>
      %14 = vector.broadcast %13 : vector<1x32xf32> to vector<16x32xf32>
      %15 = arith.addf %12, %14 : vector<16x32xf32>
      %c0_14 = arith.constant 0 : index
      %c0_15 = arith.constant 0 : index
      %16 = vector.load %arg6[%c0_14, %c0_15] : memref<16x32xf32, #tpu.memory_space<vmem>>, vector<16x32xf32>
      %17 = arith.addf %15, %16 : vector<16x32xf32>
      %18 = arith.truncf %17 : vector<16x32xf32> to vector<16x32xbf16>
      %c0_16 = arith.constant 0 : index
      %c0_17 = arith.constant 0 : index
      %19 = vector.load %arg7[%c0_16, %c0_17] : memref<16x32xbf16, #tpu.memory_space<vmem>>, vector<16x32xbf16>
      tpu.vector_store %arg7[%c0_16, %c0_17], %18 {strides = array<i32>} : memref<16x32xbf16, #tpu.memory_space<vmem>>, vector<16x32xbf16>,
    } else {
    }
    return
  }
  func.func @transform_0(%arg0: i32, %arg1: i32, %arg2: i32) -> (i32, i32) {
    %c0_i32 = arith.constant 0 : i32
    return %arg0, %arg2 : i32, i32
  }
  func.func @transform_1(%arg0: i32, %arg1: i32, %arg2: i32) -> (i32, i32) {
    %c0_i32 = arith.constant 0 : i32
    return %arg2, %arg1 : i32, i32
  }
  func.func @transform_2(%arg0: i32, %arg1: i32, %arg2: i32) -> (i32, i32) {
    %c0_i32 = arith.constant 0 : i32
    %c0_i32_0 = arith.constant 0 : i32
    return %c0_i32, %arg1 : i32, i32
  }
  func.func @transform_3(%arg0: i32, %arg1: i32, %arg2: i32) -> (i32, i32) {
    %c1_i32 = arith.constant 1 : i32
    %c0_i32 = arith.constant 0 : i32
    %0 = arith.cmpi eq, %c1_i32, %c0_i32 : i32
    %c1_i32_0 = arith.constant 1 : i32
    %1 = arith.select %0, %c1_i32_0, %c1_i32 : i32
    %2 = arith.remsi %arg0, %1 : i32
    %c0_i32_1 = arith.constant 0 : i32
    %3 = arith.cmpi ne, %2, %c0_i32_1 : i32
    %c0_i32_2 = arith.constant 0 : i32
    %4 = arith.cmpi slt, %2, %c0_i32_2 : i32
    %c0_i32_3 = arith.constant 0 : i32
    %5 = arith.cmpi slt, %1, %c0_i32_3 : i32
    %6 = arith.xori %4, %5 : i1
    %7 = arith.andi %6, %3 : i1
    %8 = arith.addi %2, %1 : i32
    %9 = arith.select %7, %8, %2 : i32
    %c0_i32_4 = arith.constant 0 : i32
    return %9, %arg1 : i32, i32
  }
  func.func @transform_4(%arg0: i32, %arg1: i32, %arg2: i32) -> (i32, i32) {
    %c0_i32 = arith.constant 0 : i32
    return %arg0, %arg1 : i32, i32
  }
}

module attributes {stable_mosaic.version = 11 : i64} {
  func.func @kernel(%arg0: i32, %arg1: i32, %arg2: i32, %arg3: memref<32x32xbf16, #tpu.memory_space<vmem>>, %arg4: memref<32x96xbf16, #tpu.memory_space<vmem>>, %arg5: memref<1x96xf32, #tpu.memory_space<vmem>>, %arg6: memref<1x32xf32, #tpu.memory_space<vmem>>, %arg7: memref<1x32xf32, #tpu.memory_space<vmem>>, %arg8: memref<32x96xbf16, #tpu.memory_space<vmem>>, %arg9: memref<32x96xf32, #tpu.memory_space<vmem>>, %arg10: memref<32x32xbf16, #tpu.memory_space<vmem>>) attributes {dimension_semantics = [#tpu.dimension_semantics<parallel>, #tpu.dimension_semantics<arbitrary>, #tpu.dimension_semantics<arbitrary>], iteration_bounds = array<i64: 1, 1, 1>, scalar_prefetch = 0 : i64, scratch_operands = 2 : i64, tpu.core_type = #tpu.core_type<tc>, window_params = [{transform_indices = @transform_0, window_bounds = array<i64: 32, 32>}, {transform_indices = @transform_1, window_bounds = array<i64: 32, 96>}, {transform_indices = @transform_2, window_bounds = array<i64: 1, 96>}, {pipeline_mode = #tpu.pipeline_mode<synchronous>, transform_indices = @transform_3, window_bounds = array<i64: 1, 32>}, {pipeline_mode = #tpu.pipeline_mode<synchronous>, transform_indices = @transform_4, window_bounds = array<i64: 1, 32>}, {transform_indices = @transform_5, window_bounds = array<i64: 32, 96>}]} {
    %c0_i32 = arith.constant 0 : i32
    %0 = arith.cmpi eq, %arg2, %c0_i32 : i32
    %1 = arith.extui %0 : i1 to i32
    %c0_i32_0 = arith.constant 0 : i32
    %2 = arith.cmpi ne, %1, %c0_i32_0 : i32
    scf.if %2 {
      %cst_13 = arith.constant 0.000000e+00 : f32
      %17 = vector.broadcast %cst_13 : f32 to vector<32x96xf32>
      %c0_14 = arith.constant 0 : index
      %c0_15 = arith.constant 0 : index
      %18 = vector.load %arg9[%c0_14, %c0_15] : memref<32x96xf32, #tpu.memory_space<vmem>>, vector<32x96xf32>
      tpu.vector_store %arg9[%c0_14, %c0_15], %17 {strides = array<i32>} : memref<32x96xf32, #tpu.memory_space<vmem>>, vector<32x96xf32>,
    } else {
    }
    %c0_i32_1 = arith.constant 0 : i32
    %3 = arith.cmpi eq, %arg1, %c0_i32_1 : i32
    %c0_i32_2 = arith.constant 0 : i32
    %4 = arith.cmpi eq, %arg2, %c0_i32_2 : i32
    %5 = arith.andi %3, %4 : i1
    %6 = arith.extui %5 : i1 to i32
    %c0_i32_3 = arith.constant 0 : i32
    %7 = arith.cmpi ne, %6, %c0_i32_3 : i32
    scf.if %7 {
      %c0_13 = arith.constant 0 : index
      %c0_14 = arith.constant 0 : index
      %17 = vector.load %arg3[%c0_13, %c0_14] : memref<32x32xbf16, #tpu.memory_space<vmem>>, vector<32x32xbf16>
      %18 = arith.extf %17 : vector<32x32xbf16> to vector<32x32xf32>
      %cst_15 = arith.constant dense<0.000000e+00> : vector<32xf32>
      %19 = vector.multi_reduction <add>, %18, %cst_15 [1] : vector<32x32xf32> to vector<32xf32>
      %20 = vector.shape_cast %19 : vector<32xf32> to vector<32x1xf32>
      %cst_16 = arith.constant 3.200000e+01 : f32
      %21 = vector.broadcast %cst_16 : f32 to vector<32x1xf32>
      %22 = arith.divf %20, %21 : vector<32x1xf32>
      %23 = vector.broadcast %22 : vector<32x1xf32> to vector<32x32xf32>
      %24 = arith.subf %18, %23 : vector<32x32xf32>
      %25 = arith.mulf %24, %24 : vector<32x32xf32>
      %cst_17 = arith.constant dense<0.000000e+00> : vector<32xf32>
      %26 = vector.multi_reduction <add>, %25, %cst_17 [1] : vector<32x32xf32> to vector<32xf32>
      %27 = vector.shape_cast %26 : vector<32xf32> to vector<32x1xf32>
      %cst_18 = arith.constant 3.200000e+01 : f32
      %28 = vector.broadcast %cst_18 : f32 to vector<32x1xf32>
      %29 = arith.divf %27, %28 : vector<32x1xf32>
      %cst_19 = arith.constant 9.99999974E-6 : f32
      %30 = vector.broadcast %cst_19 : f32 to vector<32x1xf32>
      %31 = arith.addf %29, %30 : vector<32x1xf32>
      %32 = math.rsqrt %31 : vector<32x1xf32>
      %33 = vector.broadcast %32 : vector<32x1xf32> to vector<32x32xf32>
      %34 = arith.mulf %24, %33 : vector<32x32xf32>
      %c0_20 = arith.constant 0 : index
      %c0_21 = arith.constant 0 : index
      %35 = vector.load %arg6[%c0_20, %c0_21] : memref<1x32xf32, #tpu.memory_space<vmem>>, vector<1x32xf32>
      %36 = vector.broadcast %35 : vector<1x32xf32> to vector<32x32xf32>
      %37 = arith.mulf %34, %36 : vector<32x32xf32>
      %c0_22 = arith.constant 0 : index
      %c0_23 = arith.constant 0 : index
      %38 = vector.load %arg7[%c0_22, %c0_23] : memref<1x32xf32, #tpu.memory_space<vmem>>, vector<1x32xf32>
      %39 = vector.broadcast %38 : vector<1x32xf32> to vector<32x32xf32>
      %40 = arith.addf %37, %39 : vector<32x32xf32>
      %41 = arith.truncf %40 : vector<32x32xf32> to vector<32x32xbf16>
      %c0_24 = arith.constant 0 : index
      %c0_25 = arith.constant 0 : index
      %42 = vector.load %arg10[%c0_24, %c0_25] : memref<32x32xbf16, #tpu.memory_space<vmem>>, vector<32x32xbf16>
      tpu.vector_store %arg10[%c0_24, %c0_25], %41 {strides = array<i32>} : memref<32x32xbf16, #tpu.memory_space<vmem>>, vector<32x32xbf16>,
    } else {
    }
    %c0 = arith.constant 0 : index
    %c0_4 = arith.constant 0 : index
    %8 = vector.load %arg10[%c0, %c0_4] : memref<32x32xbf16, #tpu.memory_space<vmem>>, vector<32x32xbf16>
    %c0_5 = arith.constant 0 : index
    %c0_6 = arith.constant 0 : index
    %9 = vector.load %arg9[%c0_5, %c0_6] : memref<32x96xf32, #tpu.memory_space<vmem>>, vector<32x96xf32>
    %c0_7 = arith.constant 0 : index
    %c0_8 = arith.constant 0 : index
    %10 = vector.load %arg4[%c0_7, %c0_8] : memref<32x96xbf16, #tpu.memory_space<vmem>>, vector<32x96xbf16>
    %cst = arith.constant dense<0.000000e+00> : vector<32x96xf32>
    %11 = tpu.matmul %8, %10, %cst {dimension_numbers = #tpu.dot_dimension_numbers<[1], [0], [0], [1], [0, 0, 1, 1], [], []>} : vector<32x32xbf16>, vector<32x96xbf16>, vector<32x96xf32> -> vector<32x96xf32>
    %12 = arith.addf %9, %11 : vector<32x96xf32>
    %c0_9 = arith.constant 0 : index
    %c0_10 = arith.constant 0 : index
    %13 = vector.load %arg9[%c0_9, %c0_10] : memref<32x96xf32, #tpu.memory_space<vmem>>, vector<32x96xf32>
    tpu.vector_store %arg9[%c0_9, %c0_10], %12 {strides = array<i32>} : memref<32x96xf32, #tpu.memory_space<vmem>>, vector<32x96xf32>,
    %c0_i32_11 = arith.constant 0 : i32
    %14 = arith.cmpi eq, %arg2, %c0_i32_11 : i32
    %15 = arith.extui %14 : i1 to i32
    %c0_i32_12 = arith.constant 0 : i32
    %16 = arith.cmpi ne, %15, %c0_i32_12 : i32
    scf.if %16 {
      %c0_13 = arith.constant 0 : index
      %c0_14 = arith.constant 0 : index
      %17 = vector.load %arg9[%c0_13, %c0_14] : memref<32x96xf32, #tpu.memory_space<vmem>>, vector<32x96xf32>
      %c0_15 = arith.constant 0 : index
      %c0_16 = arith.constant 0 : index
      %18 = vector.load %arg5[%c0_15, %c0_16] : memref<1x96xf32, #tpu.memory_space<vmem>>, vector<1x96xf32>
      %19 = vector.broadcast %18 : vector<1x96xf32> to vector<32x96xf32>
      %20 = arith.addf %17, %19 : vector<32x96xf32>
      %21 = arith.truncf %20 : vector<32x96xf32> to vector<32x96xbf16>
      %c0_17 = arith.constant 0 : index
      %c0_18 = arith.constant 0 : index
      %22 = vector.load %arg8[%c0_17, %c0_18] : memref<32x96xbf16, #tpu.memory_space<vmem>>, vector<32x96xbf16>
      tpu.vector_store %arg8[%c0_17, %c0_18], %21 {strides = array<i32>} : memref<32x96xbf16, #tpu.memory_space<vmem>>, vector<32x96xbf16>,
    } else {
    }
    return
  }
  func.func @transform_0(%arg0: i32, %arg1: i32, %arg2: i32) -> (i32, i32) {
    %c0_i32 = arith.constant 0 : i32
    return %arg0, %arg2 : i32, i32
  }
  func.func @transform_1(%arg0: i32, %arg1: i32, %arg2: i32) -> (i32, i32) {
    %c0_i32 = arith.constant 0 : i32
    return %arg2, %arg1 : i32, i32
  }
  func.func @transform_2(%arg0: i32, %arg1: i32, %arg2: i32) -> (i32, i32) {
    %c0_i32 = arith.constant 0 : i32
    %c0_i32_0 = arith.constant 0 : i32
    return %c0_i32, %arg1 : i32, i32
  }
  func.func @transform_3(%arg0: i32, %arg1: i32, %arg2: i32) -> (i32, i32) {
    %c0_i32 = arith.constant 0 : i32
    %c0_i32_0 = arith.constant 0 : i32
    %c0_i32_1 = arith.constant 0 : i32
    return %c0_i32, %c0_i32_0 : i32, i32
  }
  func.func @transform_4(%arg0: i32, %arg1: i32, %arg2: i32) -> (i32, i32) {
    %c0_i32 = arith.constant 0 : i32
    %c0_i32_0 = arith.constant 0 : i32
    %c0_i32_1 = arith.constant 0 : i32
    return %c0_i32, %c0_i32_0 : i32, i32
  }
  func.func @transform_5(%arg0: i32, %arg1: i32, %arg2: i32) -> (i32, i32) {
    %c0_i32 = arith.constant 0 : i32
    return %arg0, %arg1 : i32, i32
  }
}

module attributes {stable_mosaic.version = 11 : i64} {
  func.func @_attn_proj_kernel(%arg0: i32, %arg1: i32, %arg2: i32, %arg3: i32, %arg4: memref<1x1x16x8xbf16, #tpu.memory_space<vmem>>, %arg5: memref<8x32xbf16, #tpu.memory_space<vmem>>, %arg6: memref<1x32xf32, #tpu.memory_space<vmem>>, %arg7: memref<16x32xbf16, #tpu.memory_space<vmem>>, %arg8: memref<16x32xbf16, #tpu.memory_space<vmem>>, %arg9: memref<16x32xf32, #tpu.memory_space<vmem>>) attributes {dimension_semantics = [#tpu.dimension_semantics<parallel>, #tpu.dimension_semantics<parallel>, #tpu.dimension_semantics<parallel>, #tpu.dimension_semantics<arbitrary>], iteration_bounds = array<i64: 2, 1, 1, 4>, scalar_prefetch = 0 : i64, scratch_operands = 1 : i64, tpu.core_type = #tpu.core_type<tc>, window_params = [{transform_indices = @transform_0, window_bounds = array<i64: 1, 1, 16, 8>}, {transform_indices = @transform_1, window_bounds = array<i64: 8, 32>}, {transform_indices = @transform_2, window_bounds = array<i64: 1, 32>}, {transform_indices = @transform_3, window_bounds = array<i64: 16, 32>}, {transform_indices = @transform_4, window_bounds = array<i64: 16, 32>}]} {
    %c0_i32 = arith.constant 0 : i32
    %0 = arith.cmpi eq, %arg3, %c0_i32 : i32
    %1 = arith.extui %0 : i1 to i32
    %c0_i32_0 = arith.constant 0 : i32
    %2 = arith.cmpi ne, %1, %c0_i32_0 : i32
    scf.if %2 {
      %cst_11 = arith.constant 0.000000e+00 : f32
      %13 = vector.broadcast %cst_11 : f32 to vector<16x32xf32>
      %c0_12 = arith.constant 0 : index
      %c0_13 = arith.constant 0 : index
      %14 = vector.load %arg9[%c0_12, %c0_13] : memref<16x32xf32, #tpu.memory_space<vmem>>, vector<16x32xf32>
      tpu.vector_store %arg9[%c0_12, %c0_13], %13 {strides = array<i32>} : memref<16x32xf32, #tpu.memory_space<vmem>>, vector<16x32xf32>,
    } else {
    }
    %c0 = arith.constant 0 : index
    %c0_1 = arith.constant 0 : index
    %3 = vector.load %arg9[%c0, %c0_1] : memref<16x32xf32, #tpu.memory_space<vmem>>, vector<16x32xf32>
    %c0_2 = arith.constant 0 : index
    %c0_3 = arith.constant 0 : index
    %c0_4 = arith.constant 0 : index
    %c0_5 = arith.constant 0 : index
    %4 = vector.load %arg4[%c0_2, %c0_3, %c0_4, %c0_5] : memref<1x1x16x8xbf16, #tpu.memory_space<vmem>>, vector<1x1x16x8xbf16>
    %5 = vector.shape_cast %4 : vector<1x1x16x8xbf16> to vector<16x8xbf16>
    %c0_6 = arith.constant 0 : index
    %c0_7 = arith.constant 0 : index
    %6 = vector.load %arg5[%c0_6, %c0_7] : memref<8x32xbf16, #tpu.memory_space<vmem>>, vector<8x32xbf16>
    %cst = arith.constant dense<0.000000e+00> : vector<16x32xf32>
    %7 = tpu.matmul %5, %6, %cst {dimension_numbers = #tpu.dot_dimension_numbers<[1], [0], [0], [1], [0, 0, 1, 1], [], []>} : vector<16x8xbf16>, vector<8x32xbf16>, vector<16x32xf32> -> vector<16x32xf32>
    %8 = arith.addf %3, %7 : vector<16x32xf32>
    %c0_8 = arith.constant 0 : index
    %c0_9 = arith.constant 0 : index
    %9 = vector.load %arg9[%c0_8, %c0_9] : memref<16x32xf32, #tpu.memory_space<vmem>>, vector<16x32xf32>
    tpu.vector_store %arg9[%c0_8, %c0_9], %8 {strides = array<i32>} : memref<16x32xf32, #tpu.memory_space<vmem>>, vector<16x32xf32>,
    %c3_i32 = arith.constant 3 : i32
    %10 = arith.cmpi eq, %arg3, %c3_i32 : i32
    %11 = arith.extui %10 : i1 to i32
    %c0_i32_10 = arith.constant 0 : i32
    %12 = arith.cmpi ne, %11, %c0_i32_10 : i32
    scf.if %12 {
      %c0_11 = arith.constant 0 : index
      %c0_12 = arith.constant 0 : index
      %13 = vector.load %arg9[%c0_11, %c0_12] : memref<16x32xf32, #tpu.memory_space<vmem>>, vector<16x32xf32>
      %c0_13 = arith.constant 0 : index
      %c0_14 = arith.constant 0 : index
      %14 = vector.load %arg6[%c0_13, %c0_14] : memref<1x32xf32, #tpu.memory_space<vmem>>, vector<1x32xf32>
      %15 = vector.broadcast %14 : vector<1x32xf32> to vector<16x32xf32>
      %16 = arith.addf %13, %15 : vector<16x32xf32>
      %c0_15 = arith.constant 0 : index
      %c0_16 = arith.constant 0 : index
      %17 = vector.load %arg7[%c0_15, %c0_16] : memref<16x32xbf16, #tpu.memory_space<vmem>>, vector<16x32xbf16>
      %18 = arith.extf %17 : vector<16x32xbf16> to vector<16x32xf32>
      %19 = arith.addf %16, %18 : vector<16x32xf32>
      %20 = arith.truncf %19 : vector<16x32xf32> to vector<16x32xbf16>
      %c0_17 = arith.constant 0 : index
      %c0_18 = arith.constant 0 : index
      %21 = vector.load %arg8[%c0_17, %c0_18] : memref<16x32xbf16, #tpu.memory_space<vmem>>, vector<16x32xbf16>
      tpu.vector_store %arg8[%c0_17, %c0_18], %20 {strides = array<i32>} : memref<16x32xbf16, #tpu.memory_space<vmem>>, vector<16x32xbf16>,
    } else {
    }
    return
  }
  func.func @transform_0(%arg0: i32, %arg1: i32, %arg2: i32, %arg3: i32) -> (i32, i32, i32, i32) {
    %c0_i32 = arith.constant 0 : i32
    %c0_i32_0 = arith.constant 0 : i32
    return %arg0, %arg3, %arg1, %c0_i32 : i32, i32, i32, i32
  }
  func.func @transform_1(%arg0: i32, %arg1: i32, %arg2: i32, %arg3: i32) -> (i32, i32) {
    %c0_i32 = arith.constant 0 : i32
    return %arg3, %arg2 : i32, i32
  }
  func.func @transform_2(%arg0: i32, %arg1: i32, %arg2: i32, %arg3: i32) -> (i32, i32) {
    %c0_i32 = arith.constant 0 : i32
    %c0_i32_0 = arith.constant 0 : i32
    return %c0_i32, %arg2 : i32, i32
  }
  func.func @transform_3(%arg0: i32, %arg1: i32, %arg2: i32, %arg3: i32) -> (i32, i32) {
    %c1_i32 = arith.constant 1 : i32
    %0 = arith.muli %arg0, %c1_i32 : i32
    %1 = arith.addi %0, %arg1 : i32
    %c0_i32 = arith.constant 0 : i32
    return %1, %arg2 : i32, i32
  }
  func.func @transform_4(%arg0: i32, %arg1: i32, %arg2: i32, %arg3: i32) -> (i32, i32) {
    %c1_i32 = arith.constant 1 : i32
    %0 = arith.muli %arg0, %c1_i32 : i32
    %1 = arith.addi %0, %arg1 : i32
    %c0_i32 = arith.constant 0 : i32
    return %1, %arg2 : i32, i32
  }
}

module attributes {stable_mosaic.version = 11 : i64} {
  func.func @_flash_attn_kernel(%arg0: i32, %arg1: i32, %arg2: i32, %arg3: i32, %arg4: memref<1x1x1x16x8xbf16, #tpu.memory_space<vmem>>, %arg5: memref<1x1x1x16x8xbf16, #tpu.memory_space<vmem>>, %arg6: memref<1x1x1x16x8xbf16, #tpu.memory_space<vmem>>, %arg7: memref<1x1x16x8xbf16, #tpu.memory_space<vmem>>, %arg8: memref<16x1xf32, #tpu.memory_space<vmem>>, %arg9: memref<16x1xf32, #tpu.memory_space<vmem>>, %arg10: memref<16x8xf32, #tpu.memory_space<vmem>>) attributes {dimension_semantics = [#tpu.dimension_semantics<parallel>, #tpu.dimension_semantics<parallel>, #tpu.dimension_semantics<parallel>, #tpu.dimension_semantics<arbitrary>], iteration_bounds = array<i64: 2, 4, 1, 1>, scalar_prefetch = 0 : i64, scratch_operands = 3 : i64, tpu.core_type = #tpu.core_type<tc>, window_params = [{transform_indices = @transform_0, window_bounds = array<i64: 1, 1, 1, 16, 8>}, {transform_indices = @transform_1, window_bounds = array<i64: 1, 1, 1, 16, 8>}, {transform_indices = @transform_2, window_bounds = array<i64: 1, 1, 1, 16, 8>}, {transform_indices = @transform_3, window_bounds = array<i64: 1, 1, 16, 8>}]} {
    %c0_i32 = arith.constant 0 : i32
    %0 = arith.cmpi eq, %arg3, %c0_i32 : i32
    %1 = arith.extui %0 : i1 to i32
    %c0_i32_0 = arith.constant 0 : i32
    %2 = arith.cmpi ne, %1, %c0_i32_0 : i32
    scf.if %2 {
      %cst_33 = arith.constant 0xFF800000 : f32
      %38 = vector.broadcast %cst_33 : f32 to vector<16x1xf32>
      %c0_34 = arith.constant 0 : index
      %c0_35 = arith.constant 0 : index
      %39 = vector.load %arg8[%c0_34, %c0_35] : memref<16x1xf32, #tpu.memory_space<vmem>>, vector<16x1xf32>
      tpu.vector_store %arg8[%c0_34, %c0_35], %38 {strides = array<i32>} : memref<16x1xf32, #tpu.memory_space<vmem>>, vector<16x1xf32>,
      %cst_36 = arith.constant 0.000000e+00 : f32
      %40 = vector.broadcast %cst_36 : f32 to vector<16x1xf32>
      %c0_37 = arith.constant 0 : index
      %c0_38 = arith.constant 0 : index
      %41 = vector.load %arg9[%c0_37, %c0_38] : memref<16x1xf32, #tpu.memory_space<vmem>>, vector<16x1xf32>
      tpu.vector_store %arg9[%c0_37, %c0_38], %40 {strides = array<i32>} : memref<16x1xf32, #tpu.memory_space<vmem>>, vector<16x1xf32>,
      %cst_39 = arith.constant 0.000000e+00 : f32
      %42 = vector.broadcast %cst_39 : f32 to vector<16x8xf32>
      %c0_40 = arith.constant 0 : index
      %c0_41 = arith.constant 0 : index
      %43 = vector.load %arg10[%c0_40, %c0_41] : memref<16x8xf32, #tpu.memory_space<vmem>>, vector<16x8xf32>
      tpu.vector_store %arg10[%c0_40, %c0_41], %42 {strides = array<i32>} : memref<16x8xf32, #tpu.memory_space<vmem>>, vector<16x8xf32>,
    } else {
    }
    %c0 = arith.constant 0 : index
    %c0_1 = arith.constant 0 : index
    %c0_2 = arith.constant 0 : index
    %c0_3 = arith.constant 0 : index
    %c0_4 = arith.constant 0 : index
    %3 = vector.load %arg4[%c0, %c0_1, %c0_2, %c0_3, %c0_4] : memref<1x1x1x16x8xbf16, #tpu.memory_space<vmem>>, vector<1x1x1x16x8xbf16>
    %4 = vector.shape_cast %3 : vector<1x1x1x16x8xbf16> to vector<16x8xbf16>
    %c0_5 = arith.constant 0 : index
    %c0_6 = arith.constant 0 : index
    %c0_7 = arith.constant 0 : index
    %c0_8 = arith.constant 0 : index
    %c0_9 = arith.constant 0 : index
    %5 = vector.load %arg5[%c0_5, %c0_6, %c0_7, %c0_8, %c0_9] : memref<1x1x1x16x8xbf16, #tpu.memory_space<vmem>>, vector<1x1x1x16x8xbf16>
    %6 = vector.shape_cast %5 : vector<1x1x1x16x8xbf16> to vector<16x8xbf16>
    %c0_10 = arith.constant 0 : index
    %c0_11 = arith.constant 0 : index
    %c0_12 = arith.constant 0 : index
    %c0_13 = arith.constant 0 : index
    %c0_14 = arith.constant 0 : index
    %7 = vector.load %arg6[%c0_10, %c0_11, %c0_12, %c0_13, %c0_14] : memref<1x1x1x16x8xbf16, #tpu.memory_space<vmem>>, vector<1x1x1x16x8xbf16>
    %8 = vector.shape_cast %7 : vector<1x1x1x16x8xbf16> to vector<16x8xbf16>
    %cst = arith.constant dense<0.000000e+00> : vector<16x16xf32>
    %9 = tpu.matmul %4, %6, %cst {dimension_numbers = #tpu.dot_dimension_numbers<[1], [1], [0], [0], [0, 0, 1, 0], [], []>} : vector<16x8xbf16>, vector<16x8xbf16>, vector<16x16xf32> -> vector<16x16xf32>
    %cst_15 = arith.constant 0.353553385 : f32
    %10 = vector.broadcast %cst_15 : f32 to vector<16x16xf32>
    %11 = arith.mulf %9, %10 : vector<16x16xf32>
    %c0_16 = arith.constant 0 : index
    %c0_17 = arith.constant 0 : index
    %12 = vector.load %arg8[%c0_16, %c0_17] : memref<16x1xf32, #tpu.memory_space<vmem>>, vector<16x1xf32>
    %cst_18 = arith.constant dense<0xFF800000> : vector<16xf32>
    %13 = vector.multi_reduction <maximumf>, %11, %cst_18 [1] : vector<16x16xf32> to vector<16xf32>
    %14 = vector.shape_cast %13 : vector<16xf32> to vector<16x1xf32>
    %15 = arith.maximumf %12, %14 : vector<16x1xf32>
    %16 = arith.subf %12, %15 : vector<16x1xf32>
    %17 = math.exp %16 : vector<16x1xf32>
    %18 = vector.broadcast %15 : vector<16x1xf32> to vector<16x16xf32>
    %19 = arith.subf %11, %18 : vector<16x16xf32>
    %20 = math.exp %19 : vector<16x16xf32>
    %c0_19 = arith.constant 0 : index
    %c0_20 = arith.constant 0 : index
    %21 = vector.load %arg9[%c0_19, %c0_20] : memref<16x1xf32, #tpu.memory_space<vmem>>, vector<16x1xf32>
    %22 = arith.mulf %17, %21 : vector<16x1xf32>
    %cst_21 = arith.constant dense<0.000000e+00> : vector<16xf32>
    %23 = vector.multi_reduction <add>, %20, %cst_21 [1] : vector<16x16xf32> to vector<16xf32>
    %24 = vector.shape_cast %23 : vector<16xf32> to vector<16x1xf32>
    %25 = arith.addf %22, %24 : vector<16x1xf32>
    %c0_22 = arith.constant 0 : index
    %c0_23 = arith.constant 0 : index
    %26 = vector.load %arg9[%c0_22, %c0_23] : memref<16x1xf32, #tpu.memory_space<vmem>>, vector<16x1xf32>
    tpu.vector_store %arg9[%c0_22, %c0_23], %25 {strides = array<i32>} : memref<16x1xf32, #tpu.memory_space<vmem>>, vector<16x1xf32>,
    %c0_24 = arith.constant 0 : index
    %c0_25 = arith.constant 0 : index
    %27 = vector.load %arg10[%c0_24, %c0_25] : memref<16x8xf32, #tpu.memory_space<vmem>>, vector<16x8xf32>
    %28 = vector.broadcast %17 : vector<16x1xf32> to vector<16x8xf32>
    %29 = arith.mulf %28, %27 : vector<16x8xf32>
    %30 = arith.truncf %20 : vector<16x16xf32> to vector<16x16xbf16>
    %cst_26 = arith.constant dense<0.000000e+00> : vector<16x8xf32>
    %31 = tpu.matmul %30, %8, %cst_26 {dimension_numbers = #tpu.dot_dimension_numbers<[1], [0], [0], [1], [0, 0, 1, 1], [], []>} : vector<16x16xbf16>, vector<16x8xbf16>, vector<16x8xf32> -> vector<16x8xf32>
    %32 = arith.addf %29, %31 : vector<16x8xf32>
    %c0_27 = arith.constant 0 : index
    %c0_28 = arith.constant 0 : index
    %33 = vector.load %arg10[%c0_27, %c0_28] : memref<16x8xf32, #tpu.memory_space<vmem>>, vector<16x8xf32>
    tpu.vector_store %arg10[%c0_27, %c0_28], %32 {strides = array<i32>} : memref<16x8xf32, #tpu.memory_space<vmem>>, vector<16x8xf32>,
    %c0_29 = arith.constant 0 : index
    %c0_30 = arith.constant 0 : index
    %34 = vector.load %arg8[%c0_29, %c0_30] : memref<16x1xf32, #tpu.memory_space<vmem>>, vector<16x1xf32>
    tpu.vector_store %arg8[%c0_29, %c0_30], %15 {strides = array<i32>} : memref<16x1xf32, #tpu.memory_space<vmem>>, vector<16x1xf32>,
    %c0_i32_31 = arith.constant 0 : i32
    %35 = arith.cmpi eq, %arg3, %c0_i32_31 : i32
    %36 = arith.extui %35 : i1 to i32
    %c0_i32_32 = arith.constant 0 : i32
    %37 = arith.cmpi ne, %36, %c0_i32_32 : i32
    scf.if %37 {
      %c0_33 = arith.constant 0 : index
      %c0_34 = arith.constant 0 : index
      %38 = vector.load %arg9[%c0_33, %c0_34] : memref<16x1xf32, #tpu.memory_space<vmem>>, vector<16x1xf32>
      %39 = tpu.reciprocal %38 {approx = true} : vector<16x1xf32> -> vector<16x1xf32>
      %c0_35 = arith.constant 0 : index
      %c0_36 = arith.constant 0 : index
      %40 = vector.load %arg10[%c0_35, %c0_36] : memref<16x8xf32, #tpu.memory_space<vmem>>, vector<16x8xf32>
      %41 = vector.broadcast %39 : vector<16x1xf32> to vector<16x8xf32>
      %42 = arith.mulf %40, %41 : vector<16x8xf32>
      %43 = arith.truncf %42 : vector<16x8xf32> to vector<16x8xbf16>
      %c0_37 = arith.constant 0 : index
      %c0_38 = arith.constant 0 : index
      %c0_39 = arith.constant 0 : index
      %c0_40 = arith.constant 0 : index
      %44 = vector.load %arg7[%c0_37, %c0_38, %c0_39, %c0_40] : memref<1x1x16x8xbf16, #tpu.memory_space<vmem>>, vector<1x1x16x8xbf16>
      %45 = vector.shape_cast %44 : vector<1x1x16x8xbf16> to vector<16x8xbf16>
      %46 = vector.shape_cast %43 : vector<16x8xbf16> to vector<1x1x16x8xbf16>
      tpu.vector_store %arg7[%c0_37, %c0_38, %c0_39, %c0_40], %46 {strides = array<i32>} : memref<1x1x16x8xbf16, #tpu.memory_space<vmem>>, vector<1x1x16x8xbf16>,
    } else {
    }
    return
  }
  func.func @transform_0(%arg0: i32, %arg1: i32, %arg2: i32, %arg3: i32) -> (i32, i32, i32, i32, i32) {
    %c0_i32 = arith.constant 0 : i32
    %c0_i32_0 = arith.constant 0 : i32
    %c0_i32_1 = arith.constant 0 : i32
    return %c0_i32, %arg0, %arg1, %arg2, %c0_i32_0 : i32, i32, i32, i32, i32
  }
  func.func @transform_1(%arg0: i32, %arg1: i32, %arg2: i32, %arg3: i32) -> (i32, i32, i32, i32, i32) {
    %c1_i32 = arith.constant 1 : i32
    %c0_i32 = arith.constant 0 : i32
    %c0_i32_0 = arith.constant 0 : i32
    return %c1_i32, %arg0, %arg1, %arg3, %c0_i32 : i32, i32, i32, i32, i32
  }
  func.func @transform_2(%arg0: i32, %arg1: i32, %arg2: i32, %arg3: i32) -> (i32, i32, i32, i32, i32) {
    %c2_i32 = arith.constant 2 : i32
    %c0_i32 = arith.constant 0 : i32
    %c0_i32_0 = arith.constant 0 : i32
    return %c2_i32, %arg0, %arg1, %arg3, %c0_i32 : i32, i32, i32, i32, i32
  }
  func.func @transform_3(%arg0: i32, %arg1: i32, %arg2: i32, %arg3: i32) -> (i32, i32, i32, i32) {
    %c0_i32 = arith.constant 0 : i32
    %c0_i32_0 = arith.constant 0 : i32
    return %arg0, %arg1, %arg2, %c0_i32 : i32, i32, i32, i32
  }
}

module attributes {stable_mosaic.version = 11 : i64} {
  func.func @kernel(%arg0: i32, %arg1: i32, %arg2: i32, %arg3: memref<32x32xbf16, #tpu.memory_space<vmem>>, %arg4: memref<32x128xbf16, #tpu.memory_space<vmem>>, %arg5: memref<1x128xf32, #tpu.memory_space<vmem>>, %arg6: memref<1x32xf32, #tpu.memory_space<vmem>>, %arg7: memref<1x32xf32, #tpu.memory_space<vmem>>, %arg8: memref<32x128xbf16, #tpu.memory_space<vmem>>, %arg9: memref<32x128xf32, #tpu.memory_space<vmem>>, %arg10: memref<32x32xbf16, #tpu.memory_space<vmem>>) attributes {dimension_semantics = [#tpu.dimension_semantics<parallel>, #tpu.dimension_semantics<arbitrary>, #tpu.dimension_semantics<arbitrary>], iteration_bounds = array<i64: 1, 1, 1>, scalar_prefetch = 0 : i64, scratch_operands = 2 : i64, tpu.core_type = #tpu.core_type<tc>, window_params = [{transform_indices = @transform_0, window_bounds = array<i64: 32, 32>}, {transform_indices = @transform_1, window_bounds = array<i64: 32, 128>}, {transform_indices = @transform_2, window_bounds = array<i64: 1, 128>}, {pipeline_mode = #tpu.pipeline_mode<synchronous>, transform_indices = @transform_3, window_bounds = array<i64: 1, 32>}, {pipeline_mode = #tpu.pipeline_mode<synchronous>, transform_indices = @transform_4, window_bounds = array<i64: 1, 32>}, {transform_indices = @transform_5, window_bounds = array<i64: 32, 128>}]} {
    %c0_i32 = arith.constant 0 : i32
    %0 = arith.cmpi eq, %arg2, %c0_i32 : i32
    %1 = arith.extui %0 : i1 to i32
    %c0_i32_0 = arith.constant 0 : i32
    %2 = arith.cmpi ne, %1, %c0_i32_0 : i32
    scf.if %2 {
      %cst_13 = arith.constant 0.000000e+00 : f32
      %17 = vector.broadcast %cst_13 : f32 to vector<32x128xf32>
      %c0_14 = arith.constant 0 : index
      %c0_15 = arith.constant 0 : index
      %18 = vector.load %arg9[%c0_14, %c0_15] : memref<32x128xf32, #tpu.memory_space<vmem>>, vector<32x128xf32>
      tpu.vector_store %arg9[%c0_14, %c0_15], %17 {strides = array<i32>} : memref<32x128xf32, #tpu.memory_space<vmem>>, vector<32x128xf32>,
    } else {
    }
    %c0_i32_1 = arith.constant 0 : i32
    %3 = arith.cmpi eq, %arg1, %c0_i32_1 : i32
    %c0_i32_2 = arith.constant 0 : i32
    %4 = arith.cmpi eq, %arg2, %c0_i32_2 : i32
    %5 = arith.andi %3, %4 : i1
    %6 = arith.extui %5 : i1 to i32
    %c0_i32_3 = arith.constant 0 : i32
    %7 = arith.cmpi ne, %6, %c0_i32_3 : i32
    scf.if %7 {
      %c0_13 = arith.constant 0 : index
      %c0_14 = arith.constant 0 : index
      %17 = vector.load %arg3[%c0_13, %c0_14] : memref<32x32xbf16, #tpu.memory_space<vmem>>, vector<32x32xbf16>
      %18 = arith.extf %17 : vector<32x32xbf16> to vector<32x32xf32>
      %cst_15 = arith.constant dense<0.000000e+00> : vector<32xf32>
      %19 = vector.multi_reduction <add>, %18, %cst_15 [1] : vector<32x32xf32> to vector<32xf32>
      %20 = vector.shape_cast %19 : vector<32xf32> to vector<32x1xf32>
      %cst_16 = arith.constant 3.200000e+01 : f32
      %21 = vector.broadcast %cst_16 : f32 to vector<32x1xf32>
      %22 = arith.divf %20, %21 : vector<32x1xf32>
      %23 = vector.broadcast %22 : vector<32x1xf32> to vector<32x32xf32>
      %24 = arith.subf %18, %23 : vector<32x32xf32>
      %25 = arith.mulf %24, %24 : vector<32x32xf32>
      %cst_17 = arith.constant dense<0.000000e+00> : vector<32xf32>
      %26 = vector.multi_reduction <add>, %25, %cst_17 [1] : vector<32x32xf32> to vector<32xf32>
      %27 = vector.shape_cast %26 : vector<32xf32> to vector<32x1xf32>
      %cst_18 = arith.constant 3.200000e+01 : f32
      %28 = vector.broadcast %cst_18 : f32 to vector<32x1xf32>
      %29 = arith.divf %27, %28 : vector<32x1xf32>
      %cst_19 = arith.constant 9.99999974E-6 : f32
      %30 = vector.broadcast %cst_19 : f32 to vector<32x1xf32>
      %31 = arith.addf %29, %30 : vector<32x1xf32>
      %32 = math.rsqrt %31 : vector<32x1xf32>
      %33 = vector.broadcast %32 : vector<32x1xf32> to vector<32x32xf32>
      %34 = arith.mulf %24, %33 : vector<32x32xf32>
      %c0_20 = arith.constant 0 : index
      %c0_21 = arith.constant 0 : index
      %35 = vector.load %arg6[%c0_20, %c0_21] : memref<1x32xf32, #tpu.memory_space<vmem>>, vector<1x32xf32>
      %36 = vector.broadcast %35 : vector<1x32xf32> to vector<32x32xf32>
      %37 = arith.mulf %34, %36 : vector<32x32xf32>
      %c0_22 = arith.constant 0 : index
      %c0_23 = arith.constant 0 : index
      %38 = vector.load %arg7[%c0_22, %c0_23] : memref<1x32xf32, #tpu.memory_space<vmem>>, vector<1x32xf32>
      %39 = vector.broadcast %38 : vector<1x32xf32> to vector<32x32xf32>
      %40 = arith.addf %37, %39 : vector<32x32xf32>
      %41 = arith.truncf %40 : vector<32x32xf32> to vector<32x32xbf16>
      %c0_24 = arith.constant 0 : index
      %c0_25 = arith.constant 0 : index
      %42 = vector.load %arg10[%c0_24, %c0_25] : memref<32x32xbf16, #tpu.memory_space<vmem>>, vector<32x32xbf16>
      tpu.vector_store %arg10[%c0_24, %c0_25], %41 {strides = array<i32>} : memref<32x32xbf16, #tpu.memory_space<vmem>>, vector<32x32xbf16>,
    } else {
    }
    %c0 = arith.constant 0 : index
    %c0_4 = arith.constant 0 : index
    %8 = vector.load %arg10[%c0, %c0_4] : memref<32x32xbf16, #tpu.memory_space<vmem>>, vector<32x32xbf16>
    %c0_5 = arith.constant 0 : index
    %c0_6 = arith.constant 0 : index
    %9 = vector.load %arg9[%c0_5, %c0_6] : memref<32x128xf32, #tpu.memory_space<vmem>>, vector<32x128xf32>
    %c0_7 = arith.constant 0 : index
    %c0_8 = arith.constant 0 : index
    %10 = vector.load %arg4[%c0_7, %c0_8] : memref<32x128xbf16, #tpu.memory_space<vmem>>, vector<32x128xbf16>
    %cst = arith.constant dense<0.000000e+00> : vector<32x128xf32>
    %11 = tpu.matmul %8, %10, %cst {dimension_numbers = #tpu.dot_dimension_numbers<[1], [0], [0], [1], [0, 0, 1, 1], [], []>} : vector<32x32xbf16>, vector<32x128xbf16>, vector<32x128xf32> -> vector<32x128xf32>
    %12 = arith.addf %9, %11 : vector<32x128xf32>
    %c0_9 = arith.constant 0 : index
    %c0_10 = arith.constant 0 : index
    %13 = vector.load %arg9[%c0_9, %c0_10] : memref<32x128xf32, #tpu.memory_space<vmem>>, vector<32x128xf32>
    tpu.vector_store %arg9[%c0_9, %c0_10], %12 {strides = array<i32>} : memref<32x128xf32, #tpu.memory_space<vmem>>, vector<32x128xf32>,
    %c0_i32_11 = arith.constant 0 : i32
    %14 = arith.cmpi eq, %arg2, %c0_i32_11 : i32
    %15 = arith.extui %14 : i1 to i32
    %c0_i32_12 = arith.constant 0 : i32
    %16 = arith.cmpi ne, %15, %c0_i32_12 : i32
    scf.if %16 {
      %c0_13 = arith.constant 0 : index
      %c0_14 = arith.constant 0 : index
      %17 = vector.load %arg9[%c0_13, %c0_14] : memref<32x128xf32, #tpu.memory_space<vmem>>, vector<32x128xf32>
      %c0_15 = arith.constant 0 : index
      %c0_16 = arith.constant 0 : index
      %18 = vector.load %arg5[%c0_15, %c0_16] : memref<1x128xf32, #tpu.memory_space<vmem>>, vector<1x128xf32>
      %19 = vector.broadcast %18 : vector<1x128xf32> to vector<32x128xf32>
      %20 = arith.addf %17, %19 : vector<32x128xf32>
      %cst_17 = arith.constant 5.000000e-01 : f32
      %21 = vector.broadcast %cst_17 : f32 to vector<32x128xf32>
      %22 = arith.mulf %21, %20 : vector<32x128xf32>
      %cst_18 = arith.constant 0.707106769 : f32
      %23 = vector.broadcast %cst_18 : f32 to vector<32x128xf32>
      %24 = arith.mulf %20, %23 : vector<32x128xf32>
      %cst_19 = arith.constant 0.000000e+00 : f32
      %25 = vector.broadcast %cst_19 : f32 to vector<32x128xf32>
      %26 = arith.cmpf oge, %24, %25 : vector<32x128xf32>
      %cst_20 = arith.constant 1.000000e+00 : f32
      %cst_21 = arith.constant -1.000000e+00 : f32
      %27 = vector.broadcast %cst_20 : f32 to vector<32x128xf32>
      %28 = vector.broadcast %cst_21 : f32 to vector<32x128xf32>
      %29 = arith.select %26, %27, %28 : vector<32x128xi1>, vector<32x128xf32>
      %30 = math.absf %24 : vector<32x128xf32>
      %cst_22 = arith.constant 0.327591091 : f32
      %31 = vector.broadcast %cst_22 : f32 to vector<32x128xf32>
      %32 = arith.mulf %31, %30 : vector<32x128xf32>
      %cst_23 = arith.constant 1.000000e+00 : f32
      %33 = vector.broadcast %cst_23 : f32 to vector<32x128xf32>
      %34 = arith.addf %33, %32 : vector<32x128xf32>
      %cst_24 = arith.constant 1.000000e+00 : f32
      %35 = vector.broadcast %cst_24 : f32 to vector<32x128xf32>
      %36 = arith.divf %35, %34 : vector<32x128xf32>
      %cst_25 = arith.constant 1.06140542 : f32
      %37 = vector.broadcast %cst_25 : f32 to vector<32x128xf32>
      %38 = arith.mulf %37, %36 : vector<32x128xf32>
      %cst_26 = arith.constant -1.45315206 : f32
      %39 = vector.broadcast %cst_26 : f32 to vector<32x128xf32>
      %40 = arith.addf %38, %39 : vector<32x128xf32>
      %41 = arith.mulf %40, %36 : vector<32x128xf32>
      %cst_27 = arith.constant 1.42141378 : f32
      %42 = vector.broadcast %cst_27 : f32 to vector<32x128xf32>
      %43 = arith.addf %41, %42 : vector<32x128xf32>
      %44 = arith.mulf %43, %36 : vector<32x128xf32>
      %cst_28 = arith.constant -0.284496725 : f32
      %45 = vector.broadcast %cst_28 : f32 to vector<32x128xf32>
      %46 = arith.addf %44, %45 : vector<32x128xf32>
      %47 = arith.mulf %46, %36 : vector<32x128xf32>
      %cst_29 = arith.constant 0.254829586 : f32
      %48 = vector.broadcast %cst_29 : f32 to vector<32x128xf32>
      %49 = arith.addf %47, %48 : vector<32x128xf32>
      %50 = arith.mulf %49, %36 : vector<32x128xf32>
      %cst_30 = arith.constant 0.000000e+00 : f32
      %51 = vector.broadcast %cst_30 : f32 to vector<32x128xf32>
      %52 = arith.subf %51, %30 : vector<32x128xf32>
      %53 = arith.mulf %52, %30 : vector<32x128xf32>
      %54 = math.exp %53 : vector<32x128xf32>
      %55 = arith.mulf %50, %54 : vector<32x128xf32>
      %cst_31 = arith.constant 1.000000e+00 : f32
      %56 = vector.broadcast %cst_31 : f32 to vector<32x128xf32>
      %57 = arith.subf %56, %55 : vector<32x128xf32>
      %58 = arith.mulf %29, %57 : vector<32x128xf32>
      %cst_32 = arith.constant 1.000000e+00 : f32
      %59 = vector.broadcast %cst_32 : f32 to vector<32x128xf32>
      %60 = arith.addf %59, %58 : vector<32x128xf32>
      %61 = arith.mulf %22, %60 : vector<32x128xf32>
      %62 = arith.truncf %61 : vector<32x128xf32> to vector<32x128xbf16>
      %c0_33 = arith.constant 0 : index
      %c0_34 = arith.constant 0 : index
      %63 = vector.load %arg8[%c0_33, %c0_34] : memref<32x128xbf16, #tpu.memory_space<vmem>>, vector<32x128xbf16>
      tpu.vector_store %arg8[%c0_33, %c0_34], %62 {strides = array<i32>} : memref<32x128xbf16, #tpu.memory_space<vmem>>, vector<32x128xbf16>,
    } else {
    }
    return
  }
  func.func @transform_0(%arg0: i32, %arg1: i32, %arg2: i32) -> (i32, i32) {
    %c0_i32 = arith.constant 0 : i32
    return %arg0, %arg2 : i32, i32
  }
  func.func @transform_1(%arg0: i32, %arg1: i32, %arg2: i32) -> (i32, i32) {
    %c0_i32 = arith.constant 0 : i32
    return %arg2, %arg1 : i32, i32
  }
  func.func @transform_2(%arg0: i32, %arg1: i32, %arg2: i32) -> (i32, i32) {
    %c0_i32 = arith.constant 0 : i32
    %c0_i32_0 = arith.constant 0 : i32
    return %c0_i32, %arg1 : i32, i32
  }
  func.func @transform_3(%arg0: i32, %arg1: i32, %arg2: i32) -> (i32, i32) {
    %c0_i32 = arith.constant 0 : i32
    %c0_i32_0 = arith.constant 0 : i32
    %c0_i32_1 = arith.constant 0 : i32
    return %c0_i32, %c0_i32_0 : i32, i32
  }
  func.func @transform_4(%arg0: i32, %arg1: i32, %arg2: i32) -> (i32, i32) {
    %c0_i32 = arith.constant 0 : i32
    %c0_i32_0 = arith.constant 0 : i32
    %c0_i32_1 = arith.constant 0 : i32
    return %c0_i32, %c0_i32_0 : i32, i32
  }
  func.func @transform_5(%arg0: i32, %arg1: i32, %arg2: i32) -> (i32, i32) {
    %c0_i32 = arith.constant 0 : i32
    return %arg0, %arg1 : i32, i32
  }
}

module attributes {stable_mosaic.version = 11 : i64} {
  func.func @kernel(%arg0: i32, %arg1: i32, %arg2: i32, %arg3: memref<32x128xbf16, #tpu.memory_space<vmem>>, %arg4: memref<128x32xbf16, #tpu.memory_space<vmem>>, %arg5: memref<1x32xf32, #tpu.memory_space<vmem>>, %arg6: memref<32x32xbf16, #tpu.memory_space<vmem>>, %arg7: memref<32x32xbf16, #tpu.memory_space<vmem>>, %arg8: memref<32x32xf32, #tpu.memory_space<vmem>>) attributes {dimension_semantics = [#tpu.dimension_semantics<parallel>, #tpu.dimension_semantics<parallel>, #tpu.dimension_semantics<arbitrary>], iteration_bounds = array<i64: 1, 1, 1>, scalar_prefetch = 0 : i64, scratch_operands = 1 : i64, tpu.core_type = #tpu.core_type<tc>, window_params = [{transform_indices = @transform_0, window_bounds = array<i64: 32, 128>}, {transform_indices = @transform_1, window_bounds = array<i64: 128, 32>}, {transform_indices = @transform_2, window_bounds = array<i64: 1, 32>}, {transform_indices = @transform_3, window_bounds = array<i64: 32, 32>}, {transform_indices = @transform_4, window_bounds = array<i64: 32, 32>}]} {
    %c0_i32 = arith.constant 0 : i32
    %0 = arith.cmpi eq, %arg2, %c0_i32 : i32
    %1 = arith.extui %0 : i1 to i32
    %c0_i32_0 = arith.constant 0 : i32
    %2 = arith.cmpi ne, %1, %c0_i32_0 : i32
    scf.if %2 {
      %cst_10 = arith.constant 0.000000e+00 : f32
      %12 = vector.broadcast %cst_10 : f32 to vector<32x32xf32>
      %c0_11 = arith.constant 0 : index
      %c0_12 = arith.constant 0 : index
      %13 = vector.load %arg8[%c0_11, %c0_12] : memref<32x32xf32, #tpu.memory_space<vmem>>, vector<32x32xf32>
      tpu.vector_store %arg8[%c0_11, %c0_12], %12 {strides = array<i32>} : memref<32x32xf32, #tpu.memory_space<vmem>>, vector<32x32xf32>,
    } else {
    }
    %c0 = arith.constant 0 : index
    %c0_1 = arith.constant 0 : index
    %3 = vector.load %arg3[%c0, %c0_1] : memref<32x128xbf16, #tpu.memory_space<vmem>>, vector<32x128xbf16>
    %c0_2 = arith.constant 0 : index
    %c0_3 = arith.constant 0 : index
    %4 = vector.load %arg8[%c0_2, %c0_3] : memref<32x32xf32, #tpu.memory_space<vmem>>, vector<32x32xf32>
    %c0_4 = arith.constant 0 : index
    %c0_5 = arith.constant 0 : index
    %5 = vector.load %arg4[%c0_4, %c0_5] : memref<128x32xbf16, #tpu.memory_space<vmem>>, vector<128x32xbf16>
    %cst = arith.constant dense<0.000000e+00> : vector<32x32xf32>
    %6 = tpu.matmul %3, %5, %cst {dimension_numbers = #tpu.dot_dimension_numbers<[1], [0], [0], [1], [0, 0, 1, 1], [], []>} : vector<32x128xbf16>, vector<128x32xbf16>, vector<32x32xf32> -> vector<32x32xf32>
    %7 = arith.addf %4, %6 : vector<32x32xf32>
    %c0_6 = arith.constant 0 : index
    %c0_7 = arith.constant 0 : index
    %8 = vector.load %arg8[%c0_6, %c0_7] : memref<32x32xf32, #tpu.memory_space<vmem>>, vector<32x32xf32>
    tpu.vector_store %arg8[%c0_6, %c0_7], %7 {strides = array<i32>} : memref<32x32xf32, #tpu.memory_space<vmem>>, vector<32x32xf32>,
    %c0_i32_8 = arith.constant 0 : i32
    %9 = arith.cmpi eq, %arg2, %c0_i32_8 : i32
    %10 = arith.extui %9 : i1 to i32
    %c0_i32_9 = arith.constant 0 : i32
    %11 = arith.cmpi ne, %10, %c0_i32_9 : i32
    scf.if %11 {
      %c0_10 = arith.constant 0 : index
      %c0_11 = arith.constant 0 : index
      %12 = vector.load %arg8[%c0_10, %c0_11] : memref<32x32xf32, #tpu.memory_space<vmem>>, vector<32x32xf32>
      %c0_12 = arith.constant 0 : index
      %c0_13 = arith.constant 0 : index
      %13 = vector.load %arg5[%c0_12, %c0_13] : memref<1x32xf32, #tpu.memory_space<vmem>>, vector<1x32xf32>
      %14 = vector.broadcast %13 : vector<1x32xf32> to vector<32x32xf32>
      %15 = arith.addf %12, %14 : vector<32x32xf32>
      %c0_14 = arith.constant 0 : index
      %c0_15 = arith.constant 0 : index
      %16 = vector.load %arg6[%c0_14, %c0_15] : memref<32x32xbf16, #tpu.memory_space<vmem>>, vector<32x32xbf16>
      %17 = arith.extf %16 : vector<32x32xbf16> to vector<32x32xf32>
      %18 = arith.addf %15, %17 : vector<32x32xf32>
      %19 = arith.truncf %18 : vector<32x32xf32> to vector<32x32xbf16>
      %c0_16 = arith.constant 0 : index
      %c0_17 = arith.constant 0 : index
      %20 = vector.load %arg7[%c0_16, %c0_17] : memref<32x32xbf16, #tpu.memory_space<vmem>>, vector<32x32xbf16>
      tpu.vector_store %arg7[%c0_16, %c0_17], %19 {strides = array<i32>} : memref<32x32xbf16, #tpu.memory_space<vmem>>, vector<32x32xbf16>,
    } else {
    }
    return
  }
  func.func @transform_0(%arg0: i32, %arg1: i32, %arg2: i32) -> (i32, i32) {
    %c0_i32 = arith.constant 0 : i32
    return %arg0, %arg2 : i32, i32
  }
  func.func @transform_1(%arg0: i32, %arg1: i32, %arg2: i32) -> (i32, i32) {
    %c0_i32 = arith.constant 0 : i32
    return %arg2, %arg1 : i32, i32
  }
  func.func @transform_2(%arg0: i32, %arg1: i32, %arg2: i32) -> (i32, i32) {
    %c0_i32 = arith.constant 0 : i32
    %c0_i32_0 = arith.constant 0 : i32
    return %c0_i32, %arg1 : i32, i32
  }
  func.func @transform_3(%arg0: i32, %arg1: i32, %arg2: i32) -> (i32, i32) {
    %c0_i32 = arith.constant 0 : i32
    return %arg0, %arg1 : i32, i32
  }
  func.func @transform_4(%arg0: i32, %arg1: i32, %arg2: i32) -> (i32, i32) {
    %c0_i32 = arith.constant 0 : i32
    return %arg0, %arg1 : i32, i32
  }
}

module attributes {stable_mosaic.version = 11 : i64} {
  func.func @kernel(%arg0: i32, %arg1: i32, %arg2: i32, %arg3: memref<32x32xbf16, #tpu.memory_space<vmem>>, %arg4: memref<32x16xbf16, #tpu.memory_space<vmem>>, %arg5: memref<1x16xf32, #tpu.memory_space<vmem>>, %arg6: memref<1x16xf32, #tpu.memory_space<vmem>>, %arg7: memref<1x16xf32, #tpu.memory_space<vmem>>, %arg8: memref<32x16xbf16, #tpu.memory_space<vmem>>, %arg9: memref<32x16xf32, #tpu.memory_space<vmem>>) attributes {dimension_semantics = [#tpu.dimension_semantics<parallel>, #tpu.dimension_semantics<parallel>, #tpu.dimension_semantics<arbitrary>], iteration_bounds = array<i64: 1, 1, 1>, scalar_prefetch = 0 : i64, scratch_operands = 1 : i64, tpu.core_type = #tpu.core_type<tc>, window_params = [{transform_indices = @transform_0, window_bounds = array<i64: 32, 32>}, {transform_indices = @transform_1, window_bounds = array<i64: 32, 16>}, {transform_indices = @transform_2, window_bounds = array<i64: 1, 16>}, {pipeline_mode = #tpu.pipeline_mode<synchronous>, transform_indices = @transform_3, window_bounds = array<i64: 1, 16>}, {pipeline_mode = #tpu.pipeline_mode<synchronous>, transform_indices = @transform_4, window_bounds = array<i64: 1, 16>}, {transform_indices = @transform_5, window_bounds = array<i64: 32, 16>}]} {
    %c0_i32 = arith.constant 0 : i32
    %0 = arith.cmpi eq, %arg2, %c0_i32 : i32
    %1 = arith.extui %0 : i1 to i32
    %c0_i32_0 = arith.constant 0 : i32
    %2 = arith.cmpi ne, %1, %c0_i32_0 : i32
    scf.if %2 {
      %cst_10 = arith.constant 0.000000e+00 : f32
      %12 = vector.broadcast %cst_10 : f32 to vector<32x16xf32>
      %c0_11 = arith.constant 0 : index
      %c0_12 = arith.constant 0 : index
      %13 = vector.load %arg9[%c0_11, %c0_12] : memref<32x16xf32, #tpu.memory_space<vmem>>, vector<32x16xf32>
      tpu.vector_store %arg9[%c0_11, %c0_12], %12 {strides = array<i32>} : memref<32x16xf32, #tpu.memory_space<vmem>>, vector<32x16xf32>,
    } else {
    }
    %c0 = arith.constant 0 : index
    %c0_1 = arith.constant 0 : index
    %3 = vector.load %arg3[%c0, %c0_1] : memref<32x32xbf16, #tpu.memory_space<vmem>>, vector<32x32xbf16>
    %c0_2 = arith.constant 0 : index
    %c0_3 = arith.constant 0 : index
    %4 = vector.load %arg9[%c0_2, %c0_3] : memref<32x16xf32, #tpu.memory_space<vmem>>, vector<32x16xf32>
    %c0_4 = arith.constant 0 : index
    %c0_5 = arith.constant 0 : index
    %5 = vector.load %arg4[%c0_4, %c0_5] : memref<32x16xbf16, #tpu.memory_space<vmem>>, vector<32x16xbf16>
    %cst = arith.constant dense<0.000000e+00> : vector<32x16xf32>
    %6 = tpu.matmul %3, %5, %cst {dimension_numbers = #tpu.dot_dimension_numbers<[1], [0], [0], [1], [0, 0, 1, 1], [], []>} : vector<32x32xbf16>, vector<32x16xbf16>, vector<32x16xf32> -> vector<32x16xf32>
    %7 = arith.addf %4, %6 : vector<32x16xf32>
    %c0_6 = arith.constant 0 : index
    %c0_7 = arith.constant 0 : index
    %8 = vector.load %arg9[%c0_6, %c0_7] : memref<32x16xf32, #tpu.memory_space<vmem>>, vector<32x16xf32>
    tpu.vector_store %arg9[%c0_6, %c0_7], %7 {strides = array<i32>} : memref<32x16xf32, #tpu.memory_space<vmem>>, vector<32x16xf32>,
    %c0_i32_8 = arith.constant 0 : i32
    %9 = arith.cmpi eq, %arg2, %c0_i32_8 : i32
    %10 = arith.extui %9 : i1 to i32
    %c0_i32_9 = arith.constant 0 : i32
    %11 = arith.cmpi ne, %10, %c0_i32_9 : i32
    scf.if %11 {
      %c0_10 = arith.constant 0 : index
      %c0_11 = arith.constant 0 : index
      %12 = vector.load %arg9[%c0_10, %c0_11] : memref<32x16xf32, #tpu.memory_space<vmem>>, vector<32x16xf32>
      %c0_12 = arith.constant 0 : index
      %c0_13 = arith.constant 0 : index
      %13 = vector.load %arg5[%c0_12, %c0_13] : memref<1x16xf32, #tpu.memory_space<vmem>>, vector<1x16xf32>
      %14 = vector.broadcast %13 : vector<1x16xf32> to vector<32x16xf32>
      %15 = arith.addf %12, %14 : vector<32x16xf32>
      %cst_14 = arith.constant dense<0.000000e+00> : vector<32xf32>
      %16 = vector.multi_reduction <add>, %15, %cst_14 [1] : vector<32x16xf32> to vector<32xf32>
      %17 = vector.shape_cast %16 : vector<32xf32> to vector<32x1xf32>
      %cst_15 = arith.constant 1.600000e+01 : f32
      %18 = vector.broadcast %cst_15 : f32 to vector<32x1xf32>
      %19 = arith.divf %17, %18 : vector<32x1xf32>
      %20 = vector.broadcast %19 : vector<32x1xf32> to vector<32x16xf32>
      %21 = arith.subf %15, %20 : vector<32x16xf32>
      %22 = arith.mulf %21, %21 : vector<32x16xf32>
      %cst_16 = arith.constant dense<0.000000e+00> : vector<32xf32>
      %23 = vector.multi_reduction <add>, %22, %cst_16 [1] : vector<32x16xf32> to vector<32xf32>
      %24 = vector.shape_cast %23 : vector<32xf32> to vector<32x1xf32>
      %cst_17 = arith.constant 1.600000e+01 : f32
      %25 = vector.broadcast %cst_17 : f32 to vector<32x1xf32>
      %26 = arith.divf %24, %25 : vector<32x1xf32>
      %cst_18 = arith.constant 9.99999997E-7 : f32
      %27 = vector.broadcast %cst_18 : f32 to vector<32x1xf32>
      %28 = arith.addf %26, %27 : vector<32x1xf32>
      %29 = math.rsqrt %28 : vector<32x1xf32>
      %30 = vector.broadcast %29 : vector<32x1xf32> to vector<32x16xf32>
      %31 = arith.mulf %21, %30 : vector<32x16xf32>
      %c0_19 = arith.constant 0 : index
      %c0_20 = arith.constant 0 : index
      %32 = vector.load %arg6[%c0_19, %c0_20] : memref<1x16xf32, #tpu.memory_space<vmem>>, vector<1x16xf32>
      %33 = vector.broadcast %32 : vector<1x16xf32> to vector<32x16xf32>
      %34 = arith.mulf %31, %33 : vector<32x16xf32>
      %c0_21 = arith.constant 0 : index
      %c0_22 = arith.constant 0 : index
      %35 = vector.load %arg7[%c0_21, %c0_22] : memref<1x16xf32, #tpu.memory_space<vmem>>, vector<1x16xf32>
      %36 = vector.broadcast %35 : vector<1x16xf32> to vector<32x16xf32>
      %37 = arith.addf %34, %36 : vector<32x16xf32>
      %38 = arith.truncf %37 : vector<32x16xf32> to vector<32x16xbf16>
      %c0_23 = arith.constant 0 : index
      %c0_24 = arith.constant 0 : index
      %39 = vector.load %arg8[%c0_23, %c0_24] : memref<32x16xbf16, #tpu.memory_space<vmem>>, vector<32x16xbf16>
      tpu.vector_store %arg8[%c0_23, %c0_24], %38 {strides = array<i32>} : memref<32x16xbf16, #tpu.memory_space<vmem>>, vector<32x16xbf16>,
    } else {
    }
    return
  }
  func.func @transform_0(%arg0: i32, %arg1: i32, %arg2: i32) -> (i32, i32) {
    %c0_i32 = arith.constant 0 : i32
    return %arg0, %arg2 : i32, i32
  }
  func.func @transform_1(%arg0: i32, %arg1: i32, %arg2: i32) -> (i32, i32) {
    %c0_i32 = arith.constant 0 : i32
    return %arg2, %arg1 : i32, i32
  }
  func.func @transform_2(%arg0: i32, %arg1: i32, %arg2: i32) -> (i32, i32) {
    %c0_i32 = arith.constant 0 : i32
    %c0_i32_0 = arith.constant 0 : i32
    return %c0_i32, %arg1 : i32, i32
  }
  func.func @transform_3(%arg0: i32, %arg1: i32, %arg2: i32) -> (i32, i32) {
    %c0_i32 = arith.constant 0 : i32
    %c0_i32_0 = arith.constant 0 : i32
    %c0_i32_1 = arith.constant 0 : i32
    return %c0_i32, %c0_i32_0 : i32, i32
  }
  func.func @transform_4(%arg0: i32, %arg1: i32, %arg2: i32) -> (i32, i32) {
    %c0_i32 = arith.constant 0 : i32
    %c0_i32_0 = arith.constant 0 : i32
    %c0_i32_1 = arith.constant 0 : i32
    return %c0_i32, %c0_i32_0 : i32, i32
  }
  func.func @transform_5(%arg0: i32, %arg1: i32, %arg2: i32) -> (i32, i32) {
    %c0_i32 = arith.constant 0 : i32
    return %arg0, %arg1 : i32, i32
  }
}

module attributes {stable_mosaic.version = 11 : i64} {
  func.func @_conv3x3_ln_kernel(%arg0: i32, %arg1: memref<1x44x16xbf16, #tpu.memory_space<vmem>>, %arg2: memref<3x3x16x16xbf16, #tpu.memory_space<vmem>>, %arg3: memref<1x16xf32, #tpu.memory_space<vmem>>, %arg4: memref<1x16xf32, #tpu.memory_space<vmem>>, %arg5: memref<1x24x16xf32, #tpu.memory_space<vmem>>, %arg6: memref<24x16xf32, #tpu.memory_space<vmem>>) attributes {dimension_semantics = [#tpu.dimension_semantics<parallel>], iteration_bounds = array<i64: 2>, scalar_prefetch = 0 : i64, scratch_operands = 1 : i64, tpu.core_type = #tpu.core_type<tc>, window_params = [{transform_indices = @transform_0, window_bounds = array<i64: 1, 44, 16>}, {pipeline_mode = #tpu.pipeline_mode<synchronous>, transform_indices = @transform_1, window_bounds = array<i64: 3, 3, 16, 16>}, {pipeline_mode = #tpu.pipeline_mode<synchronous>, transform_indices = @transform_2, window_bounds = array<i64: 1, 16>}, {pipeline_mode = #tpu.pipeline_mode<synchronous>, transform_indices = @transform_3, window_bounds = array<i64: 1, 16>}, {transform_indices = @transform_4, window_bounds = array<i64: 1, 24, 16>}]} {
    %cst = arith.constant 0.000000e+00 : f32
    %0 = vector.broadcast %cst : f32 to vector<24x16xf32>
    %c0 = arith.constant 0 : index
    %c0_0 = arith.constant 0 : index
    %1 = vector.load %arg6[%c0, %c0_0] : memref<24x16xf32, #tpu.memory_space<vmem>>, vector<24x16xf32>
    tpu.vector_store %arg6[%c0, %c0_0], %0 {strides = array<i32>} : memref<24x16xf32, #tpu.memory_space<vmem>>, vector<24x16xf32>,
    %c0_1 = arith.constant 0 : index
    %c0_2 = arith.constant 0 : index
    %c0_3 = arith.constant 0 : index
    %2 = vector.load %arg1[%c0_1, %c0_2, %c0_3] : memref<1x44x16xbf16, #tpu.memory_space<vmem>>, vector<1x24x16xbf16>
    %3 = vector.shape_cast %2 : vector<1x24x16xbf16> to vector<24x16xbf16>
    %c0_4 = arith.constant 0 : index
    %c0_5 = arith.constant 0 : index
    %4 = vector.load %arg6[%c0_4, %c0_5] : memref<24x16xf32, #tpu.memory_space<vmem>>, vector<24x16xf32>
    %c0_6 = arith.constant 0 : index
    %c0_7 = arith.constant 0 : index
    %c0_8 = arith.constant 0 : index
    %c0_9 = arith.constant 0 : index
    %5 = vector.load %arg2[%c0_6, %c0_7, %c0_8, %c0_9] : memref<3x3x16x16xbf16, #tpu.memory_space<vmem>>, vector<1x1x16x16xbf16>
    %6 = vector.shape_cast %5 : vector<1x1x16x16xbf16> to vector<16x16xbf16>
    %cst_10 = arith.constant dense<0.000000e+00> : vector<24x16xf32>
    %7 = tpu.matmul %3, %6, %cst_10 {dimension_numbers = #tpu.dot_dimension_numbers<[1], [0], [0], [1], [0, 0, 1, 1], [], []>} : vector<24x16xbf16>, vector<16x16xbf16>, vector<24x16xf32> -> vector<24x16xf32>
    %8 = arith.addf %4, %7 : vector<24x16xf32>
    %c0_11 = arith.constant 0 : index
    %c0_12 = arith.constant 0 : index
    %9 = vector.load %arg6[%c0_11, %c0_12] : memref<24x16xf32, #tpu.memory_space<vmem>>, vector<24x16xf32>
    tpu.vector_store %arg6[%c0_11, %c0_12], %8 {strides = array<i32>} : memref<24x16xf32, #tpu.memory_space<vmem>>, vector<24x16xf32>,
    %c0_13 = arith.constant 0 : index
    %c1 = arith.constant 1 : index
    %c0_14 = arith.constant 0 : index
    %10 = vector.load %arg1[%c0_13, %c1, %c0_14] : memref<1x44x16xbf16, #tpu.memory_space<vmem>>, vector<1x24x16xbf16>
    %11 = vector.shape_cast %10 : vector<1x24x16xbf16> to vector<24x16xbf16>
    %c0_15 = arith.constant 0 : index
    %c0_16 = arith.constant 0 : index
    %12 = vector.load %arg6[%c0_15, %c0_16] : memref<24x16xf32, #tpu.memory_space<vmem>>, vector<24x16xf32>
    %c0_17 = arith.constant 0 : index
    %c1_18 = arith.constant 1 : index
    %c0_19 = arith.constant 0 : index
    %c0_20 = arith.constant 0 : index
    %13 = vector.load %arg2[%c0_17, %c1_18, %c0_19, %c0_20] : memref<3x3x16x16xbf16, #tpu.memory_space<vmem>>, vector<1x1x16x16xbf16>
    %14 = vector.shape_cast %13 : vector<1x1x16x16xbf16> to vector<16x16xbf16>
    %cst_21 = arith.constant dense<0.000000e+00> : vector<24x16xf32>
    %15 = tpu.matmul %11, %14, %cst_21 {dimension_numbers = #tpu.dot_dimension_numbers<[1], [0], [0], [1], [0, 0, 1, 1], [], []>} : vector<24x16xbf16>, vector<16x16xbf16>, vector<24x16xf32> -> vector<24x16xf32>
    %16 = arith.addf %12, %15 : vector<24x16xf32>
    %c0_22 = arith.constant 0 : index
    %c0_23 = arith.constant 0 : index
    %17 = vector.load %arg6[%c0_22, %c0_23] : memref<24x16xf32, #tpu.memory_space<vmem>>, vector<24x16xf32>
    tpu.vector_store %arg6[%c0_22, %c0_23], %16 {strides = array<i32>} : memref<24x16xf32, #tpu.memory_space<vmem>>, vector<24x16xf32>,
    %c0_24 = arith.constant 0 : index
    %c2 = arith.constant 2 : index
    %c0_25 = arith.constant 0 : index
    %18 = vector.load %arg1[%c0_24, %c2, %c0_25] : memref<1x44x16xbf16, #tpu.memory_space<vmem>>, vector<1x24x16xbf16>
    %19 = vector.shape_cast %18 : vector<1x24x16xbf16> to vector<24x16xbf16>
    %c0_26 = arith.constant 0 : index
    %c0_27 = arith.constant 0 : index
    %20 = vector.load %arg6[%c0_26, %c0_27] : memref<24x16xf32, #tpu.memory_space<vmem>>, vector<24x16xf32>
    %c0_28 = arith.constant 0 : index
    %c2_29 = arith.constant 2 : index
    %c0_30 = arith.constant 0 : index
    %c0_31 = arith.constant 0 : index
    %21 = vector.load %arg2[%c0_28, %c2_29, %c0_30, %c0_31] : memref<3x3x16x16xbf16, #tpu.memory_space<vmem>>, vector<1x1x16x16xbf16>
    %22 = vector.shape_cast %21 : vector<1x1x16x16xbf16> to vector<16x16xbf16>
    %cst_32 = arith.constant dense<0.000000e+00> : vector<24x16xf32>
    %23 = tpu.matmul %19, %22, %cst_32 {dimension_numbers = #tpu.dot_dimension_numbers<[1], [0], [0], [1], [0, 0, 1, 1], [], []>} : vector<24x16xbf16>, vector<16x16xbf16>, vector<24x16xf32> -> vector<24x16xf32>
    %24 = arith.addf %20, %23 : vector<24x16xf32>
    %c0_33 = arith.constant 0 : index
    %c0_34 = arith.constant 0 : index
    %25 = vector.load %arg6[%c0_33, %c0_34] : memref<24x16xf32, #tpu.memory_space<vmem>>, vector<24x16xf32>
    tpu.vector_store %arg6[%c0_33, %c0_34], %24 {strides = array<i32>} : memref<24x16xf32, #tpu.memory_space<vmem>>, vector<24x16xf32>,
    %c0_35 = arith.constant 0 : index
    %c6 = arith.constant 6 : index
    %c0_36 = arith.constant 0 : index
    %26 = vector.load %arg1[%c0_35, %c6, %c0_36] : memref<1x44x16xbf16, #tpu.memory_space<vmem>>, vector<1x24x16xbf16>
    %27 = vector.shape_cast %26 : vector<1x24x16xbf16> to vector<24x16xbf16>
    %c0_37 = arith.constant 0 : index
    %c0_38 = arith.constant 0 : index
    %28 = vector.load %arg6[%c0_37, %c0_38] : memref<24x16xf32, #tpu.memory_space<vmem>>, vector<24x16xf32>
    %c1_39 = arith.constant 1 : index
    %c0_40 = arith.constant 0 : index
    %c0_41 = arith.constant 0 : index
    %c0_42 = arith.constant 0 : index
    %29 = vector.load %arg2[%c1_39, %c0_40, %c0_41, %c0_42] : memref<3x3x16x16xbf16, #tpu.memory_space<vmem>>, vector<1x1x16x16xbf16>
    %30 = vector.shape_cast %29 : vector<1x1x16x16xbf16> to vector<16x16xbf16>
    %cst_43 = arith.constant dense<0.000000e+00> : vector<24x16xf32>
    %31 = tpu.matmul %27, %30, %cst_43 {dimension_numbers = #tpu.dot_dimension_numbers<[1], [0], [0], [1], [0, 0, 1, 1], [], []>} : vector<24x16xbf16>, vector<16x16xbf16>, vector<24x16xf32> -> vector<24x16xf32>
    %32 = arith.addf %28, %31 : vector<24x16xf32>
    %c0_44 = arith.constant 0 : index
    %c0_45 = arith.constant 0 : index
    %33 = vector.load %arg6[%c0_44, %c0_45] : memref<24x16xf32, #tpu.memory_space<vmem>>, vector<24x16xf32>
    tpu.vector_store %arg6[%c0_44, %c0_45], %32 {strides = array<i32>} : memref<24x16xf32, #tpu.memory_space<vmem>>, vector<24x16xf32>,
    %c0_46 = arith.constant 0 : index
    %c7 = arith.constant 7 : index
    %c0_47 = arith.constant 0 : index
    %34 = vector.load %arg1[%c0_46, %c7, %c0_47] : memref<1x44x16xbf16, #tpu.memory_space<vmem>>, vector<1x24x16xbf16>
    %35 = vector.shape_cast %34 : vector<1x24x16xbf16> to vector<24x16xbf16>
    %c0_48 = arith.constant 0 : index
    %c0_49 = arith.constant 0 : index
    %36 = vector.load %arg6[%c0_48, %c0_49] : memref<24x16xf32, #tpu.memory_space<vmem>>, vector<24x16xf32>
    %c1_50 = arith.constant 1 : index
    %c1_51 = arith.constant 1 : index
    %c0_52 = arith.constant 0 : index
    %c0_53 = arith.constant 0 : index
    %37 = vector.load %arg2[%c1_50, %c1_51, %c0_52, %c0_53] : memref<3x3x16x16xbf16, #tpu.memory_space<vmem>>, vector<1x1x16x16xbf16>
    %38 = vector.shape_cast %37 : vector<1x1x16x16xbf16> to vector<16x16xbf16>
    %cst_54 = arith.constant dense<0.000000e+00> : vector<24x16xf32>
    %39 = tpu.matmul %35, %38, %cst_54 {dimension_numbers = #tpu.dot_dimension_numbers<[1], [0], [0], [1], [0, 0, 1, 1], [], []>} : vector<24x16xbf16>, vector<16x16xbf16>, vector<24x16xf32> -> vector<24x16xf32>
    %40 = arith.addf %36, %39 : vector<24x16xf32>
    %c0_55 = arith.constant 0 : index
    %c0_56 = arith.constant 0 : index
    %41 = vector.load %arg6[%c0_55, %c0_56] : memref<24x16xf32, #tpu.memory_space<vmem>>, vector<24x16xf32>
    tpu.vector_store %arg6[%c0_55, %c0_56], %40 {strides = array<i32>} : memref<24x16xf32, #tpu.memory_space<vmem>>, vector<24x16xf32>,
    %c0_57 = arith.constant 0 : index
    %c8 = arith.constant 8 : index
    %c0_58 = arith.constant 0 : index
    %42 = vector.load %arg1[%c0_57, %c8, %c0_58] : memref<1x44x16xbf16, #tpu.memory_space<vmem>>, vector<1x24x16xbf16>
    %43 = vector.shape_cast %42 : vector<1x24x16xbf16> to vector<24x16xbf16>
    %c0_59 = arith.constant 0 : index
    %c0_60 = arith.constant 0 : index
    %44 = vector.load %arg6[%c0_59, %c0_60] : memref<24x16xf32, #tpu.memory_space<vmem>>, vector<24x16xf32>
    %c1_61 = arith.constant 1 : index
    %c2_62 = arith.constant 2 : index
    %c0_63 = arith.constant 0 : index
    %c0_64 = arith.constant 0 : index
    %45 = vector.load %arg2[%c1_61, %c2_62, %c0_63, %c0_64] : memref<3x3x16x16xbf16, #tpu.memory_space<vmem>>, vector<1x1x16x16xbf16>
    %46 = vector.shape_cast %45 : vector<1x1x16x16xbf16> to vector<16x16xbf16>
    %cst_65 = arith.constant dense<0.000000e+00> : vector<24x16xf32>
    %47 = tpu.matmul %43, %46, %cst_65 {dimension_numbers = #tpu.dot_dimension_numbers<[1], [0], [0], [1], [0, 0, 1, 1], [], []>} : vector<24x16xbf16>, vector<16x16xbf16>, vector<24x16xf32> -> vector<24x16xf32>
    %48 = arith.addf %44, %47 : vector<24x16xf32>
    %c0_66 = arith.constant 0 : index
    %c0_67 = arith.constant 0 : index
    %49 = vector.load %arg6[%c0_66, %c0_67] : memref<24x16xf32, #tpu.memory_space<vmem>>, vector<24x16xf32>
    tpu.vector_store %arg6[%c0_66, %c0_67], %48 {strides = array<i32>} : memref<24x16xf32, #tpu.memory_space<vmem>>, vector<24x16xf32>,
    %c0_68 = arith.constant 0 : index
    %c12 = arith.constant 12 : index
    %c0_69 = arith.constant 0 : index
    %50 = vector.load %arg1[%c0_68, %c12, %c0_69] : memref<1x44x16xbf16, #tpu.memory_space<vmem>>, vector<1x24x16xbf16>
    %51 = vector.shape_cast %50 : vector<1x24x16xbf16> to vector<24x16xbf16>
    %c0_70 = arith.constant 0 : index
    %c0_71 = arith.constant 0 : index
    %52 = vector.load %arg6[%c0_70, %c0_71] : memref<24x16xf32, #tpu.memory_space<vmem>>, vector<24x16xf32>
    %c2_72 = arith.constant 2 : index
    %c0_73 = arith.constant 0 : index
    %c0_74 = arith.constant 0 : index
    %c0_75 = arith.constant 0 : index
    %53 = vector.load %arg2[%c2_72, %c0_73, %c0_74, %c0_75] : memref<3x3x16x16xbf16, #tpu.memory_space<vmem>>, vector<1x1x16x16xbf16>
    %54 = vector.shape_cast %53 : vector<1x1x16x16xbf16> to vector<16x16xbf16>
    %cst_76 = arith.constant dense<0.000000e+00> : vector<24x16xf32>
    %55 = tpu.matmul %51, %54, %cst_76 {dimension_numbers = #tpu.dot_dimension_numbers<[1], [0], [0], [1], [0, 0, 1, 1], [], []>} : vector<24x16xbf16>, vector<16x16xbf16>, vector<24x16xf32> -> vector<24x16xf32>
    %56 = arith.addf %52, %55 : vector<24x16xf32>
    %c0_77 = arith.constant 0 : index
    %c0_78 = arith.constant 0 : index
    %57 = vector.load %arg6[%c0_77, %c0_78] : memref<24x16xf32, #tpu.memory_space<vmem>>, vector<24x16xf32>
    tpu.vector_store %arg6[%c0_77, %c0_78], %56 {strides = array<i32>} : memref<24x16xf32, #tpu.memory_space<vmem>>, vector<24x16xf32>,
    %c0_79 = arith.constant 0 : index
    %c13 = arith.constant 13 : index
    %c0_80 = arith.constant 0 : index
    %58 = vector.load %arg1[%c0_79, %c13, %c0_80] : memref<1x44x16xbf16, #tpu.memory_space<vmem>>, vector<1x24x16xbf16>
    %59 = vector.shape_cast %58 : vector<1x24x16xbf16> to vector<24x16xbf16>
    %c0_81 = arith.constant 0 : index
    %c0_82 = arith.constant 0 : index
    %60 = vector.load %arg6[%c0_81, %c0_82] : memref<24x16xf32, #tpu.memory_space<vmem>>, vector<24x16xf32>
    %c2_83 = arith.constant 2 : index
    %c1_84 = arith.constant 1 : index
    %c0_85 = arith.constant 0 : index
    %c0_86 = arith.constant 0 : index
    %61 = vector.load %arg2[%c2_83, %c1_84, %c0_85, %c0_86] : memref<3x3x16x16xbf16, #tpu.memory_space<vmem>>, vector<1x1x16x16xbf16>
    %62 = vector.shape_cast %61 : vector<1x1x16x16xbf16> to vector<16x16xbf16>
    %cst_87 = arith.constant dense<0.000000e+00> : vector<24x16xf32>
    %63 = tpu.matmul %59, %62, %cst_87 {dimension_numbers = #tpu.dot_dimension_numbers<[1], [0], [0], [1], [0, 0, 1, 1], [], []>} : vector<24x16xbf16>, vector<16x16xbf16>, vector<24x16xf32> -> vector<24x16xf32>
    %64 = arith.addf %60, %63 : vector<24x16xf32>
    %c0_88 = arith.constant 0 : index
    %c0_89 = arith.constant 0 : index
    %65 = vector.load %arg6[%c0_88, %c0_89] : memref<24x16xf32, #tpu.memory_space<vmem>>, vector<24x16xf32>
    tpu.vector_store %arg6[%c0_88, %c0_89], %64 {strides = array<i32>} : memref<24x16xf32, #tpu.memory_space<vmem>>, vector<24x16xf32>,
    %c0_90 = arith.constant 0 : index
    %c14 = arith.constant 14 : index
    %c0_91 = arith.constant 0 : index
    %66 = vector.load %arg1[%c0_90, %c14, %c0_91] : memref<1x44x16xbf16, #tpu.memory_space<vmem>>, vector<1x24x16xbf16>
    %67 = vector.shape_cast %66 : vector<1x24x16xbf16> to vector<24x16xbf16>
    %c0_92 = arith.constant 0 : index
    %c0_93 = arith.constant 0 : index
    %68 = vector.load %arg6[%c0_92, %c0_93] : memref<24x16xf32, #tpu.memory_space<vmem>>, vector<24x16xf32>
    %c2_94 = arith.constant 2 : index
    %c2_95 = arith.constant 2 : index
    %c0_96 = arith.constant 0 : index
    %c0_97 = arith.constant 0 : index
    %69 = vector.load %arg2[%c2_94, %c2_95, %c0_96, %c0_97] : memref<3x3x16x16xbf16, #tpu.memory_space<vmem>>, vector<1x1x16x16xbf16>
    %70 = vector.shape_cast %69 : vector<1x1x16x16xbf16> to vector<16x16xbf16>
    %cst_98 = arith.constant dense<0.000000e+00> : vector<24x16xf32>
    %71 = tpu.matmul %67, %70, %cst_98 {dimension_numbers = #tpu.dot_dimension_numbers<[1], [0], [0], [1], [0, 0, 1, 1], [], []>} : vector<24x16xbf16>, vector<16x16xbf16>, vector<24x16xf32> -> vector<24x16xf32>
    %72 = arith.addf %68, %71 : vector<24x16xf32>
    %c0_99 = arith.constant 0 : index
    %c0_100 = arith.constant 0 : index
    %73 = vector.load %arg6[%c0_99, %c0_100] : memref<24x16xf32, #tpu.memory_space<vmem>>, vector<24x16xf32>
    tpu.vector_store %arg6[%c0_99, %c0_100], %72 {strides = array<i32>} : memref<24x16xf32, #tpu.memory_space<vmem>>, vector<24x16xf32>,
    %c0_101 = arith.constant 0 : index
    %c0_102 = arith.constant 0 : index
    %74 = vector.load %arg6[%c0_101, %c0_102] : memref<24x16xf32, #tpu.memory_space<vmem>>, vector<24x16xf32>
    %cst_103 = arith.constant dense<0.000000e+00> : vector<24xf32>
    %75 = vector.multi_reduction <add>, %74, %cst_103 [1] : vector<24x16xf32> to vector<24xf32>
    %76 = vector.shape_cast %75 : vector<24xf32> to vector<24x1xf32>
    %cst_104 = arith.constant 1.600000e+01 : f32
    %77 = vector.broadcast %cst_104 : f32 to vector<24x1xf32>
    %78 = arith.divf %76, %77 : vector<24x1xf32>
    %79 = vector.broadcast %78 : vector<24x1xf32> to vector<24x16xf32>
    %80 = arith.subf %74, %79 : vector<24x16xf32>
    %81 = arith.mulf %80, %80 : vector<24x16xf32>
    %cst_105 = arith.constant dense<0.000000e+00> : vector<24xf32>
    %82 = vector.multi_reduction <add>, %81, %cst_105 [1] : vector<24x16xf32> to vector<24xf32>
    %83 = vector.shape_cast %82 : vector<24xf32> to vector<24x1xf32>
    %cst_106 = arith.constant 1.600000e+01 : f32
    %84 = vector.broadcast %cst_106 : f32 to vector<24x1xf32>
    %85 = arith.divf %83, %84 : vector<24x1xf32>
    %cst_107 = arith.constant 9.99999997E-7 : f32
    %86 = vector.broadcast %cst_107 : f32 to vector<24x1xf32>
    %87 = arith.addf %85, %86 : vector<24x1xf32>
    %88 = math.rsqrt %87 : vector<24x1xf32>
    %89 = vector.broadcast %88 : vector<24x1xf32> to vector<24x16xf32>
    %90 = arith.mulf %80, %89 : vector<24x16xf32>
    %c0_108 = arith.constant 0 : index
    %c0_109 = arith.constant 0 : index
    %91 = vector.load %arg3[%c0_108, %c0_109] : memref<1x16xf32, #tpu.memory_space<vmem>>, vector<1x16xf32>
    %92 = vector.broadcast %91 : vector<1x16xf32> to vector<24x16xf32>
    %93 = arith.mulf %90, %92 : vector<24x16xf32>
    %c0_110 = arith.constant 0 : index
    %c0_111 = arith.constant 0 : index
    %94 = vector.load %arg4[%c0_110, %c0_111] : memref<1x16xf32, #tpu.memory_space<vmem>>, vector<1x16xf32>
    %95 = vector.broadcast %94 : vector<1x16xf32> to vector<24x16xf32>
    %96 = arith.addf %93, %95 : vector<24x16xf32>
    %c0_112 = arith.constant 0 : index
    %c0_113 = arith.constant 0 : index
    %c0_114 = arith.constant 0 : index
    %97 = vector.load %arg5[%c0_112, %c0_113, %c0_114] : memref<1x24x16xf32, #tpu.memory_space<vmem>>, vector<1x24x16xf32>
    %98 = vector.shape_cast %97 : vector<1x24x16xf32> to vector<24x16xf32>
    %99 = vector.shape_cast %96 : vector<24x16xf32> to vector<1x24x16xf32>
    tpu.vector_store %arg5[%c0_112, %c0_113, %c0_114], %99 {strides = array<i32>} : memref<1x24x16xf32, #tpu.memory_space<vmem>>, vector<1x24x16xf32>,
    return
  }
  func.func @transform_0(%arg0: i32) -> (i32, i32, i32) {
    %c0_i32 = arith.constant 0 : i32
    %c0_i32_0 = arith.constant 0 : i32
    %c0_i32_1 = arith.constant 0 : i32
    return %arg0, %c0_i32, %c0_i32_0 : i32, i32, i32
  }
  func.func @transform_1(%arg0: i32) -> (i32, i32, i32, i32) {
    %c0_i32 = arith.constant 0 : i32
    %c0_i32_0 = arith.constant 0 : i32
    %c0_i32_1 = arith.constant 0 : i32
    %c0_i32_2 = arith.constant 0 : i32
    %c0_i32_3 = arith.constant 0 : i32
    return %c0_i32, %c0_i32_0, %c0_i32_1, %c0_i32_2 : i32, i32, i32, i32
  }
  func.func @transform_2(%arg0: i32) -> (i32, i32) {
    %c0_i32 = arith.constant 0 : i32
    %c0_i32_0 = arith.constant 0 : i32
    %c0_i32_1 = arith.constant 0 : i32
    return %c0_i32, %c0_i32_0 : i32, i32
  }
  func.func @transform_3(%arg0: i32) -> (i32, i32) {
    %c0_i32 = arith.constant 0 : i32
    %c0_i32_0 = arith.constant 0 : i32
    %c0_i32_1 = arith.constant 0 : i32
    return %c0_i32, %c0_i32_0 : i32, i32
  }
  func.func @transform_4(%arg0: i32) -> (i32, i32, i32) {
    %c0_i32 = arith.constant 0 : i32
    %c0_i32_0 = arith.constant 0 : i32
    %c0_i32_1 = arith.constant 0 : i32
    return %arg0, %c0_i32, %c0_i32_0 : i32, i32, i32
  }
}

</mosaic_0001>

<llo_original>
// kernel: vit_forward.13
$region0: #{vit_forward.13}
  #allocation0 [shape = 'u32[]', space=smem, size = 0x4, offset = 0x4, fixed_abs, tag = 'smem constant byte address 0x4 - core index']
  #allocation1 [shape = 'u32[144,128]{1,0:T(1,128)}', space=vmem, size = 0x12000, scoped, tag = 'internal scratch']
  #allocation2 [shape = 'f32[16,32]{1,0:T(8,128)}', space=vmem, size = 0x2000, scoped, tag = 'scratch operand']
  %s0 = inlined_call_operand.vmem [shape: bf16[32,64], index: 0, kind: input, shape index: {}]
  %s1 = inlined_call_operand.vmem [shape: bf16[64,32], index: 1, kind: input, shape index: {}]
  %s2 = inlined_call_operand.vmem [shape: f32[1,32], index: 2, kind: input, shape index: {}]
  %s3 = inlined_call_operand.vmem [shape: f32[16,32], index: 3, kind: input, shape index: {}]
  %s4 = inlined_call_operand.vmem [shape: bf16[32,32], index: 4, kind: output, shape index: {}]
  %s5 = sld [smem:[#allocation0]]
  $region57: #{vit_forward.13} parent=0
    _
  %s7 = ssub.s32 1, %s5
  %s8 = scalar_select 0, %s7, %s5
  loop: start=0, step=1, limit=4
  $region2: #{vit_forward.13} parent=0 // loop_pre_header
    _
  $region3: #{vit_forward.13} parent=0 // loop_header
    %s10 = sphi 0, %s14
    %p11 = scmp.ge.s32.totalorder %s10, 4
    %s17 = sphi 0, %s36
    %s18 = sphi 0, %s32
    %s19 = sphi 0, %s28
    %s20 = sphi 0, %s17
    %s21 = sphi 0, %s18
    %s22 = sphi 0, %s19
    %s23 = sphi 0, %s20
    %s24 = sphi 0, %s21
    %s25 = sphi 0, %s22
    %s41 = sphi 0, %s43
    %s44 = sphi 0, %s41
    %s45 = sphi 0, %s44
    %s61 = sphi 0, %s45
    %s69 = sphi 0, %s71
    %s72 = sphi 0, %s69
    %s73 = sphi 0, %s72
    %s89 = sphi 0, %s73
    %s95 = sphi 0, %s97
    %s98 = sphi 0, %s95
    %s99 = sphi 0, %s98
    %s115 = sphi 0, %s99
    %s121 = sphi 0, %s123
    %s124 = sphi 0, %s121
    %s125 = sphi 0, %s124
    %s141 = sphi 0, %s125
    %s149 = sphi 0, %s151
    %s152 = sphi 0, %s149
    %s153 = sphi 0, %s152
    %s169 = sphi 0, %s153
  $region4: #{vit_forward.13} parent=0 // loop_header_branch
    %13 = sbr.rel (%p11) target = $region8
  $region5: #{vit_forward.13} parent=0 // loop_body
    %s15 = ssub.s32 %s10, 1
    %s16 = ssub.s32 %s10, 2
    %s26 = sadd.s32 1, %s19
    %p27 = scmp.ge.s32.totalorder %s26, 1
    %s28 = scalar_select %p27, 0, %s26
    %s29 = sadd.s32 1, %s18
    %s30 = scalar_select %p27, %s29, %s18
    %p31 = scmp.ge.s32.totalorder %s30, 1
    %s32 = scalar_select %p31, 0, %s30
    %s33 = sadd.s32 1, %s17
    %s34 = scalar_select %p31, %s33, %s17
    %p35 = scmp.ge.s32.totalorder %s34, 2
    %s36 = scalar_select %p35, 0, %s34
    %s37 = ssub.s32 %s17, %s36
    %s38 = ssub.s32 %s19, %s28
    %s39 = sor.u32 %s37, %s38
    %p40 = scmp.eq.s32.totalorder %s39, 0
    %s42 = sadd.s32 %s41, 1
    %s43 = scalar_select %p40, %s41, %s42
    %p46 = pneg %p40
    %p47 = scmp.eq.s32.totalorder %s10, 1
    %p48 = por %p46, %p47
    %p49 = scmp.ne.s32.totalorder %s41, %s44
    %p50 = scmp.eq.s32.totalorder %s10, 0
    %p51 = por %p49, %p50
    %p52 = scmp.ne.s32.totalorder %s41, %s44
    %p53 = scmp.eq.s32.totalorder %s15, 1
    %p54 = por %p52, %p53
    %p55 = scmp.ne.s32.totalorder %s44, %s45
    %p56 = scmp.eq.s32.totalorder %s15, 0
    %p57 = por %p55, %p56
    %p58 = scmp.ne.s32.totalorder %s44, %s45
    %p59 = scmp.eq.s32.totalorder %s16, 1
    %p60 = por %p58, %p59
    %p62 = scmp.ne.s32.totalorder %s45, %s61
    %p63 = scmp.eq.s32.totalorder %s16, 0
    %p64 = por %p62, %p63
    %s65 = ssub.s32 %s19, %s28
    %s66 = ssub.s32 %s18, %s32
    %s67 = sor.u32 %s65, %s66
    %p68 = scmp.eq.s32.totalorder %s67, 0
    %s70 = sadd.s32 %s69, 1
    %s71 = scalar_select %p68, %s69, %s70
    %p74 = pneg %p68
    %p75 = scmp.eq.s32.totalorder %s10, 1
    %p76 = por %p74, %p75
    %p77 = scmp.ne.s32.totalorder %s69, %s72
    %p78 = scmp.eq.s32.totalorder %s10, 0
    %p79 = por %p77, %p78
    %p80 = scmp.ne.s32.totalorder %s69, %s72
    %p81 = scmp.eq.s32.totalorder %s15, 1
    %p82 = por %p80, %p81
    %p83 = scmp.ne.s32.totalorder %s72, %s73
    %p84 = scmp.eq.s32.totalorder %s15, 0
    %p85 = por %p83, %p84
    %p86 = scmp.ne.s32.totalorder %s72, %s73
    %p87 = scmp.eq.s32.totalorder %s16, 1
    %p88 = por %p86, %p87
    %p90 = scmp.ne.s32.totalorder %s73, %s89
    %p91 = scmp.eq.s32.totalorder %s16, 0
    %p92 = por %p90, %p91
    %s93 = ssub.s32 %s18, %s32
    %p94 = scmp.eq.s32.totalorder %s93, 0
    %s96 = sadd.s32 %s95, 1
    %s97 = scalar_select %p94, %s95, %s96
    %p100 = pneg %p94
    %p101 = scmp.eq.s32.totalorder %s10, 1
    %p102 = por %p100, %p101
    %p103 = scmp.ne.s32.totalorder %s95, %s98
    %p104 = scmp.eq.s32.totalorder %s10, 0
    %p105 = por %p103, %p104
    %p106 = scmp.ne.s32.totalorder %s95, %s98
    %p107 = scmp.eq.s32.totalorder %s15, 1
    %p108 = por %p106, %p107
    %p109 = scmp.ne.s32.totalorder %s98, %s99
    %p110 = scmp.eq.s32.totalorder %s15, 0
    %p111 = por %p109, %p110
    %p112 = scmp.ne.s32.totalorder %s98, %s99
    %p113 = scmp.eq.s32.totalorder %s16, 1
    %p114 = por %p112, %p113
    %p116 = scmp.ne.s32.totalorder %s99, %s115
    %p117 = scmp.eq.s32.totalorder %s16, 0
    %p118 = por %p116, %p117
    %s119 = ssub.s32 %s18, %s32
    %p120 = scmp.eq.s32.totalorder %s119, 0
    %s122 = sadd.s32 %s121, 1
    %s123 = scalar_select %p120, %s121, %s122
    %p126 = pneg %p120
    %p127 = scmp.eq.s32.totalorder %s10, 1
    %p128 = por %p126, %p127
    %p129 = scmp.ne.s32.totalorder %s121, %s124
    %p130 = scmp.eq.s32.totalorder %s10, 0
    %p131 = por %p129, %p130
    %p132 = scmp.ne.s32.totalorder %s121, %s124
    %p133 = scmp.eq.s32.totalorder %s15, 1
    %p134 = por %p132, %p133
    %p135 = scmp.ne.s32.totalorder %s124, %s125
    %p136 = scmp.eq.s32.totalorder %s15, 0
    %p137 = por %p135, %p136
    %p138 = scmp.ne.s32.totalorder %s124, %s125
    %p139 = scmp.eq.s32.totalorder %s16, 1
    %p140 = por %p138, %p139
    %p142 = scmp.ne.s32.totalorder %s125, %s141
    %p143 = scmp.eq.s32.totalorder %s16, 0
    %p144 = por %p142, %p143
    %s145 = ssub.s32 %s17, %s36
    %s146 = ssub.s32 %s18, %s32
    %s147 = sor.u32 %s145, %s146
    %p148 = scmp.eq.s32.totalorder %s147, 0
    %s150 = sadd.s32 %s149, 1
    %s151 = scalar_select %p148, %s149, %s150
    %p154 = pneg %p148
    %p155 = scmp.eq.s32.totalorder %s10, 1
    %p156 = por %p154, %p155
    %p157 = scmp.ne.s32.totalorder %s149, %s152
    %p158 = scmp.eq.s32.totalorder %s10, 0
    %p159 = por %p157, %p158
    %p160 = scmp.ne.s32.totalorder %s149, %s152
    %p161 = scmp.eq.s32.totalorder %s15, 1
    %p162 = por %p160, %p161
    %p163 = scmp.ne.s32.totalorder %s152, %s153
    %p164 = scmp.eq.s32.totalorder %s15, 0
    %p165 = por %p163, %p164
    %p166 = scmp.ne.s32.totalorder %s152, %s153
    %p167 = scmp.eq.s32.totalorder %s16, 1
    %p168 = por %p166, %p167
    %p170 = scmp.ne.s32.totalorder %s153, %s169
    %p171 = scmp.eq.s32.totalorder %s16, 0
    %p172 = por %p170, %p171
    %p173 = scmp.le.s32.totalorder 1, %s10
    %p174 = scmp.lt.s32.totalorder %s10, 3
    %p175 = pnand %p173, %p174
    %p176 = pneg %p175
    // Predicated region
    $region9: #{vit_forward.13} parent=5 // pred_check
      _
    $region10: #{vit_forward.13} parent=5 // pred_check_branch
      %178 = sbr.rel (%p175) target = $region12
    $region11: #{vit_forward.13} parent=5 // pred_region
      %s179 = ssub.s32 %s10, 1
      // Predicated region
      $region13: #{vit_forward.13} parent=11 // pred_check
        %p180 = pneg %p85
      $region14: #{vit_forward.13} parent=11 // pred_check_branch
        %182 = sbr.rel (%p180) target = $region16
      $region15: #{vit_forward.13} parent=11 // pred_region
        %s183 = smul.u32 8, %s22
        %p184 = scmp.lt.s32.totalorder %s183, 7
        %s185 = scalar_select %p184, %s183, 7
        %p186 = scmp.lt.s32.totalorder %s21, 0
        %s187 = scalar_select %p186, %s21, 0
        %s188 = sadd.s32 %s187, %s185
        %s189 = smul.addr %s188, 4
        %s190 = scalar_lea.vmem %s1, %s189
        %s191 = smul.u32 8, %s22
      $region16: #{vit_forward.13} parent=11 // pred_fallthru
        _
      // Predicated region
      $region17: #{vit_forward.13} parent=11 // pred_check
        %p192 = pneg %p111
      $region18: #{vit_forward.13} parent=11 // pred_check_branch
        %194 = sbr.rel (%p192) target = $region20
      $region19: #{vit_forward.13} parent=11 // pred_region
        %p195 = scmp.lt.s32.totalorder %s21, 0
        %s196 = scalar_select %p195, %s21, 0
        %s197 = scalar_lea.vmem %s2, %s196
      $region20: #{vit_forward.13} parent=11 // pred_fallthru
        _
      // Predicated region
      $region21: #{vit_forward.13} parent=11 // pred_check
        %p198 = pneg %p137
      $region22: #{vit_forward.13} parent=11 // pred_check_branch
        %200 = sbr.rel (%p198) target = $region24
      $region23: #{vit_forward.13} parent=11 // pred_region
        %p201 = scmp.lt.s32.totalorder %s21, 0
        %s202 = scalar_select %p201, %s21, 0
        %s203 = smul.addr %s202, 8
        %s204 = scalar_lea.vmem %s3, %s203
      $region24: #{vit_forward.13} parent=11 // pred_fallthru
        _
    $region12: #{vit_forward.13} parent=5 // pred_fallthru
      _
    %p205 = scmp.lt.s32.totalorder %s10, 2
    // Predicated region
    $region25: #{vit_forward.13} parent=5 // pred_check
      %p206 = pneg %p205
    $region26: #{vit_forward.13} parent=5 // pred_check_branch
      %208 = sbr.rel (%p206) target = $region28
    $region27: #{vit_forward.13} parent=5 // pred_region
      // Predicated region
      $region29: #{vit_forward.13} parent=27 // pred_check
        %p209 = pneg %p51
      $region30: #{vit_forward.13} parent=27 // pred_check_branch
        %211 = sbr.rel (%p209) target = $region32
      $region31: #{vit_forward.13} parent=27 // pred_region
        %s212 = smul.u32 2, %s17
        %p213 = scmp.lt.s32.totalorder %s212, 3
        %s214 = scalar_select %p213, %s212, 3
        %p215 = scmp.lt.s32.totalorder %s19, 0
        %s216 = scalar_select %p215, %s19, 0
        %s217 = sadd.s32 %s216, %s214
        %s218 = smul.addr %s217, 4
        %s219 = scalar_lea.vmem %s0, %s218
        %s220 = smul.u32 2, %s17
      $region32: #{vit_forward.13} parent=27 // pred_fallthru
        _
    $region28: #{vit_forward.13} parent=5 // pred_fallthru
      _
    %p221 = scmp.le.s32.totalorder 1, %s10
    %p222 = scmp.lt.s32.totalorder %s10, 3
    %p223 = pnand %p221, %p222
    %p224 = pneg %p223
    // Predicated region
    $region33: #{vit_forward.13} parent=5 // pred_check
      _
    $region34: #{vit_forward.13} parent=5 // pred_check_branch
      %226 = sbr.rel (%p223) target = $region36
    $region35: #{vit_forward.13} parent=5 // pred_region
      %s227 = ssub.s32 %s10, 1
      %s228 = smul.u32 2, %s20
      %p229 = scmp.lt.s32.totalorder %s228, 3
      %s230 = scalar_select %p229, %s228, 3
      %p231 = scmp.lt.s32.totalorder %s22, 0
      %s232 = scalar_select %p231, %s22, 0
      %s233 = sadd.s32 %s232, %s230
      %s234 = smul.addr %s233, 4
      %s235 = scalar_lea.vmem %s0, %s234
      %p236 = pneg %p57
      %p237 = pneg %p54
      %s238 = smul.u32 8, %s22
      %p239 = scmp.lt.s32.totalorder %s238, 7
      %s240 = scalar_select %p239, %s238, 7
      %p241 = scmp.lt.s32.totalorder %s21, 0
      %s242 = scalar_select %p241, %s21, 0
      %s243 = sadd.s32 %s242, %s240
      %s244 = smul.addr %s243, 4
      %s245 = scalar_lea.vmem %s1, %s244
      %p246 = pneg %p85
      %p247 = pneg %p82
      %p248 = scmp.lt.s32.totalorder %s21, 0
      %s249 = scalar_select %p248, %s21, 0
      %s250 = scalar_lea.vmem %s2, %s249
      %p251 = pneg %p111
      %p252 = pneg %p108
      %p253 = scmp.lt.s32.totalorder %s21, 0
      %s254 = scalar_select %p253, %s21, 0
      %s255 = smul.addr %s254, 8
      %s256 = scalar_lea.vmem %s3, %s255
      %p257 = pneg %p137
      %p258 = pneg %p134
      %p259 = pneg %p165
      %p260 = pneg %p162
      %s261 = smul.u32 2, %s20
      %p262 = scmp.lt.s32.totalorder %s261, 3
      %s263 = scalar_select %p262, %s261, 3
      %p264 = scmp.lt.s32.totalorder %s21, 0
      %s265 = scalar_select %p264, %s21, 0
      %s266 = sadd.s32 %s265, %s263
      %s267 = smul.addr %s266, 4
      %s268 = scalar_lea.vmem %s4, %s267
      %s269 = smul.u32 2, %s20
      %p270 = scmp.lt.s32.totalorder %s269, 3
      %s271 = scalar_select %p270, %s269, 3
      %p272 = scmp.lt.s32.totalorder %s22, 0
      %s273 = scalar_select %p272, %s22, 0
      %s274 = sadd.s32 %s273, %s271
      %s275 = smul.addr %s274, 4
      %s276 = scalar_lea.vmem %s0, %s275
      %s277 = smul.u32 2, %s20
      %s278 = smul.u32 8, %s22
      %p279 = scmp.lt.s32.totalorder %s278, 7
      %s280 = scalar_select %p279, %s278, 7
      %p281 = scmp.lt.s32.totalorder %s21, 0
      %s282 = scalar_select %p281, %s21, 0
      %s283 = sadd.s32 %s282, %s280
      %s284 = smul.addr %s283, 4
      %s285 = scalar_lea.vmem %s1, %s284
      %s286 = smul.u32 8, %s22
      %p287 = scmp.lt.s32.totalorder %s21, 0
      %s288 = scalar_select %p287, %s21, 0
      %s289 = scalar_lea.vmem %s2, %s288
      %p290 = scmp.lt.s32.totalorder %s21, 0
      %s291 = scalar_select %p290, %s21, 0
      %s292 = smul.addr %s291, 8
      %s293 = scalar_lea.vmem %s3, %s292
      %s294 = smul.u32 2, %s20
      %p295 = scmp.lt.s32.totalorder %s294, 3
      %s296 = scalar_select %p295, %s294, 3
      %p297 = scmp.lt.s32.totalorder %s21, 0
      %s298 = scalar_select %p297, %s21, 0
      %s299 = sadd.s32 %s298, %s296
      %s300 = smul.addr %s299, 4
      %s301 = scalar_lea.vmem %s4, %s300
      %s302 = smul.u32 2, %s20
      %p304 = scmp.eq.s32.totalorder %s22, 0
      // Predicated region
      $region37: #{vit_forward.13} parent=35 // pred_check
        %p305 = pneg %p304
      $region38: #{vit_forward.13} parent=35 // pred_check_branch
        %307 = sbr.rel (%p305) target = $region40
      $region39: #{vit_forward.13} parent=35 // pred_region
        %vm308 = vcmask 261120
        %309 = vst.msk [vmem:[#allocation2] sm:$0xff] %vm308, 0.0
        %310 = vst.msk [vmem:[#allocation2 + $0x8] sm:$0xff] %vm308, 0.0
      $region40: #{vit_forward.13} parent=35 // pred_fallthru
        _
      %v311 = vld [vmem:[%s276] sm:$0xf]
      %v312 = vld [vmem:[%s276 + $0x4] sm:$0xf]
      %v313 = vld [vmem:[#allocation2] sm:$0xff]
      %v314 = vld [vmem:[#allocation2 + $0x8] sm:$0xff]
      %v315 = vld [vmem:[%s285] sm:$0xf]
      %v316 = vld [vmem:[%s285 + $0x4] sm:$0xf]
      %v317 = vld [vmem:[%s285 + $0x8] sm:$0xf]
      %v318 = vld [vmem:[%s285 + $0xc] sm:$0xf]
      %v319 = vld [vmem:[%s285 + $0x10] sm:$0xf]
      %v320 = vld [vmem:[%s285 + $0x14] sm:$0xf]
      %v321 = vld [vmem:[%s285 + $0x18] sm:$0xf]
      %v322 = vld [vmem:[%s285 + $0x1c] sm:$0xf]
      %v325 = vunpack.c.l.b16 %v311
      %v326 = vunpack.c.l.b16 %v312
      %v327 = vpack.c.b16 %v326, %v325
      %v336 = vunpack.c.l.b16 %v315
      %v337 = vunpack.c.l.b16 %v316
      %v338 = vunpack.c.l.b16 %v317
      %v339 = vunpack.c.l.b16 %v318
      %v340 = vunpack.c.l.b16 %v319
      %v341 = vunpack.c.l.b16 %v320
      %v342 = vunpack.c.l.b16 %v321
      %v343 = vunpack.c.l.b16 %v322
      %v344 = vpack.c.b16 %v337, %v336
      %v345 = vpack.c.b16 %v339, %v338
      %v346 = vpack.c.b16 %v341, %v340
      %v347 = vpack.c.b16 %v343, %v342
      %vm352 = vcmask 523264
      %v354 = vsel %vm352, %v327, 0
      %356 = vmatprep.subr.bf16.mxu0 0
      %357 = vmatpush1.bf16.msra.mxu0 0
      %358 = vmatprep.subr.bf16.mxu0 0
      %359 = vmatpush1.bf16.msra.mxu0 0
      %360 = vmatprep.subr.bf16.mxu0 0
      %361 = vmatpush1.bf16.msra.mxu0 0
      %362 = vmatprep.subr.bf16.mxu0 0
      %363 = vmatpush1.bf16.msra.mxu0 0
      %364 = vmatprep.subr.bf16.mxu0 0
      %365 = vmatpush1.bf16.msra.mxu0 %v347
      %366 = vmatprep.subr.bf16.mxu0 0
      %367 = vmatpush1.bf16.msra.mxu0 %v346
      %368 = vmatprep.subr.bf16.mxu0 0
      %369 = vmatpush1.bf16.msra.mxu0 %v345
      %370 = vmatprep.subr.bf16.mxu0 0
      %371 = vmatpush1.bf16.msra.mxu0 %v344
      %372 = vmatprep.subr.bf16.mxu0 0
      %373 = vmatpush2.bf16.msra.mxu0 0
      %374 = vmatprep.subr.bf16.mxu0 0
      %375 = vmatpush2.bf16.msra.mxu0 0
      %376 = vmatprep.subr.bf16.mxu0 0
      %377 = vmatpush2.bf16.msra.mxu0 0
      %378 = vmatprep.subr.bf16.mxu0 0
      %379 = vmatpush2.bf16.msra.mxu0 0
      %380 = vmatprep.subr.bf16.mxu0 0
      %381 = vmatpush2.bf16.msra.mxu0 0
      %382 = vmatprep.subr.bf16.mxu0 0
      %383 = vmatpush2.bf16.msra.mxu0 0
      %384 = vmatprep.subr.bf16.mxu0 0
      %385 = vmatpush2.bf16.msra.mxu0 0
      %386 = vmatprep.subr.bf16.mxu0 0
      %387 = vmatpush2.bf16.msra.mxu0 0
      %388 = vmatprep.mubr.bf16.mxu0 0
      %389 = vmatmul.mubr.bf16.gmra.mxu0 %v354
      %v390 = vpop.f32.mrf.mxu0
      %v391 = vadd.f32 0.0, %v390
      %v392 = vpop.f32.mrf.mxu0
      %v393 = vpop.f32.mrf.mxu0
      %v394 = vadd.f32 0.0, %v393
      %v395 = vpop.f32.mrf.mxu0
      %396 = vdwg.mxu0
      %v397 = vadd.f32 %v313, %v391
      %v398 = vadd.f32 %v314, %v394
      %vm399 = vcmask 261120
      %400 = vst.msk [vmem:[#allocation2] sm:$0xff] %vm399, %v397
      %401 = vst.msk [vmem:[#allocation2 + $0x8] sm:$0xff] %vm399, %v398
      // Predicated region
      $region41: #{vit_forward.13} parent=35 // pred_check
        %p402 = pneg %p304
      $region42: #{vit_forward.13} parent=35 // pred_check_branch
        %404 = sbr.rel (%p402) target = $region44
      $region43: #{vit_forward.13} parent=35 // pred_region
        %v405 = vld [vmem:[#allocation2] sm:$0xff]
        %v406 = vld [vmem:[#allocation2 + $0x8] sm:$0xff]
        %v407 = vld [vmem:[%s289] sm:$0x1]
        %v409 = vlaneseq
        %v410 = vshrl.u32 %v409, 7
        %v411 = vsub.s32 0, %v410
        %v412 = vrot.slane %v407, %v411
        %v414 = vadd.f32 %v405, %v412
        %v415 = vadd.f32 %v406, %v412
        %v416 = vld [vmem:[%s293] sm:$0xff]
        %v417 = vld [vmem:[%s293 + $0x8] sm:$0xff]
        %v418 = vadd.f32 %v414, %v416
        %v419 = vadd.f32 %v415, %v417
        %v420 = vpack.c.bf16 %v419, %v418
        %v422 = vunpack.c.l.b16 %v420
        %v423 = vunpack.c.h.b16 %v420
        %v424 = vpack.c.b16 %v422, %v422
        %v425 = vpack.c.b16 %v423, %v423
        %vm428 = vcmask 257024
        %429 = vst.msk [vmem:[%s301] sm:$0xf] %vm428, %v424
        %430 = vst.msk [vmem:[%s301 + $0x4] sm:$0xf] %vm428, %v425
      $region44: #{vit_forward.13} parent=35 // pred_fallthru
        _
      %s431 = smul.u32 2, %s20
      %p432 = scmp.lt.s32.totalorder %s431, 3
      %s433 = scalar_select %p432, %s431, 3
      %p434 = scmp.lt.s32.totalorder %s21, 0
      %s435 = scalar_select %p434, %s21, 0
      %s436 = sadd.s32 %s435, %s433
      %s437 = smul.addr %s436, 4
      %s438 = scalar_lea.vmem %s4, %s437
      // Predicated region
      $region45: #{vit_forward.13} parent=35 // pred_check
        %p439 = pneg %p162
      $region46: #{vit_forward.13} parent=35 // pred_check_branch
        %441 = sbr.rel (%p439) target = $region48
      $region47: #{vit_forward.13} parent=35 // pred_region
        %s442 = smul.u32 2, %s20
      $region48: #{vit_forward.13} parent=35 // pred_fallthru
        _
    $region36: #{vit_forward.13} parent=5 // pred_fallthru
      _
    %p443 = scmp.le.s32.totalorder 2, %s10
    // Predicated region
    $region49: #{vit_forward.13} parent=5 // pred_check
      %p444 = pneg %p443
    $region50: #{vit_forward.13} parent=5 // pred_check_branch
      %446 = sbr.rel (%p444) target = $region52
    $region51: #{vit_forward.13} parent=5 // pred_region
      %s447 = ssub.s32 %s10, 2
      // Predicated region
      $region53: #{vit_forward.13} parent=51 // pred_check
        %p448 = pneg %p168
      $region54: #{vit_forward.13} parent=51 // pred_check_branch
        %450 = sbr.rel (%p448) target = $region56
      $region55: #{vit_forward.13} parent=51 // pred_region
        %s451 = smul.u32 2, %s23
        %p452 = scmp.lt.s32.totalorder %s451, 3
        %s453 = scalar_select %p452, %s451, 3
        %p454 = scmp.lt.s32.totalorder %s24, 0
        %s455 = scalar_select %p454, %s24, 0
        %s456 = sadd.s32 %s455, %s453
        %s457 = smul.addr %s456, 4
        %s458 = scalar_lea.vmem %s4, %s457
      $region56: #{vit_forward.13} parent=51 // pred_fallthru
        _
    $region52: #{vit_forward.13} parent=5 // pred_fallthru
      _
  $region6: #{vit_forward.13} parent=0 // loop_footer
    %s14 = sadd.s32 1, %s10
  $region7: #{vit_forward.13} parent=0 // loop_footer_branch
    %9 = sbr.rel target = $region3
  $region8: #{vit_forward.13} parent=0 // loop_exit
    _

// kernel: vit_forward.14
$region0: #{vit_forward.14}
  #allocation0 [shape = 'u32[]', space=smem, size = 0x4, offset = 0x4, fixed_abs, tag = 'smem constant byte address 0x4 - core index']
  #allocation1 [shape = 'u32[144,128]{1,0:T(1,128)}', space=vmem, size = 0x12000, scoped, tag = 'internal scratch']
  #allocation2 [shape = 'f32[32,96]{1,0:T(8,128)}', space=vmem, size = 0x4000, scoped, tag = 'scratch operand']
  #allocation3 [shape = 'bf16[32,32]{1,0:T(8,128)(2,1)}', space=vmem, size = 0x2000, scoped, tag = 'scratch operand']
  %s0 = inlined_call_operand.vmem [shape: bf16[32,32], index: 0, kind: input, shape index: {}]
  %s1 = inlined_call_operand.vmem [shape: bf16[32,96], index: 1, kind: input, shape index: {}]
  %s2 = inlined_call_operand.vmem [shape: f32[1,96], index: 2, kind: input, shape index: {}]
  %s3 = inlined_call_operand.vmem [shape: f32[1,32], index: 3, kind: input, shape index: {}]
  %s4 = inlined_call_operand.vmem [shape: f32[1,32], index: 4, kind: input, shape index: {}]
  %s5 = inlined_call_operand.vmem [shape: bf16[32,96], index: 5, kind: output, shape index: {}]
  %s6 = sld [smem:[#allocation0]]
  $region42: #{vit_forward.14} parent=0
    _
  %s8 = ssub.s32 1, %s6
  %s9 = scalar_select 0, %s8, %s6
  // Predicated region
  $region2: #{vit_forward.14} parent=0 // pred_check
    _
  $region3: #{vit_forward.14} parent=0 // pred_check_branch
    %11 = sbr.rel (0) target = $region5
  $region4: #{vit_forward.14} parent=0 // pred_region
    _
  $region5: #{vit_forward.14} parent=0 // pred_fallthru
    _
  // Predicated region
  $region6: #{vit_forward.14} parent=0 // pred_check
    _
  $region7: #{vit_forward.14} parent=0 // pred_check_branch
    %13 = sbr.rel (0) target = $region9
  $region8: #{vit_forward.14} parent=0 // pred_region
    _
  $region9: #{vit_forward.14} parent=0 // pred_fallthru
    _
  // Predicated region
  $region10: #{vit_forward.14} parent=0 // pred_check
    _
  $region11: #{vit_forward.14} parent=0 // pred_check_branch
    %15 = sbr.rel (0) target = $region13
  $region12: #{vit_forward.14} parent=0 // pred_region
    _
  $region13: #{vit_forward.14} parent=0 // pred_fallthru
    _
  // Predicated region
  $region14: #{vit_forward.14} parent=0 // pred_check
    _
  $region15: #{vit_forward.14} parent=0 // pred_check_branch
    %17 = sbr.rel (0) target = $region17
  $region16: #{vit_forward.14} parent=0 // pred_region
    _
  $region17: #{vit_forward.14} parent=0 // pred_fallthru
    _
  // Predicated region
  $region18: #{vit_forward.14} parent=0 // pred_check
    _
  $region19: #{vit_forward.14} parent=0 // pred_check_branch
    %19 = sbr.rel (0) target = $region21
  $region20: #{vit_forward.14} parent=0 // pred_region
    _
  $region21: #{vit_forward.14} parent=0 // pred_fallthru
    _
  %p21 = scmp.eq.s32.totalorder 0, 0
  // Predicated region
  $region22: #{vit_forward.14} parent=0 // pred_check
    %p22 = pneg %p21
  $region23: #{vit_forward.14} parent=0 // pred_check_branch
    %24 = sbr.rel (%p22) target = $region25
  $region24: #{vit_forward.14} parent=0 // pred_region
    %vm25 = vcmask 785408
    %26 = vst.msk [vmem:[#allocation2] sm:$0xff] %vm25, 0.0
    %27 = vst.msk [vmem:[#allocation2 + $0x8] sm:$0xff] %vm25, 0.0
    %28 = vst.msk [vmem:[#allocation2 + $0x10] sm:$0xff] %vm25, 0.0
    %29 = vst.msk [vmem:[#allocation2 + $0x18] sm:$0xff] %vm25, 0.0
  $region25: #{vit_forward.14} parent=0 // pred_fallthru
    _
  %p30 = scmp.eq.s32.totalorder 0, 0
  %p31 = pnand %p30, %p21
  %p32 = pneg %p31
  // Predicated region
  $region26: #{vit_forward.14} parent=0 // pred_check
    _
  $region27: #{vit_forward.14} parent=0 // pred_check_branch
    %34 = sbr.rel (%p31) target = $region29
  $region28: #{vit_forward.14} parent=0 // pred_region
    %v35 = vld [vmem:[%s0] sm:$0xf]
    %v36 = vld [vmem:[%s0 + $0x4] sm:$0xf]
    %v37 = vld [vmem:[%s0 + $0x8] sm:$0xf]
    %v38 = vld [vmem:[%s0 + $0xc] sm:$0xf]
    %v39 = vunpack.c.l.bf16 %v35
    %v40 = vunpack.c.l.bf16 %v36
    %v41 = vunpack.c.l.bf16 %v37
    %v42 = vunpack.c.l.bf16 %v38
    %vm43 = vcmask 261120
    %v44 = vsel %vm43, %v39, 0.0
    %45 = vadd.xlane.f32.xlu0 %v44
    %v46 = vpop.xlane.xlu0 %45
    %v47 = vsel %vm43, %v40, 0.0
    %48 = vadd.xlane.f32.xlu0 %v47
    %v49 = vpop.xlane.xlu0 %48
    %v50 = vsel %vm43, %v41, 0.0
    %51 = vadd.xlane.f32.xlu0 %v50
    %v52 = vpop.xlane.xlu0 %51
    %v53 = vsel %vm43, %v42, 0.0
    %54 = vadd.xlane.f32.xlu0 %v53
    %v55 = vpop.xlane.xlu0 %54
    %v56 = vrcp.pop 32.0
    %v57 = vmul.f32 %v46, %v56
    %v58 = vmul.f32 %v49, %v56
    %v59 = vmul.f32 %v52, %v56
    %v60 = vmul.f32 %v55, %v56
    %v61 = vsub.f32 %v39, %v57
    %v62 = vsub.f32 %v40, %v58
    %v63 = vsub.f32 %v41, %v59
    %v64 = vsub.f32 %v42, %v60
    %v65 = vmul.f32 %v61, %v61
    %v66 = vmul.f32 %v62, %v62
    %v67 = vmul.f32 %v63, %v63
    %v68 = vmul.f32 %v64, %v64
    %v69 = vsel %vm43, %v65, 0.0
    %70 = vadd.xlane.f32.xlu0 %v69
    %v71 = vpop.xlane.xlu0 %70
    %v72 = vsel %vm43, %v66, 0.0
    %73 = vadd.xlane.f32.xlu0 %v72
    %v74 = vpop.xlane.xlu0 %73
    %v75 = vsel %vm43, %v67, 0.0
    %76 = vadd.xlane.f32.xlu0 %v75
    %v77 = vpop.xlane.xlu0 %76
    %v78 = vsel %vm43, %v68, 0.0
    %79 = vadd.xlane.f32.xlu0 %v78
    %v80 = vpop.xlane.xlu0 %79
    %v81 = vmul.f32 %v71, %v56
    %v82 = vmul.f32 %v74, %v56
    %v83 = vmul.f32 %v77, %v56
    %v84 = vmul.f32 %v80, %v56
    %v85 = vadd.f32 %v81, 1e-05
    %v86 = vadd.f32 %v82, 1e-05
    %v87 = vadd.f32 %v83, 1e-05
    %v88 = vadd.f32 %v84, 1e-05
    %v89 = vrsqrt.pop %v85
    %v90 = vrsqrt.pop %v86
    %v91 = vrsqrt.pop %v87
    %v92 = vrsqrt.pop %v88
    %v93 = vmul.f32 %v61, %v89
    %v94 = vmul.f32 %v62, %v90
    %v95 = vmul.f32 %v63, %v91
    %v96 = vmul.f32 %v64, %v92
    %v97 = vld [vmem:[%s3] sm:$0x1]
    %v99 = vlaneseq
    %v100 = vshrl.u32 %v99, 7
    %v101 = vsub.s32 0, %v100
    %v102 = vrot.slane %v97, %v101
    %v104 = vmul.f32 %v93, %v102
    %v105 = vmul.f32 %v94, %v102
    %v106 = vmul.f32 %v95, %v102
    %v107 = vmul.f32 %v96, %v102
    %v108 = vld [vmem:[%s4] sm:$0x1]
    %v110 = vlaneseq
    %v111 = vshrl.u32 %v110, 7
    %v112 = vsub.s32 0, %v111
    %v113 = vrot.slane %v108, %v112
    %v115 = vadd.f32 %v104, %v113
    %v116 = vadd.f32 %v105, %v113
    %v117 = vadd.f32 %v106, %v113
    %v118 = vadd.f32 %v107, %v113
    %v119 = vpack.c.bf16 %v116, %v115
    %v120 = vpack.c.bf16 %v118, %v117
    %v123 = vunpack.c.l.b16 %v119
    %v124 = vunpack.c.h.b16 %v119
    %v125 = vunpack.c.l.b16 %v120
    %v126 = vunpack.c.h.b16 %v120
    %v127 = vpack.c.b16 %v123, %v123
    %v128 = vpack.c.b16 %v124, %v124
    %v129 = vpack.c.b16 %v125, %v125
    %v130 = vpack.c.b16 %v126, %v126
    %vm135 = vcmask 257024
    %136 = vst.msk [vmem:[#allocation3] sm:$0xf] %vm135, %v127
    %137 = vst.msk [vmem:[#allocation3 + $0x4] sm:$0xf] %vm135, %v128
    %138 = vst.msk [vmem:[#allocation3 + $0x8] sm:$0xf] %vm135, %v129
    %139 = vst.msk [vmem:[#allocation3 + $0xc] sm:$0xf] %vm135, %v130
  $region29: #{vit_forward.14} parent=0 // pred_fallthru
    _
  %v140 = vld [vmem:[#allocation3] sm:$0xf]
  %v141 = vld [vmem:[#allocation3 + $0x4] sm:$0xf]
  %v142 = vld [vmem:[#allocation3 + $0x8] sm:$0xf]
  %v143 = vld [vmem:[#allocation3 + $0xc] sm:$0xf]
  %v144 = vld [vmem:[#allocation2] sm:$0xff]
  %v145 = vld [vmem:[#allocation2 + $0x8] sm:$0xff]
  %v146 = vld [vmem:[#allocation2 + $0x10] sm:$0xff]
  %v147 = vld [vmem:[#allocation2 + $0x18] sm:$0xff]
  %v148 = vld [vmem:[%s1] sm:$0xf]
  %v149 = vld [vmem:[%s1 + $0x4] sm:$0xf]
  %v150 = vld [vmem:[%s1 + $0x8] sm:$0xf]
  %v151 = vld [vmem:[%s1 + $0xc] sm:$0xf]
  %v156 = vunpack.c.l.b16 %v140
  %v157 = vunpack.c.l.b16 %v141
  %v158 = vunpack.c.l.b16 %v142
  %v159 = vunpack.c.l.b16 %v143
  %v160 = vpack.c.b16 %v157, %v156
  %v161 = vpack.c.b16 %v159, %v158
  %v166 = vunpack.c.l.b16 %v148
  %v167 = vunpack.c.l.b16 %v149
  %v168 = vunpack.c.l.b16 %v150
  %v169 = vunpack.c.l.b16 %v151
  %v170 = vpack.c.b16 %v167, %v166
  %v171 = vpack.c.b16 %v169, %v168
  %vm174 = vcmask 261120
  %v176 = vsel %vm174, %v160, 0
  %v179 = vsel %vm174, %v161, 0
  %181 = vmatprep.subr.bf16.mxu0 0
  %182 = vmatpush1.bf16.msra.mxu0 0
  %183 = vmatprep.subr.bf16.mxu0 0
  %184 = vmatpush1.bf16.msra.mxu0 0
  %185 = vmatprep.subr.bf16.mxu0 0
  %186 = vmatpush1.bf16.msra.mxu0 0
  %187 = vmatprep.subr.bf16.mxu0 0
  %188 = vmatpush1.bf16.msra.mxu0 0
  %189 = vmatprep.subr.bf16.mxu0 0
  %190 = vmatpush1.bf16.msra.mxu0 0
  %191 = vmatprep.subr.bf16.mxu0 0
  %192 = vmatpush1.bf16.msra.mxu0 0
  %193 = vmatprep.subr.bf16.mxu0 0
  %194 = vmatpush1.bf16.msra.mxu0 %v171
  %195 = vmatprep.subr.bf16.mxu0 0
  %196 = vmatpush1.bf16.msra.mxu0 %v170
  %197 = vmatprep.subr.bf16.mxu0 0
  %198 = vmatpush2.bf16.msra.mxu0 0
  %199 = vmatprep.subr.bf16.mxu0 0
  %200 = vmatpush2.bf16.msra.mxu0 0
  %201 = vmatprep.subr.bf16.mxu0 0
  %202 = vmatpush2.bf16.msra.mxu0 0
  %203 = vmatprep.subr.bf16.mxu0 0
  %204 = vmatpush2.bf16.msra.mxu0 0
  %205 = vmatprep.subr.bf16.mxu0 0
  %206 = vmatpush2.bf16.msra.mxu0 0
  %207 = vmatprep.subr.bf16.mxu0 0
  %208 = vmatpush2.bf16.msra.mxu0 0
  %209 = vmatprep.subr.bf16.mxu0 0
  %210 = vmatpush2.bf16.msra.mxu0 0
  %211 = vmatprep.subr.bf16.mxu0 0
  %212 = vmatpush2.bf16.msra.mxu0 0
  %213 = vmatprep.mubr.bf16.mxu0 0
  %214 = vmatmul.mubr.bf16.gmra.mxu0 %v176
  %v215 = vpop.f32.mrf.mxu0
  %v216 = vadd.f32 0.0, %v215
  %v217 = vpop.f32.mrf.mxu0
  %v218 = vpop.f32.mrf.mxu0
  %v219 = vadd.f32 0.0, %v218
  %v220 = vpop.f32.mrf.mxu0
  %221 = vmatprep.mubr.bf16.mxu0 0
  %222 = vmatmul.mubr.bf16.gmra.mxu0 %v179
  %v223 = vpop.f32.mrf.mxu0
  %v224 = vadd.f32 0.0, %v223
  %v225 = vpop.f32.mrf.mxu0
  %v226 = vpop.f32.mrf.mxu0
  %v227 = vadd.f32 0.0, %v226
  %v228 = vpop.f32.mrf.mxu0
  %229 = vdwg.mxu0
  %v230 = vadd.f32 %v144, %v216
  %v231 = vadd.f32 %v145, %v219
  %v232 = vadd.f32 %v146, %v224
  %v233 = vadd.f32 %v147, %v227
  %vm234 = vcmask 785408
  %235 = vst.msk [vmem:[#allocation2] sm:$0xff] %vm234, %v230
  %236 = vst.msk [vmem:[#allocation2 + $0x8] sm:$0xff] %vm234, %v231
  %237 = vst.msk [vmem:[#allocation2 + $0x10] sm:$0xff] %vm234, %v232
  %238 = vst.msk [vmem:[#allocation2 + $0x18] sm:$0xff] %vm234, %v233
  // Predicated region
  $region30: #{vit_forward.14} parent=0 // pred_check
    %p239 = pneg %p21
  $region31: #{vit_forward.14} parent=0 // pred_check_branch
    %241 = sbr.rel (%p239) target = $region33
  $region32: #{vit_forward.14} parent=0 // pred_region
    %v242 = vld [vmem:[#allocation2] sm:$0xff]
    %v243 = vld [vmem:[#allocation2 + $0x8] sm:$0xff]
    %v244 = vld [vmem:[#allocation2 + $0x10] sm:$0xff]
    %v245 = vld [vmem:[#allocation2 + $0x18] sm:$0xff]
    %v246 = vld [vmem:[%s2] sm:$0x1]
    %v248 = vlaneseq
    %v249 = vshrl.u32 %v248, 7
    %v250 = vsub.s32 0, %v249
    %v251 = vrot.slane %v246, %v250
    %v253 = vadd.f32 %v242, %v251
    %v254 = vadd.f32 %v243, %v251
    %v255 = vadd.f32 %v244, %v251
    %v256 = vadd.f32 %v245, %v251
    %v257 = vpack.c.bf16 %v254, %v253
    %v258 = vpack.c.bf16 %v256, %v255
    %v261 = vunpack.c.l.b16 %v257
    %v262 = vunpack.c.h.b16 %v257
    %v263 = vunpack.c.l.b16 %v258
    %v264 = vunpack.c.h.b16 %v258
    %v265 = vpack.c.b16 %v261, %v261
    %v266 = vpack.c.b16 %v262, %v262
    %v267 = vpack.c.b16 %v263, %v263
    %v268 = vpack.c.b16 %v264, %v264
    %vm273 = vcmask 781312
    %274 = vst.msk [vmem:[%s5] sm:$0xf] %vm273, %v265
    %275 = vst.msk [vmem:[%s5 + $0x4] sm:$0xf] %vm273, %v266
    %276 = vst.msk [vmem:[%s5 + $0x8] sm:$0xf] %vm273, %v267
    %277 = vst.msk [vmem:[%s5 + $0xc] sm:$0xf] %vm273, %v268
  $region33: #{vit_forward.14} parent=0 // pred_fallthru
    _
  // Predicated region
  $region34: #{vit_forward.14} parent=0 // pred_check
    _
  $region35: #{vit_forward.14} parent=0 // pred_check_branch
    %279 = sbr.rel (0) target = $region37
  $region36: #{vit_forward.14} parent=0 // pred_region
    _
  $region37: #{vit_forward.14} parent=0 // pred_fallthru
    _
  // Predicated region
  $region38: #{vit_forward.14} parent=0 // pred_check
    _
  $region39: #{vit_forward.14} parent=0 // pred_check_branch
    %281 = sbr.rel (0) target = $region41
  $region40: #{vit_forward.14} parent=0 // pred_region
    _
  $region41: #{vit_forward.14} parent=0 // pred_fallthru
    _

// kernel: vit_forward.16
$region0: #{vit_forward.16}
  #allocation0 [shape = 'u32[]', space=smem, size = 0x4, offset = 0x4, fixed_abs, tag = 'smem constant byte address 0x4 - core index']
  #allocation1 [shape = 'u32[144,128]{1,0:T(1,128)}', space=vmem, size = 0x12000, scoped, tag = 'internal scratch']
  #allocation2 [shape = 'f32[16,32]{1,0:T(8,128)}', space=vmem, size = 0x2000, scoped, tag = 'scratch operand']
  %s0 = inlined_call_operand.vmem [shape: bf16[2,4,16,8], index: 0, kind: input, shape index: {}]
  %s1 = inlined_call_operand.vmem [shape: bf16[32,32], index: 1, kind: input, shape index: {}]
  %s2 = inlined_call_operand.vmem [shape: f32[1,32], index: 2, kind: input, shape index: {}]
  %s3 = inlined_call_operand.vmem [shape: bf16[32,32], index: 3, kind: input, shape index: {}]
  %s4 = inlined_call_operand.vmem [shape: bf16[32,32], index: 4, kind: output, shape index: {}]
  %s5 = sld [smem:[#allocation0]]
  $region57: #{vit_forward.16} parent=0
    _
  %s7 = ssub.s32 1, %s5
  %s8 = scalar_select 0, %s7, %s5
  loop: start=0, step=1, limit=10
  $region2: #{vit_forward.16} parent=0 // loop_pre_header
    _
  $region3: #{vit_forward.16} parent=0 // loop_header
    %s10 = sphi 0, %s14
    %p11 = scmp.ge.s32.totalorder %s10, 10
    %s17 = sphi 0, %s43
    %s18 = sphi 0, %s39
    %s19 = sphi 0, %s35
    %s20 = sphi 0, %s31
    %s21 = sphi 0, %s17
    %s22 = sphi 0, %s18
    %s23 = sphi 0, %s19
    %s24 = sphi 0, %s20
    %s25 = sphi 0, %s21
    %s26 = sphi 0, %s22
    %s27 = sphi 0, %s23
    %s28 = sphi 0, %s24
    %s50 = sphi 0, %s52
    %s53 = sphi 0, %s50
    %s54 = sphi 0, %s53
    %s70 = sphi 0, %s54
    %s78 = sphi 0, %s80
    %s81 = sphi 0, %s78
    %s82 = sphi 0, %s81
    %s98 = sphi 0, %s82
    %s104 = sphi 0, %s106
    %s107 = sphi 0, %s104
    %s108 = sphi 0, %s107
    %s124 = sphi 0, %s108
    %s134 = sphi 0, %s136
    %s137 = sphi 0, %s134
    %s138 = sphi 0, %s137
    %s154 = sphi 0, %s138
    %s164 = sphi 0, %s166
    %s167 = sphi 0, %s164
    %s168 = sphi 0, %s167
    %s184 = sphi 0, %s168
  $region4: #{vit_forward.16} parent=0 // loop_header_branch
    %13 = sbr.rel (%p11) target = $region8
  $region5: #{vit_forward.16} parent=0 // loop_body
    %s15 = ssub.s32 %s10, 1
    %s16 = ssub.s32 %s10, 2
    %s29 = sadd.s32 1, %s20
    %p30 = scmp.ge.s32.totalorder %s29, 4
    %s31 = scalar_select %p30, 0, %s29
    %s32 = sadd.s32 1, %s19
    %s33 = scalar_select %p30, %s32, %s19
    %p34 = scmp.ge.s32.totalorder %s33, 1
    %s35 = scalar_select %p34, 0, %s33
    %s36 = sadd.s32 1, %s18
    %s37 = scalar_select %p34, %s36, %s18
    %p38 = scmp.ge.s32.totalorder %s37, 1
    %s39 = scalar_select %p38, 0, %s37
    %s40 = sadd.s32 1, %s17
    %s41 = scalar_select %p38, %s40, %s17
    %p42 = scmp.ge.s32.totalorder %s41, 2
    %s43 = scalar_select %p42, 0, %s41
    %s44 = ssub.s32 %s17, %s43
    %s45 = ssub.s32 %s20, %s31
    %s46 = sor.u32 %s44, %s45
    %s47 = ssub.s32 %s18, %s39
    %s48 = sor.u32 %s46, %s47
    %p49 = scmp.eq.s32.totalorder %s48, 0
    %s51 = sadd.s32 %s50, 1
    %s52 = scalar_select %p49, %s50, %s51
    %p55 = pneg %p49
    %p56 = scmp.eq.s32.totalorder %s10, 7
    %p57 = por %p55, %p56
    %p58 = scmp.ne.s32.totalorder %s50, %s53
    %p59 = scmp.eq.s32.totalorder %s10, 0
    %p60 = por %p58, %p59
    %p61 = scmp.ne.s32.totalorder %s50, %s53
    %p62 = scmp.eq.s32.totalorder %s15, 7
    %p63 = por %p61, %p62
    %p64 = scmp.ne.s32.totalorder %s53, %s54
    %p65 = scmp.eq.s32.totalorder %s15, 0
    %p66 = por %p64, %p65
    %p67 = scmp.ne.s32.totalorder %s53, %s54
    %p68 = scmp.eq.s32.totalorder %s16, 7
    %p69 = por %p67, %p68
    %p71 = scmp.ne.s32.totalorder %s54, %s70
    %p72 = scmp.eq.s32.totalorder %s16, 0
    %p73 = por %p71, %p72
    %s74 = ssub.s32 %s20, %s31
    %s75 = ssub.s32 %s19, %s35
    %s76 = sor.u32 %s74, %s75
    %p77 = scmp.eq.s32.totalorder %s76, 0
    %s79 = sadd.s32 %s78, 1
    %s80 = scalar_select %p77, %s78, %s79
    %p83 = pneg %p77
    %p84 = scmp.eq.s32.totalorder %s10, 7
    %p85 = por %p83, %p84
    %p86 = scmp.ne.s32.totalorder %s78, %s81
    %p87 = scmp.eq.s32.totalorder %s10, 0
    %p88 = por %p86, %p87
    %p89 = scmp.ne.s32.totalorder %s78, %s81
    %p90 = scmp.eq.s32.totalorder %s15, 7
    %p91 = por %p89, %p90
    %p92 = scmp.ne.s32.totalorder %s81, %s82
    %p93 = scmp.eq.s32.totalorder %s15, 0
    %p94 = por %p92, %p93
    %p95 = scmp.ne.s32.totalorder %s81, %s82
    %p96 = scmp.eq.s32.totalorder %s16, 7
    %p97 = por %p95, %p96
    %p99 = scmp.ne.s32.totalorder %s82, %s98
    %p100 = scmp.eq.s32.totalorder %s16, 0
    %p101 = por %p99, %p100
    %s102 = ssub.s32 %s19, %s35
    %p103 = scmp.eq.s32.totalorder %s102, 0
    %s105 = sadd.s32 %s104, 1
    %s106 = scalar_select %p103, %s104, %s105
    %p109 = pneg %p103
    %p110 = scmp.eq.s32.totalorder %s10, 7
    %p111 = por %p109, %p110
    %p112 = scmp.ne.s32.totalorder %s104, %s107
    %p113 = scmp.eq.s32.totalorder %s10, 0
    %p114 = por %p112, %p113
    %p115 = scmp.ne.s32.totalorder %s104, %s107
    %p116 = scmp.eq.s32.totalorder %s15, 7
    %p117 = por %p115, %p116
    %p118 = scmp.ne.s32.totalorder %s107, %s108
    %p119 = scmp.eq.s32.totalorder %s15, 0
    %p120 = por %p118, %p119
    %p121 = scmp.ne.s32.totalorder %s107, %s108
    %p122 = scmp.eq.s32.totalorder %s16, 7
    %p123 = por %p121, %p122
    %p125 = scmp.ne.s32.totalorder %s108, %s124
    %p126 = scmp.eq.s32.totalorder %s16, 0
    %p127 = por %p125, %p126
    %s128 = sadd.s32 %s17, %s18
    %s129 = sadd.s32 %s43, %s39
    %s130 = ssub.s32 %s128, %s129
    %s131 = ssub.s32 %s19, %s35
    %s132 = sor.u32 %s130, %s131
    %p133 = scmp.eq.s32.totalorder %s132, 0
    %s135 = sadd.s32 %s134, 1
    %s136 = scalar_select %p133, %s134, %s135
    %p139 = pneg %p133
    %p140 = scmp.eq.s32.totalorder %s10, 7
    %p141 = por %p139, %p140
    %p142 = scmp.ne.s32.totalorder %s134, %s137
    %p143 = scmp.eq.s32.totalorder %s10, 0
    %p144 = por %p142, %p143
    %p145 = scmp.ne.s32.totalorder %s134, %s137
    %p146 = scmp.eq.s32.totalorder %s15, 7
    %p147 = por %p145, %p146
    %p148 = scmp.ne.s32.totalorder %s137, %s138
    %p149 = scmp.eq.s32.totalorder %s15, 0
    %p150 = por %p148, %p149
    %p151 = scmp.ne.s32.totalorder %s137, %s138
    %p152 = scmp.eq.s32.totalorder %s16, 7
    %p153 = por %p151, %p152
    %p155 = scmp.ne.s32.totalorder %s138, %s154
    %p156 = scmp.eq.s32.totalorder %s16, 0
    %p157 = por %p155, %p156
    %s158 = sadd.s32 %s17, %s18
    %s159 = sadd.s32 %s43, %s39
    %s160 = ssub.s32 %s158, %s159
    %s161 = ssub.s32 %s19, %s35
    %s162 = sor.u32 %s160, %s161
    %p163 = scmp.eq.s32.totalorder %s162, 0
    %s165 = sadd.s32 %s164, 1
    %s166 = scalar_select %p163, %s164, %s165
    %p169 = pneg %p163
    %p170 = scmp.eq.s32.totalorder %s10, 7
    %p171 = por %p169, %p170
    %p172 = scmp.ne.s32.totalorder %s164, %s167
    %p173 = scmp.eq.s32.totalorder %s10, 0
    %p174 = por %p172, %p173
    %p175 = scmp.ne.s32.totalorder %s164, %s167
    %p176 = scmp.eq.s32.totalorder %s15, 7
    %p177 = por %p175, %p176
    %p178 = scmp.ne.s32.totalorder %s167, %s168
    %p179 = scmp.eq.s32.totalorder %s15, 0
    %p180 = por %p178, %p179
    %p181 = scmp.ne.s32.totalorder %s167, %s168
    %p182 = scmp.eq.s32.totalorder %s16, 7
    %p183 = por %p181, %p182
    %p185 = scmp.ne.s32.totalorder %s168, %s184
    %p186 = scmp.eq.s32.totalorder %s16, 0
    %p187 = por %p185, %p186
    %p188 = scmp.le.s32.totalorder 1, %s10
    %p189 = scmp.lt.s32.totalorder %s10, 9
    %p190 = pnand %p188, %p189
    %p191 = pneg %p190
    // Predicated region
    $region9: #{vit_forward.16} parent=5 // pred_check
      _
    $region10: #{vit_forward.16} parent=5 // pred_check_branch
      %193 = sbr.rel (%p190) target = $region12
    $region11: #{vit_forward.16} parent=5 // pred_region
      %s194 = ssub.s32 %s10, 1
      // Predicated region
      $region13: #{vit_forward.16} parent=11 // pred_check
        %p195 = pneg %p120
      $region14: #{vit_forward.16} parent=11 // pred_check_branch
        %197 = sbr.rel (%p195) target = $region16
      $region15: #{vit_forward.16} parent=11 // pred_region
        %p198 = scmp.lt.s32.totalorder %s23, 0
        %s199 = scalar_select %p198, %s23, 0
        %s200 = scalar_lea.vmem %s2, %s199
      $region16: #{vit_forward.16} parent=11 // pred_fallthru
        _
    $region12: #{vit_forward.16} parent=5 // pred_fallthru
      _
    %p201 = scmp.lt.s32.totalorder %s10, 8
    // Predicated region
    $region17: #{vit_forward.16} parent=5 // pred_check
      %p202 = pneg %p201
    $region18: #{vit_forward.16} parent=5 // pred_check_branch
      %204 = sbr.rel (%p202) target = $region20
    $region19: #{vit_forward.16} parent=5 // pred_region
      // Predicated region
      $region21: #{vit_forward.16} parent=19 // pred_check
        %p205 = pneg %p60
      $region22: #{vit_forward.16} parent=19 // pred_check_branch
        %207 = sbr.rel (%p205) target = $region24
      $region23: #{vit_forward.16} parent=19 // pred_region
        %s208 = smul.u32 2, %s18
        %p209 = scmp.lt.s32.totalorder %s17, 1
        %s210 = scalar_select %p209, %s17, 1
        %p211 = scmp.lt.s32.totalorder %s20, 3
        %s212 = scalar_select %p211, %s20, 3
        %p213 = scmp.lt.s32.totalorder %s208, 1
        %s214 = scalar_select %p213, %s208, 1
        %s215 = smul.addr %s212, 2
        %s216 = sadd.s32 %s214, %s215
        %s217 = smul.addr %s210, 8
        %s218 = sadd.s32 %s216, %s217
        %s219 = smul.addr %s218, 4
        %s220 = scalar_lea.vmem %s0, %s219
        %s221 = smul.u32 2, %s18
      $region24: #{vit_forward.16} parent=19 // pred_fallthru
        _
      // Predicated region
      $region25: #{vit_forward.16} parent=19 // pred_check
        %p222 = pneg %p88
      $region26: #{vit_forward.16} parent=19 // pred_check_branch
        %224 = sbr.rel (%p222) target = $region28
      $region27: #{vit_forward.16} parent=19 // pred_region
        %p225 = scmp.lt.s32.totalorder %s20, 3
        %s226 = scalar_select %p225, %s20, 3
        %p227 = scmp.lt.s32.totalorder %s19, 0
        %s228 = scalar_select %p227, %s19, 0
        %s229 = sadd.s32 %s228, %s226
        %s230 = smul.addr %s229, 4
        %s231 = scalar_lea.vmem %s1, %s230
      $region28: #{vit_forward.16} parent=19 // pred_fallthru
        _
      // Predicated region
      $region29: #{vit_forward.16} parent=19 // pred_check
        %p232 = pneg %p144
      $region30: #{vit_forward.16} parent=19 // pred_check_branch
        %234 = sbr.rel (%p232) target = $region32
      $region31: #{vit_forward.16} parent=19 // pred_region
        %s235 = sadd.s32 %s17, %s18
        %s236 = smul.u32 2, %s235
        %p237 = scmp.lt.s32.totalorder %s236, 3
        %s238 = scalar_select %p237, %s236, 3
        %p239 = scmp.lt.s32.totalorder %s19, 0
        %s240 = scalar_select %p239, %s19, 0
        %s241 = sadd.s32 %s240, %s238
        %s242 = smul.addr %s241, 4
        %s243 = scalar_lea.vmem %s3, %s242
        %s244 = sadd.s32 %s17, %s18
        %s245 = smul.u32 2, %s244
      $region32: #{vit_forward.16} parent=19 // pred_fallthru
        _
    $region20: #{vit_forward.16} parent=5 // pred_fallthru
      _
    %p246 = scmp.le.s32.totalorder 1, %s10
    %p247 = scmp.lt.s32.totalorder %s10, 9
    %p248 = pnand %p246, %p247
    %p249 = pneg %p248
    // Predicated region
    $region33: #{vit_forward.16} parent=5 // pred_check
      _
    $region34: #{vit_forward.16} parent=5 // pred_check_branch
      %251 = sbr.rel (%p248) target = $region36
    $region35: #{vit_forward.16} parent=5 // pred_region
      %s252 = ssub.s32 %s10, 1
      %s253 = smul.u32 2, %s22
      %p254 = scmp.lt.s32.totalorder %s21, 1
      %s255 = scalar_select %p254, %s21, 1
      %p256 = scmp.lt.s32.totalorder %s24, 3
      %s257 = scalar_select %p256, %s24, 3
      %p258 = scmp.lt.s32.totalorder %s253, 1
      %s259 = scalar_select %p258, %s253, 1
      %s260 = smul.addr %s257, 2
      %s261 = sadd.s32 %s259, %s260
      %s262 = smul.addr %s255, 8
      %s263 = sadd.s32 %s261, %s262
      %s264 = smul.addr %s263, 4
      %s265 = scalar_lea.vmem %s0, %s264
      %p266 = pneg %p66
      %p267 = pneg %p63
      %p268 = scmp.lt.s32.totalorder %s24, 3
      %s269 = scalar_select %p268, %s24, 3
      %p270 = scmp.lt.s32.totalorder %s23, 0
      %s271 = scalar_select %p270, %s23, 0
      %s272 = sadd.s32 %s271, %s269
      %s273 = smul.addr %s272, 4
      %s274 = scalar_lea.vmem %s1, %s273
      %p275 = pneg %p94
      %p276 = pneg %p91
      %p277 = scmp.lt.s32.totalorder %s23, 0
      %s278 = scalar_select %p277, %s23, 0
      %s279 = scalar_lea.vmem %s2, %s278
      %p280 = pneg %p120
      %p281 = pneg %p117
      %s282 = sadd.s32 %s21, %s22
      %s283 = smul.u32 2, %s282
      %p284 = scmp.lt.s32.totalorder %s283, 3
      %s285 = scalar_select %p284, %s283, 3
      %p286 = scmp.lt.s32.totalorder %s23, 0
      %s287 = scalar_select %p286, %s23, 0
      %s288 = sadd.s32 %s287, %s285
      %s289 = smul.addr %s288, 4
      %s290 = scalar_lea.vmem %s3, %s289
      %p291 = pneg %p150
      %p292 = pneg %p147
      %p293 = pneg %p180
      %p294 = pneg %p177
      %s295 = sadd.s32 %s21, %s22
      %s296 = smul.u32 2, %s295
      %p297 = scmp.lt.s32.totalorder %s296, 3
      %s298 = scalar_select %p297, %s296, 3
      %p299 = scmp.lt.s32.totalorder %s23, 0
      %s300 = scalar_select %p299, %s23, 0
      %s301 = sadd.s32 %s300, %s298
      %s302 = smul.addr %s301, 4
      %s303 = scalar_lea.vmem %s4, %s302
      %s304 = smul.u32 2, %s22
      %p305 = scmp.lt.s32.totalorder %s21, 1
      %s306 = scalar_select %p305, %s21, 1
      %p307 = scmp.lt.s32.totalorder %s24, 3
      %s308 = scalar_select %p307, %s24, 3
      %p309 = scmp.lt.s32.totalorder %s304, 1
      %s310 = scalar_select %p309, %s304, 1
      %s311 = smul.addr %s308, 2
      %s312 = sadd.s32 %s310, %s311
      %s313 = smul.addr %s306, 8
      %s314 = sadd.s32 %s312, %s313
      %s315 = smul.addr %s314, 4
      %s316 = scalar_lea.vmem %s0, %s315
      %s317 = smul.u32 2, %s22
      %p318 = scmp.lt.s32.totalorder %s24, 3
      %s319 = scalar_select %p318, %s24, 3
      %p320 = scmp.lt.s32.totalorder %s23, 0
      %s321 = scalar_select %p320, %s23, 0
      %s322 = sadd.s32 %s321, %s319
      %s323 = smul.addr %s322, 4
      %s324 = scalar_lea.vmem %s1, %s323
      %p325 = scmp.lt.s32.totalorder %s23, 0
      %s326 = scalar_select %p325, %s23, 0
      %s327 = scalar_lea.vmem %s2, %s326
      %s328 = sadd.s32 %s21, %s22
      %s329 = smul.u32 2, %s328
      %p330 = scmp.lt.s32.totalorder %s329, 3
      %s331 = scalar_select %p330, %s329, 3
      %p332 = scmp.lt.s32.totalorder %s23, 0
      %s333 = scalar_select %p332, %s23, 0
      %s334 = sadd.s32 %s333, %s331
      %s335 = smul.addr %s334, 4
      %s336 = scalar_lea.vmem %s3, %s335
      %s337 = sadd.s32 %s21, %s22
      %s338 = smul.u32 2, %s337
      %s339 = sadd.s32 %s21, %s22
      %s340 = smul.u32 2, %s339
      %p341 = scmp.lt.s32.totalorder %s340, 3
      %s342 = scalar_select %p341, %s340, 3
      %p343 = scmp.lt.s32.totalorder %s23, 0
      %s344 = scalar_select %p343, %s23, 0
      %s345 = sadd.s32 %s344, %s342
      %s346 = smul.addr %s345, 4
      %s347 = scalar_lea.vmem %s4, %s346
      %s348 = sadd.s32 %s21, %s22
      %s349 = smul.u32 2, %s348
      %p351 = scmp.eq.s32.totalorder %s24, 0
      // Predicated region
      $region37: #{vit_forward.16} parent=35 // pred_check
        %p352 = pneg %p351
      $region38: #{vit_forward.16} parent=35 // pred_check_branch
        %354 = sbr.rel (%p352) target = $region40
      $region39: #{vit_forward.16} parent=35 // pred_region
        %vm355 = vcmask 261120
        %356 = vst.msk [vmem:[#allocation2] sm:$0xff] %vm355, 0.0
        %357 = vst.msk [vmem:[#allocation2 + $0x8] sm:$0xff] %vm355, 0.0
      $region40: #{vit_forward.16} parent=35 // pred_fallthru
        _
      %v358 = vld [vmem:[#allocation2] sm:$0xff]
      %v359 = vld [vmem:[#allocation2 + $0x8] sm:$0xff]
      %v360 = vld [vmem:[%s316] sm:$0xf]
      %v361 = vld [vmem:[%s316 + $0x4] sm:$0xf]
      %v362 = vld [vmem:[%s324] sm:$0xf]
      %v365 = vunpack.c.l.b16 %v360
      %v366 = vunpack.c.l.b16 %v361
      %v367 = vpack.c.b16 %v366, %v365
      %vm368 = vcmask 64512
      %v370 = vsel %vm368, %v367, 0
      %vm372 = vcmask 1043456
      %v374 = vsel %vm372, %v362, 0
      %376 = vmatprep.subr.bf16.mxu0 0
      %377 = vmatpush1.bf16.msra.mxu0 0
      %378 = vmatprep.subr.bf16.mxu0 0
      %379 = vmatpush1.bf16.msra.mxu0 0
      %380 = vmatprep.subr.bf16.mxu0 0
      %381 = vmatpush1.bf16.msra.mxu0 0
      %382 = vmatprep.subr.bf16.mxu0 0
      %383 = vmatpush1.bf16.msra.mxu0 0
      %384 = vmatprep.subr.bf16.mxu0 0
      %385 = vmatpush1.bf16.msra.mxu0 0
      %386 = vmatprep.subr.bf16.mxu0 0
      %387 = vmatpush1.bf16.msra.mxu0 0
      %388 = vmatprep.subr.bf16.mxu0 0
      %389 = vmatpush1.bf16.msra.mxu0 0
      %390 = vmatprep.subr.bf16.mxu0 0
      %391 = vmatpush1.bf16.msra.mxu0 %v374
      %392 = vmatprep.subr.bf16.mxu0 0
      %393 = vmatpush2.bf16.msra.mxu0 0
      %394 = vmatprep.subr.bf16.mxu0 0
      %395 = vmatpush2.bf16.msra.mxu0 0
      %396 = vmatprep.subr.bf16.mxu0 0
      %397 = vmatpush2.bf16.msra.mxu0 0
      %398 = vmatprep.subr.bf16.mxu0 0
      %399 = vmatpush2.bf16.msra.mxu0 0
      %400 = vmatprep.subr.bf16.mxu0 0
      %401 = vmatpush2.bf16.msra.mxu0 0
      %402 = vmatprep.subr.bf16.mxu0 0
      %403 = vmatpush2.bf16.msra.mxu0 0
      %404 = vmatprep.subr.bf16.mxu0 0
      %405 = vmatpush2.bf16.msra.mxu0 0
      %406 = vmatprep.subr.bf16.mxu0 0
      %407 = vmatpush2.bf16.msra.mxu0 0
      %408 = vmatprep.mubr.bf16.mxu0 0
      %409 = vmatmul.mubr.bf16.gmra.mxu0 %v370
      %v410 = vpop.f32.mrf.mxu0
      %v411 = vadd.f32 0.0, %v410
      %v412 = vpop.f32.mrf.mxu0
      %v413 = vpop.f32.mrf.mxu0
      %v414 = vadd.f32 0.0, %v413
      %v415 = vpop.f32.mrf.mxu0
      %416 = vdwg.mxu0
      %v417 = vadd.f32 %v358, %v411
      %v418 = vadd.f32 %v359, %v414
      %vm419 = vcmask 261120
      %420 = vst.msk [vmem:[#allocation2] sm:$0xff] %vm419, %v417
      %421 = vst.msk [vmem:[#allocation2 + $0x8] sm:$0xff] %vm419, %v418
      %p422 = scmp.eq.s32.totalorder %s24, 3
      // Predicated region
      $region41: #{vit_forward.16} parent=35 // pred_check
        %p423 = pneg %p422
      $region42: #{vit_forward.16} parent=35 // pred_check_branch
        %425 = sbr.rel (%p423) target = $region44
      $region43: #{vit_forward.16} parent=35 // pred_region
        %v426 = vld [vmem:[#allocation2] sm:$0xff]
        %v427 = vld [vmem:[#allocation2 + $0x8] sm:$0xff]
        %v428 = vld [vmem:[%s327] sm:$0x1]
        %v430 = vlaneseq
        %v431 = vshrl.u32 %v430, 7
        %v432 = vsub.s32 0, %v431
        %v433 = vrot.slane %v428, %v432
        %v435 = vadd.f32 %v426, %v433
        %v436 = vadd.f32 %v427, %v433
        %v437 = vld [vmem:[%s336] sm:$0xf]
        %v438 = vld [vmem:[%s336 + $0x4] sm:$0xf]
        %v439 = vunpack.c.l.bf16 %v437
        %v440 = vunpack.c.l.bf16 %v438
        %v441 = vadd.f32 %v435, %v439
        %v442 = vadd.f32 %v436, %v440
        %v443 = vpack.c.bf16 %v442, %v441
        %v445 = vunpack.c.l.b16 %v443
        %v446 = vunpack.c.h.b16 %v443
        %v447 = vpack.c.b16 %v445, %v445
        %v448 = vpack.c.b16 %v446, %v446
        %vm451 = vcmask 257024
        %452 = vst.msk [vmem:[%s347] sm:$0xf] %vm451, %v447
        %453 = vst.msk [vmem:[%s347 + $0x4] sm:$0xf] %vm451, %v448
      $region44: #{vit_forward.16} parent=35 // pred_fallthru
        _
      %s454 = sadd.s32 %s21, %s22
      %s455 = smul.u32 2, %s454
      %p456 = scmp.lt.s32.totalorder %s455, 3
      %s457 = scalar_select %p456, %s455, 3
      %p458 = scmp.lt.s32.totalorder %s23, 0
      %s459 = scalar_select %p458, %s23, 0
      %s460 = sadd.s32 %s459, %s457
      %s461 = smul.addr %s460, 4
      %s462 = scalar_lea.vmem %s4, %s461
      // Predicated region
      $region45: #{vit_forward.16} parent=35 // pred_check
        %p463 = pneg %p177
      $region46: #{vit_forward.16} parent=35 // pred_check_branch
        %465 = sbr.rel (%p463) target = $region48
      $region47: #{vit_forward.16} parent=35 // pred_region
        %s466 = sadd.s32 %s21, %s22
        %s467 = smul.u32 2, %s466
      $region48: #{vit_forward.16} parent=35 // pred_fallthru
        _
    $region36: #{vit_forward.16} parent=5 // pred_fallthru
      _
    %p468 = scmp.le.s32.totalorder 2, %s10
    // Predicated region
    $region49: #{vit_forward.16} parent=5 // pred_check
      %p469 = pneg %p468
    $region50: #{vit_forward.16} parent=5 // pred_check_branch
      %471 = sbr.rel (%p469) target = $region52
    $region51: #{vit_forward.16} parent=5 // pred_region
      %s472 = ssub.s32 %s10, 2
      // Predicated region
      $region53: #{vit_forward.16} parent=51 // pred_check
        %p473 = pneg %p183
      $region54: #{vit_forward.16} parent=51 // pred_check_branch
        %475 = sbr.rel (%p473) target = $region56
      $region55: #{vit_forward.16} parent=51 // pred_region
        %s476 = sadd.s32 %s25, %s26
        %s477 = smul.u32 2, %s476
        %p478 = scmp.lt.s32.totalorder %s477, 3
        %s479 = scalar_select %p478, %s477, 3
        %p480 = scmp.lt.s32.totalorder %s27, 0
        %s481 = scalar_select %p480, %s27, 0
        %s482 = sadd.s32 %s481, %s479
        %s483 = smul.addr %s482, 4
        %s484 = scalar_lea.vmem %s4, %s483
      $region56: #{vit_forward.16} parent=51 // pred_fallthru
        _
    $region52: #{vit_forward.16} parent=5 // pred_fallthru
      _
  $region6: #{vit_forward.16} parent=0 // loop_footer
    %s14 = sadd.s32 1, %s10
  $region7: #{vit_forward.16} parent=0 // loop_footer_branch
    %9 = sbr.rel target = $region3
  $region8: #{vit_forward.16} parent=0 // loop_exit
    _

// kernel: vit_forward.15
$region0: #{vit_forward.15}
  #allocation0 [shape = 'u32[]', space=smem, size = 0x4, offset = 0x4, fixed_abs, tag = 'smem constant byte address 0x4 - core index']
  #allocation1 [shape = 'u32[144,128]{1,0:T(1,128)}', space=vmem, size = 0x12000, scoped, tag = 'internal scratch']
  #allocation2 [shape = 'f32[16,1]{1,0:T(8,128)}', space=vmem, size = 0x2000, scoped, tag = 'scratch operand']
  #allocation3 [shape = 'f32[16,1]{1,0:T(8,128)}', space=vmem, size = 0x2000, scoped, tag = 'scratch operand']
  #allocation4 [shape = 'f32[16,8]{1,0:T(8,128)}', space=vmem, size = 0x2000, scoped, tag = 'scratch operand']
  %s0 = inlined_call_operand.vmem [shape: bf16[3,2,4,16,8], index: 0, kind: input, shape index: {}, may-alias: {0,1,2}]
  %s1 = inlined_call_operand.vmem [shape: bf16[3,2,4,16,8], index: 1, kind: input, shape index: {}, may-alias: {0,1,2}]
  %s2 = inlined_call_operand.vmem [shape: bf16[3,2,4,16,8], index: 2, kind: input, shape index: {}, may-alias: {0,1,2}]
  %s3 = inlined_call_operand.vmem [shape: bf16[2,4,16,8], index: 3, kind: output, shape index: {}]
  %s4 = sld [smem:[#allocation0]]
  $region53: #{vit_forward.15} parent=0
    _
  %s6 = ssub.s32 1, %s4
  %s7 = scalar_select 0, %s6, %s4
  loop: start=0, step=1, limit=10
  $region2: #{vit_forward.15} parent=0 // loop_pre_header
    _
  $region3: #{vit_forward.15} parent=0 // loop_header
    %s9 = sphi 0, %s13
    %p10 = scmp.ge.s32.totalorder %s9, 10
    %s16 = sphi 0, %s42
    %s17 = sphi 0, %s38
    %s18 = sphi 0, %s34
    %s19 = sphi 0, %s30
    %s20 = sphi 0, %s16
    %s21 = sphi 0, %s17
    %s22 = sphi 0, %s18
    %s23 = sphi 0, %s19
    %s24 = sphi 0, %s20
    %s25 = sphi 0, %s21
    %s26 = sphi 0, %s22
    %s27 = sphi 0, %s23
    %s49 = sphi 0, %s51
    %s52 = sphi 0, %s49
    %s53 = sphi 0, %s52
    %s69 = sphi 0, %s53
    %s79 = sphi 0, %s81
    %s82 = sphi 0, %s79
    %s83 = sphi 0, %s82
    %s99 = sphi 0, %s83
    %s109 = sphi 0, %s111
    %s112 = sphi 0, %s109
    %s113 = sphi 0, %s112
    %s129 = sphi 0, %s113
    %s139 = sphi 0, %s141
    %s142 = sphi 0, %s139
    %s143 = sphi 0, %s142
    %s159 = sphi 0, %s143
  $region4: #{vit_forward.15} parent=0 // loop_header_branch
    %12 = sbr.rel (%p10) target = $region8
  $region5: #{vit_forward.15} parent=0 // loop_body
    %s14 = ssub.s32 %s9, 1
    %s15 = ssub.s32 %s9, 2
    %s28 = sadd.s32 1, %s19
    %p29 = scmp.ge.s32.totalorder %s28, 1
    %s30 = scalar_select %p29, 0, %s28
    %s31 = sadd.s32 1, %s18
    %s32 = scalar_select %p29, %s31, %s18
    %p33 = scmp.ge.s32.totalorder %s32, 1
    %s34 = scalar_select %p33, 0, %s32
    %s35 = sadd.s32 1, %s17
    %s36 = scalar_select %p33, %s35, %s17
    %p37 = scmp.ge.s32.totalorder %s36, 4
    %s38 = scalar_select %p37, 0, %s36
    %s39 = sadd.s32 1, %s16
    %s40 = scalar_select %p37, %s39, %s16
    %p41 = scmp.ge.s32.totalorder %s40, 2
    %s42 = scalar_select %p41, 0, %s40
    %s43 = ssub.s32 %s16, %s42
    %s44 = ssub.s32 %s17, %s38
    %s45 = sor.u32 %s43, %s44
    %s46 = ssub.s32 %s18, %s34
    %s47 = sor.u32 %s45, %s46
    %p48 = scmp.eq.s32.totalorder %s47, 0
    %s50 = sadd.s32 %s49, 1
    %s51 = scalar_select %p48, %s49, %s50
    %p54 = pneg %p48
    %p55 = scmp.eq.s32.totalorder %s9, 7
    %p56 = por %p54, %p55
    %p57 = scmp.ne.s32.totalorder %s49, %s52
    %p58 = scmp.eq.s32.totalorder %s9, 0
    %p59 = por %p57, %p58
    %p60 = scmp.ne.s32.totalorder %s49, %s52
    %p61 = scmp.eq.s32.totalorder %s14, 7
    %p62 = por %p60, %p61
    %p63 = scmp.ne.s32.totalorder %s52, %s53
    %p64 = scmp.eq.s32.totalorder %s14, 0
    %p65 = por %p63, %p64
    %p66 = scmp.ne.s32.totalorder %s52, %s53
    %p67 = scmp.eq.s32.totalorder %s15, 7
    %p68 = por %p66, %p67
    %p70 = scmp.ne.s32.totalorder %s53, %s69
    %p71 = scmp.eq.s32.totalorder %s15, 0
    %p72 = por %p70, %p71
    %s73 = ssub.s32 %s16, %s42
    %s74 = ssub.s32 %s17, %s38
    %s75 = sor.u32 %s73, %s74
    %s76 = ssub.s32 %s19, %s30
    %s77 = sor.u32 %s75, %s76
    %p78 = scmp.eq.s32.totalorder %s77, 0
    %s80 = sadd.s32 %s79, 1
    %s81 = scalar_select %p78, %s79, %s80
    %p84 = pneg %p78
    %p85 = scmp.eq.s32.totalorder %s9, 7
    %p86 = por %p84, %p85
    %p87 = scmp.ne.s32.totalorder %s79, %s82
    %p88 = scmp.eq.s32.totalorder %s9, 0
    %p89 = por %p87, %p88
    %p90 = scmp.ne.s32.totalorder %s79, %s82
    %p91 = scmp.eq.s32.totalorder %s14, 7
    %p92 = por %p90, %p91
    %p93 = scmp.ne.s32.totalorder %s82, %s83
    %p94 = scmp.eq.s32.totalorder %s14, 0
    %p95 = por %p93, %p94
    %p96 = scmp.ne.s32.totalorder %s82, %s83
    %p97 = scmp.eq.s32.totalorder %s15, 7
    %p98 = por %p96, %p97
    %p100 = scmp.ne.s32.totalorder %s83, %s99
    %p101 = scmp.eq.s32.totalorder %s15, 0
    %p102 = por %p100, %p101
    %s103 = ssub.s32 %s16, %s42
    %s104 = ssub.s32 %s17, %s38
    %s105 = sor.u32 %s103, %s104
    %s106 = ssub.s32 %s19, %s30
    %s107 = sor.u32 %s105, %s106
    %p108 = scmp.eq.s32.totalorder %s107, 0
    %s110 = sadd.s32 %s109, 1
    %s111 = scalar_select %p108, %s109, %s110
    %p114 = pneg %p108
    %p115 = scmp.eq.s32.totalorder %s9, 7
    %p116 = por %p114, %p115
    %p117 = scmp.ne.s32.totalorder %s109, %s112
    %p118 = scmp.eq.s32.totalorder %s9, 0
    %p119 = por %p117, %p118
    %p120 = scmp.ne.s32.totalorder %s109, %s112
    %p121 = scmp.eq.s32.totalorder %s14, 7
    %p122 = por %p120, %p121
    %p123 = scmp.ne.s32.totalorder %s112, %s113
    %p124 = scmp.eq.s32.totalorder %s14, 0
    %p125 = por %p123, %p124
    %p126 = scmp.ne.s32.totalorder %s112, %s113
    %p127 = scmp.eq.s32.totalorder %s15, 7
    %p128 = por %p126, %p127
    %p130 = scmp.ne.s32.totalorder %s113, %s129
    %p131 = scmp.eq.s32.totalorder %s15, 0
    %p132 = por %p130, %p131
    %s133 = ssub.s32 %s16, %s42
    %s134 = ssub.s32 %s17, %s38
    %s135 = sor.u32 %s133, %s134
    %s136 = ssub.s32 %s18, %s34
    %s137 = sor.u32 %s135, %s136
    %p138 = scmp.eq.s32.totalorder %s137, 0
    %s140 = sadd.s32 %s139, 1
    %s141 = scalar_select %p138, %s139, %s140
    %p144 = pneg %p138
    %p145 = scmp.eq.s32.totalorder %s9, 7
    %p146 = por %p144, %p145
    %p147 = scmp.ne.s32.totalorder %s139, %s142
    %p148 = scmp.eq.s32.totalorder %s9, 0
    %p149 = por %p147, %p148
    %p150 = scmp.ne.s32.totalorder %s139, %s142
    %p151 = scmp.eq.s32.totalorder %s14, 7
    %p152 = por %p150, %p151
    %p153 = scmp.ne.s32.totalorder %s142, %s143
    %p154 = scmp.eq.s32.totalorder %s14, 0
    %p155 = por %p153, %p154
    %p156 = scmp.ne.s32.totalorder %s142, %s143
    %p157 = scmp.eq.s32.totalorder %s15, 7
    %p158 = por %p156, %p157
    %p160 = scmp.ne.s32.totalorder %s143, %s159
    %p161 = scmp.eq.s32.totalorder %s15, 0
    %p162 = por %p160, %p161
    %p163 = scmp.le.s32.totalorder 1, %s9
    %p164 = scmp.lt.s32.totalorder %s9, 9
    %p165 = pnand %p163, %p164
    %p166 = pneg %p165
    // Predicated region
    $region9: #{vit_forward.15} parent=5 // pred_check
      _
    $region10: #{vit_forward.15} parent=5 // pred_check_branch
      %168 = sbr.rel (%p165) target = $region12
    $region11: #{vit_forward.15} parent=5 // pred_region
      %s169 = ssub.s32 %s9, 1
    $region12: #{vit_forward.15} parent=5 // pred_fallthru
      _
    %p170 = scmp.lt.s32.totalorder %s9, 8
    // Predicated region
    $region13: #{vit_forward.15} parent=5 // pred_check
      %p171 = pneg %p170
    $region14: #{vit_forward.15} parent=5 // pred_check_branch
      %173 = sbr.rel (%p171) target = $region16
    $region15: #{vit_forward.15} parent=5 // pred_region
      // Predicated region
      $region17: #{vit_forward.15} parent=15 // pred_check
        %p174 = pneg %p59
      $region18: #{vit_forward.15} parent=15 // pred_check_branch
        %176 = sbr.rel (%p174) target = $region20
      $region19: #{vit_forward.15} parent=15 // pred_region
        %s177 = smul.u32 2, %s18
        %p178 = scmp.lt.s32.totalorder %s16, 1
        %s179 = scalar_select %p178, %s16, 1
        %p180 = scmp.lt.s32.totalorder %s17, 3
        %s181 = scalar_select %p180, %s17, 3
        %p182 = scmp.lt.s32.totalorder %s177, 1
        %s183 = scalar_select %p182, %s177, 1
        %s184 = smul.addr %s181, 2
        %s185 = sadd.s32 %s183, %s184
        %s186 = smul.addr %s179, 8
        %s187 = sadd.s32 %s185, %s186
        %s188 = smul.addr %s187, 4
        %s189 = scalar_lea.vmem %s0, %s188
        %s190 = smul.u32 2, %s18
      $region20: #{vit_forward.15} parent=15 // pred_fallthru
        _
      // Predicated region
      $region21: #{vit_forward.15} parent=15 // pred_check
        %p191 = pneg %p89
      $region22: #{vit_forward.15} parent=15 // pred_check_branch
        %193 = sbr.rel (%p191) target = $region24
      $region23: #{vit_forward.15} parent=15 // pred_region
        %s194 = smul.u32 2, %s19
        %p195 = scmp.lt.s32.totalorder %s16, 1
        %s196 = scalar_select %p195, %s16, 1
        %p197 = scmp.lt.s32.totalorder %s17, 3
        %s198 = scalar_select %p197, %s17, 3
        %p199 = scmp.lt.s32.totalorder %s194, 1
        %s200 = scalar_select %p199, %s194, 1
        %s201 = smul.addr %s198, 2
        %s202 = sadd.s32 %s200, %s201
        %s203 = smul.addr %s196, 8
        %s204 = sadd.s32 %s202, %s203
        %s205 = sadd.s32 %s204, 16
        %s206 = smul.addr %s205, 4
        %s207 = scalar_lea.vmem %s1, %s206
        %s208 = smul.u32 2, %s19
      $region24: #{vit_forward.15} parent=15 // pred_fallthru
        _
      // Predicated region
      $region25: #{vit_forward.15} parent=15 // pred_check
        %p209 = pneg %p119
      $region26: #{vit_forward.15} parent=15 // pred_check_branch
        %211 = sbr.rel (%p209) target = $region28
      $region27: #{vit_forward.15} parent=15 // pred_region
        %s212 = smul.u32 2, %s19
        %p213 = scmp.lt.s32.totalorder %s16, 1
        %s214 = scalar_select %p213, %s16, 1
        %p215 = scmp.lt.s32.totalorder %s17, 3
        %s216 = scalar_select %p215, %s17, 3
        %p217 = scmp.lt.s32.totalorder %s212, 1
        %s218 = scalar_select %p217, %s212, 1
        %s219 = smul.addr %s216, 2
        %s220 = sadd.s32 %s218, %s219
        %s221 = smul.addr %s214, 8
        %s222 = sadd.s32 %s220, %s221
        %s223 = sadd.s32 %s222, 32
        %s224 = smul.addr %s223, 4
        %s225 = scalar_lea.vmem %s2, %s224
        %s226 = smul.u32 2, %s19
      $region28: #{vit_forward.15} parent=15 // pred_fallthru
        _
    $region16: #{vit_forward.15} parent=5 // pred_fallthru
      _
    %p227 = scmp.le.s32.totalorder 1, %s9
    %p228 = scmp.lt.s32.totalorder %s9, 9
    %p229 = pnand %p227, %p228
    %p230 = pneg %p229
    // Predicated region
    $region29: #{vit_forward.15} parent=5 // pred_check
      _
    $region30: #{vit_forward.15} parent=5 // pred_check_branch
      %232 = sbr.rel (%p229) target = $region32
    $region31: #{vit_forward.15} parent=5 // pred_region
      %s233 = ssub.s32 %s9, 1
      %s234 = smul.u32 2, %s22
      %p235 = scmp.lt.s32.totalorder %s20, 1
      %s236 = scalar_select %p235, %s20, 1
      %p237 = scmp.lt.s32.totalorder %s21, 3
      %s238 = scalar_select %p237, %s21, 3
      %p239 = scmp.lt.s32.totalorder %s234, 1
      %s240 = scalar_select %p239, %s234, 1
      %s241 = smul.addr %s238, 2
      %s242 = sadd.s32 %s240, %s241
      %s243 = smul.addr %s236, 8
      %s244 = sadd.s32 %s242, %s243
      %s245 = smul.addr %s244, 4
      %s246 = scalar_lea.vmem %s0, %s245
      %p247 = pneg %p65
      %p248 = pneg %p62
      %s249 = smul.u32 2, %s23
      %p250 = scmp.lt.s32.totalorder %s20, 1
      %s251 = scalar_select %p250, %s20, 1
      %p252 = scmp.lt.s32.totalorder %s21, 3
      %s253 = scalar_select %p252, %s21, 3
      %p254 = scmp.lt.s32.totalorder %s249, 1
      %s255 = scalar_select %p254, %s249, 1
      %s256 = smul.addr %s253, 2
      %s257 = sadd.s32 %s255, %s256
      %s258 = smul.addr %s251, 8
      %s259 = sadd.s32 %s257, %s258
      %s260 = sadd.s32 %s259, 16
      %s261 = smul.addr %s260, 4
      %s262 = scalar_lea.vmem %s1, %s261
      %p263 = pneg %p95
      %p264 = pneg %p92
      %s265 = smul.u32 2, %s23
      %p266 = scmp.lt.s32.totalorder %s20, 1
      %s267 = scalar_select %p266, %s20, 1
      %p268 = scmp.lt.s32.totalorder %s21, 3
      %s269 = scalar_select %p268, %s21, 3
      %p270 = scmp.lt.s32.totalorder %s265, 1
      %s271 = scalar_select %p270, %s265, 1
      %s272 = smul.addr %s269, 2
      %s273 = sadd.s32 %s271, %s272
      %s274 = smul.addr %s267, 8
      %s275 = sadd.s32 %s273, %s274
      %s276 = sadd.s32 %s275, 32
      %s277 = smul.addr %s276, 4
      %s278 = scalar_lea.vmem %s2, %s277
      %p279 = pneg %p125
      %p280 = pneg %p122
      %p281 = pneg %p155
      %p282 = pneg %p152
      %s283 = smul.u32 2, %s22
      %p284 = scmp.lt.s32.totalorder %s20, 1
      %s285 = scalar_select %p284, %s20, 1
      %p286 = scmp.lt.s32.totalorder %s21, 3
      %s287 = scalar_select %p286, %s21, 3
      %p288 = scmp.lt.s32.totalorder %s283, 1
      %s289 = scalar_select %p288, %s283, 1
      %s290 = smul.addr %s287, 2
      %s291 = sadd.s32 %s289, %s290
      %s292 = smul.addr %s285, 8
      %s293 = sadd.s32 %s291, %s292
      %s294 = smul.addr %s293, 4
      %s295 = scalar_lea.vmem %s3, %s294
      %s296 = smul.u32 2, %s22
      %p297 = scmp.lt.s32.totalorder %s20, 1
      %s298 = scalar_select %p297, %s20, 1
      %p299 = scmp.lt.s32.totalorder %s21, 3
      %s300 = scalar_select %p299, %s21, 3
      %p301 = scmp.lt.s32.totalorder %s296, 1
      %s302 = scalar_select %p301, %s296, 1
      %s303 = smul.addr %s300, 2
      %s304 = sadd.s32 %s302, %s303
      %s305 = smul.addr %s298, 8
      %s306 = sadd.s32 %s304, %s305
      %s307 = smul.addr %s306, 4
      %s308 = scalar_lea.vmem %s0, %s307
      %s309 = smul.u32 2, %s22
      %s310 = smul.u32 2, %s23
      %p311 = scmp.lt.s32.totalorder %s20, 1
      %s312 = scalar_select %p311, %s20, 1
      %p313 = scmp.lt.s32.totalorder %s21, 3
      %s314 = scalar_select %p313, %s21, 3
      %p315 = scmp.lt.s32.totalorder %s310, 1
      %s316 = scalar_select %p315, %s310, 1
      %s317 = smul.addr %s314, 2
      %s318 = sadd.s32 %s316, %s317
      %s319 = smul.addr %s312, 8
      %s320 = sadd.s32 %s318, %s319
      %s321 = sadd.s32 %s320, 16
      %s322 = smul.addr %s321, 4
      %s323 = scalar_lea.vmem %s1, %s322
      %s324 = smul.u32 2, %s23
      %s325 = smul.u32 2, %s23
      %p326 = scmp.lt.s32.totalorder %s20, 1
      %s327 = scalar_select %p326, %s20, 1
      %p328 = scmp.lt.s32.totalorder %s21, 3
      %s329 = scalar_select %p328, %s21, 3
      %p330 = scmp.lt.s32.totalorder %s325, 1
      %s331 = scalar_select %p330, %s325, 1
      %s332 = smul.addr %s329, 2
      %s333 = sadd.s32 %s331, %s332
      %s334 = smul.addr %s327, 8
      %s335 = sadd.s32 %s333, %s334
      %s336 = sadd.s32 %s335, 32
      %s337 = smul.addr %s336, 4
      %s338 = scalar_lea.vmem %s2, %s337
      %s339 = smul.u32 2, %s23
      %s340 = smul.u32 2, %s22
      %p341 = scmp.lt.s32.totalorder %s20, 1
      %s342 = scalar_select %p341, %s20, 1
      %p343 = scmp.lt.s32.totalorder %s21, 3
      %s344 = scalar_select %p343, %s21, 3
      %p345 = scmp.lt.s32.totalorder %s340, 1
      %s346 = scalar_select %p345, %s340, 1
      %s347 = smul.addr %s344, 2
      %s348 = sadd.s32 %s346, %s347
      %s349 = smul.addr %s342, 8
      %s350 = sadd.s32 %s348, %s349
      %s351 = smul.addr %s350, 4
      %s352 = scalar_lea.vmem %s3, %s351
      %s353 = smul.u32 2, %s22
      %p355 = scmp.eq.s32.totalorder %s23, 0
      // Predicated region
      $region33: #{vit_forward.15} parent=31 // pred_check
        %p356 = pneg %p355
      $region34: #{vit_forward.15} parent=31 // pred_check_branch
        %358 = sbr.rel (%p356) target = $region36
      $region35: #{vit_forward.15} parent=31 // pred_region
        %vm359 = vcmask 7168
        %360 = vst.msk [vmem:[#allocation2] sm:$0xff] %vm359, -inf
        %361 = vst.msk [vmem:[#allocation2 + $0x8] sm:$0xff] %vm359, -inf
        %362 = vst.msk [vmem:[#allocation3] sm:$0xff] %vm359, 0.0
        %363 = vst.msk [vmem:[#allocation3 + $0x8] sm:$0xff] %vm359, 0.0
        %vm364 = vcmask 64512
        %365 = vst.msk [vmem:[#allocation4] sm:$0xff] %vm364, 0.0
        %366 = vst.msk [vmem:[#allocation4 + $0x8] sm:$0xff] %vm364, 0.0
      $region36: #{vit_forward.15} parent=31 // pred_fallthru
        _
      %v367 = vld [vmem:[%s308] sm:$0xf]
      %v368 = vld [vmem:[%s308 + $0x4] sm:$0xf]
      %v369 = vld [vmem:[%s323] sm:$0xf]
      %v370 = vld [vmem:[%s323 + $0x4] sm:$0xf]
      %v371 = vld [vmem:[%s338] sm:$0xf]
      %v372 = vld [vmem:[%s338 + $0x4] sm:$0xf]
      %v375 = vunpack.c.l.b16 %v367
      %v376 = vunpack.c.l.b16 %v368
      %v377 = vpack.c.b16 %v376, %v375
      %v380 = vunpack.c.l.b16 %v369
      %v381 = vunpack.c.l.b16 %v370
      %v382 = vpack.c.b16 %v381, %v380
      %vm383 = vcmask 64512
      %v385 = vsel %vm383, %v377, 0
      %v388 = vsel %vm383, %v382, 0
      %390 = vmatprep.subr.bf16.mxu0 0
      %391 = vmatpush1.bf16.xpose.msra.mxu0 0
      %392 = vmatprep.subr.bf16.mxu0 0
      %393 = vmatpush1.bf16.xpose.msra.mxu0 0
      %394 = vmatprep.subr.bf16.mxu0 0
      %395 = vmatpush1.bf16.xpose.msra.mxu0 0
      %396 = vmatprep.subr.bf16.mxu0 0
      %397 = vmatpush1.bf16.xpose.msra.mxu0 0
      %398 = vmatprep.subr.bf16.mxu0 0
      %399 = vmatpush1.bf16.xpose.msra.mxu0 0
      %400 = vmatprep.subr.bf16.mxu0 0
      %401 = vmatpush1.bf16.xpose.msra.mxu0 0
      %402 = vmatprep.subr.bf16.mxu0 0
      %403 = vmatpush1.bf16.xpose.msra.mxu0 0
      %404 = vmatprep.subr.bf16.mxu0 0
      %405 = vmatpush1.bf16.xpose.msra.mxu0 %v388
      %406 = vmatprep.subr.bf16.mxu0 0
      %407 = vmatpush2.bf16.xpose.msra.mxu0 0
      %408 = vmatprep.subr.bf16.mxu0 0
      %409 = vmatpush2.bf16.xpose.msra.mxu0 0
      %410 = vmatprep.subr.bf16.mxu0 0
      %411 = vmatpush2.bf16.xpose.msra.mxu0 0
      %412 = vmatprep.subr.bf16.mxu0 0
      %413 = vmatpush2.bf16.xpose.msra.mxu0 0
      %414 = vmatprep.subr.bf16.mxu0 0
      %415 = vmatpush2.bf16.xpose.msra.mxu0 0
      %416 = vmatprep.subr.bf16.mxu0 0
      %417 = vmatpush2.bf16.xpose.msra.mxu0 0
      %418 = vmatprep.subr.bf16.mxu0 0
      %419 = vmatpush2.bf16.xpose.msra.mxu0 0
      %420 = vmatprep.subr.bf16.mxu0 0
      %421 = vmatpush2.bf16.xpose.msra.mxu0 0
      %422 = vmatprep.mubr.bf16.mxu0 0
      %423 = vmatmul.mubr.bf16.gmra.mxu0 %v385
      %v424 = vpop.f32.mrf.mxu0
      %v425 = vadd.f32 0.0, %v424
      %v426 = vpop.f32.mrf.mxu0
      %v427 = vpop.f32.mrf.mxu0
      %v428 = vadd.f32 0.0, %v427
      %v429 = vpop.f32.mrf.mxu0
      %430 = vdwg.mxu0
      %v431 = vmul.f32 %v425, 0.35355338
      %v432 = vmul.f32 %v428, 0.35355338
      %v433 = vld [vmem:[#allocation2] sm:$0xff]
      %v434 = vld [vmem:[#allocation2 + $0x8] sm:$0xff]
      %vm435 = vcmask 130048
      %v436 = vsel %vm435, %v431, -inf
      %437 = vmax.xlane.f32.xlu0 %v436
      %v438 = vpop.xlane.xlu0 %437
      %v439 = vsel %vm435, %v432, -inf
      %440 = vmax.xlane.f32.xlu0 %v439
      %v441 = vpop.xlane.xlu0 %440
      %v442 = vmax.f32 %v433, %v438
      %v443 = vmax.f32 %v434, %v441
      %v444 = vsub.f32 %v433, %v442
      %v445 = vsub.f32 %v434, %v443
      %v446 = vmul.f32 %v444, 1.442695
      %v447 = vpow.pop %v446
      %v448 = vmul.f32 %v445, 1.442695
      %v449 = vpow.pop %v448
      %451 = vset.pattern.permute.xlu0 0
      %452 = vperm.xlu0 %451, %v442
      %v453 = vpop.permute.xlu0 %452
      %456 = vset.pattern.permute.xlu0 0
      %457 = vperm.xlu0 %456, %v443
      %v458 = vpop.permute.xlu0 %457
      %v460 = vsub.f32 %v431, %v453
      %v461 = vsub.f32 %v432, %v458
      %v462 = vmul.f32 %v460, 1.442695
      %v463 = vpow.pop %v462
      %v464 = vmul.f32 %v461, 1.442695
      %v465 = vpow.pop %v464
      %v466 = vld [vmem:[#allocation3] sm:$0xff]
      %v467 = vld [vmem:[#allocation3 + $0x8] sm:$0xff]
      %v468 = vmul.f32 %v447, %v466
      %v469 = vmul.f32 %v449, %v467
      %v470 = vsel %vm435, %v463, 0.0
      %471 = vadd.xlane.f32.xlu0 %v470
      %v472 = vpop.xlane.xlu0 %471
      %v473 = vsel %vm435, %v465, 0.0
      %474 = vadd.xlane.f32.xlu0 %v473
      %v475 = vpop.xlane.xlu0 %474
      %v476 = vadd.f32 %v468, %v472
      %v477 = vadd.f32 %v469, %v475
      %vm478 = vcmask 7168
      %479 = vst.msk [vmem:[#allocation3] sm:$0xff] %vm478, %v476
      %480 = vst.msk [vmem:[#allocation3 + $0x8] sm:$0xff] %vm478, %v477
      %v481 = vld [vmem:[#allocation4] sm:$0xff]
      %v482 = vld [vmem:[#allocation4 + $0x8] sm:$0xff]
      %484 = vset.pattern.permute.xlu0 0
      %485 = vperm.xlu0 %484, %v447
      %v486 = vpop.permute.xlu0 %485
      %489 = vset.pattern.permute.xlu0 0
      %490 = vperm.xlu0 %489, %v449
      %v491 = vpop.permute.xlu0 %490
      %v493 = vmul.f32 %v486, %v481
      %v494 = vmul.f32 %v491, %v482
      %v495 = vpack.c.bf16 %v465, %v463
      %v498 = vunpack.c.l.b16 %v371
      %v499 = vunpack.c.l.b16 %v372
      %v500 = vpack.c.b16 %v499, %v498
      %v503 = vsel %vm435, %v495, 0
      %505 = vmatprep.subr.bf16.mxu0 0
      %506 = vmatpush1.bf16.msra.mxu0 0
      %507 = vmatprep.subr.bf16.mxu0 0
      %508 = vmatpush1.bf16.msra.mxu0 0
      %509 = vmatprep.subr.bf16.mxu0 0
      %510 = vmatpush1.bf16.msra.mxu0 0
      %511 = vmatprep.subr.bf16.mxu0 0
      %512 = vmatpush1.bf16.msra.mxu0 0
      %513 = vmatprep.subr.bf16.mxu0 0
      %514 = vmatpush1.bf16.msra.mxu0 0
      %515 = vmatprep.subr.bf16.mxu0 0
      %516 = vmatpush1.bf16.msra.mxu0 0
      %517 = vmatprep.subr.bf16.mxu0 0
      %518 = vmatpush1.bf16.msra.mxu0 0
      %519 = vmatprep.subr.bf16.mxu0 0
      %520 = vmatpush1.bf16.msra.mxu0 %v500
      %521 = vmatprep.subr.bf16.mxu0 0
      %522 = vmatpush2.bf16.msra.mxu0 0
      %523 = vmatprep.subr.bf16.mxu0 0
      %524 = vmatpush2.bf16.msra.mxu0 0
      %525 = vmatprep.subr.bf16.mxu0 0
      %526 = vmatpush2.bf16.msra.mxu0 0
      %527 = vmatprep.subr.bf16.mxu0 0
      %528 = vmatpush2.bf16.msra.mxu0 0
      %529 = vmatprep.subr.bf16.mxu0 0
      %530 = vmatpush2.bf16.msra.mxu0 0
      %531 = vmatprep.subr.bf16.mxu0 0
      %532 = vmatpush2.bf16.msra.mxu0 0
      %533 = vmatprep.subr.bf16.mxu0 0
      %534 = vmatpush2.bf16.msra.mxu0 0
      %535 = vmatprep.subr.bf16.mxu0 0
      %536 = vmatpush2.bf16.msra.mxu0 0
      %537 = vmatprep.mubr.bf16.mxu0 0
      %538 = vmatmul.mubr.bf16.gmra.mxu0 %v503
      %v539 = vpop.f32.mrf.mxu0
      %v540 = vadd.f32 0.0, %v539
      %v541 = vpop.f32.mrf.mxu0
      %v542 = vpop.f32.mrf.mxu0
      %v543 = vadd.f32 0.0, %v542
      %v544 = vpop.f32.mrf.mxu0
      %545 = vdwg.mxu0
      %v546 = vadd.f32 %v493, %v540
      %v547 = vadd.f32 %v494, %v543
      %548 = vst.msk [vmem:[#allocation4] sm:$0xff] %vm383, %v546
      %549 = vst.msk [vmem:[#allocation4 + $0x8] sm:$0xff] %vm383, %v547
      %550 = vst.msk [vmem:[#allocation2] sm:$0xff] %vm478, %v442
      %551 = vst.msk [vmem:[#allocation2 + $0x8] sm:$0xff] %vm478, %v443
      // Predicated region
      $region37: #{vit_forward.15} parent=31 // pred_check
        %p552 = pneg %p355
      $region38: #{vit_forward.15} parent=31 // pred_check_branch
        %554 = sbr.rel (%p552) target = $region40
      $region39: #{vit_forward.15} parent=31 // pred_region
        %v555 = vld [vmem:[#allocation3] sm:$0xff]
        %v556 = vld [vmem:[#allocation3 + $0x8] sm:$0xff]
        %v557 = vrcp.pop %v555
        %v558 = vrcp.pop %v556
        %v559 = vld [vmem:[#allocation4] sm:$0xff]
        %v560 = vld [vmem:[#allocation4 + $0x8] sm:$0xff]
        %562 = vset.pattern.permute.xlu0 0
        %563 = vperm.xlu0 %562, %v557
        %v564 = vpop.permute.xlu0 %563
        %567 = vset.pattern.permute.xlu0 0
        %568 = vperm.xlu0 %567, %v558
        %v569 = vpop.permute.xlu0 %568
        %v571 = vmul.f32 %v559, %v564
        %v572 = vmul.f32 %v560, %v569
        %v573 = vpack.c.bf16 %v572, %v571
        %v575 = vunpack.c.l.b16 %v573
        %v576 = vunpack.c.h.b16 %v573
        %v577 = vpack.c.b16 %v575, %v575
        %v578 = vpack.c.b16 %v576, %v576
        %vm581 = vcmask 60416
        %582 = vst.msk [vmem:[%s352] sm:$0xf] %vm581, %v577
        %583 = vst.msk [vmem:[%s352 + $0x4] sm:$0xf] %vm581, %v578
      $region40: #{vit_forward.15} parent=31 // pred_fallthru
        _
      %s584 = smul.u32 2, %s22
      %p585 = scmp.lt.s32.totalorder %s20, 1
      %s586 = scalar_select %p585, %s20, 1
      %p587 = scmp.lt.s32.totalorder %s21, 3
      %s588 = scalar_select %p587, %s21, 3
      %p589 = scmp.lt.s32.totalorder %s584, 1
      %s590 = scalar_select %p589, %s584, 1
      %s591 = smul.addr %s588, 2
      %s592 = sadd.s32 %s590, %s591
      %s593 = smul.addr %s586, 8
      %s594 = sadd.s32 %s592, %s593
      %s595 = smul.addr %s594, 4
      %s596 = scalar_lea.vmem %s3, %s595
      // Predicated region
      $region41: #{vit_forward.15} parent=31 // pred_check
        %p597 = pneg %p152
      $region42: #{vit_forward.15} parent=31 // pred_check_branch
        %599 = sbr.rel (%p597) target = $region44
      $region43: #{vit_forward.15} parent=31 // pred_region
        %s600 = smul.u32 2, %s22
      $region44: #{vit_forward.15} parent=31 // pred_fallthru
        _
    $region32: #{vit_forward.15} parent=5 // pred_fallthru
      _
    %p601 = scmp.le.s32.totalorder 2, %s9
    // Predicated region
    $region45: #{vit_forward.15} parent=5 // pred_check
      %p602 = pneg %p601
    $region46: #{vit_forward.15} parent=5 // pred_check_branch
      %604 = sbr.rel (%p602) target = $region48
    $region47: #{vit_forward.15} parent=5 // pred_region
      %s605 = ssub.s32 %s9, 2
      // Predicated region
      $region49: #{vit_forward.15} parent=47 // pred_check
        %p606 = pneg %p158
      $region50: #{vit_forward.15} parent=47 // pred_check_branch
        %608 = sbr.rel (%p606) target = $region52
      $region51: #{vit_forward.15} parent=47 // pred_region
        %s609 = smul.u32 2, %s26
        %p610 = scmp.lt.s32.totalorder %s24, 1
        %s611 = scalar_select %p610, %s24, 1
        %p612 = scmp.lt.s32.totalorder %s25, 3
        %s613 = scalar_select %p612, %s25, 3
        %p614 = scmp.lt.s32.totalorder %s609, 1
        %s615 = scalar_select %p614, %s609, 1
        %s616 = smul.addr %s613, 2
        %s617 = sadd.s32 %s615, %s616
        %s618 = smul.addr %s611, 8
        %s619 = sadd.s32 %s617, %s618
        %s620 = smul.addr %s619, 4
        %s621 = scalar_lea.vmem %s3, %s620
      $region52: #{vit_forward.15} parent=47 // pred_fallthru
        _
    $region48: #{vit_forward.15} parent=5 // pred_fallthru
      _
  $region6: #{vit_forward.15} parent=0 // loop_footer
    %s13 = sadd.s32 1, %s9
  $region7: #{vit_forward.15} parent=0 // loop_footer_branch
    %8 = sbr.rel target = $region3
  $region8: #{vit_forward.15} parent=0 // loop_exit
    _

// kernel: vit_forward.18
$region0: #{vit_forward.18}
  #allocation0 [shape = 'u32[]', space=smem, size = 0x4, offset = 0x4, fixed_abs, tag = 'smem constant byte address 0x4 - core index']
  #allocation1 [shape = 'u32[144,128]{1,0:T(1,128)}', space=vmem, size = 0x12000, scoped, tag = 'internal scratch']
  #allocation2 [shape = 'f32[32,32]{1,0:T(8,128)}', space=vmem, size = 0x4000, scoped, tag = 'scratch operand']
  %s0 = inlined_call_operand.vmem [shape: bf16[32,128], index: 0, kind: input, shape index: {}]
  %s1 = inlined_call_operand.vmem [shape: bf16[128,32], index: 1, kind: input, shape index: {}]
  %s2 = inlined_call_operand.vmem [shape: f32[1,32], index: 2, kind: input, shape index: {}]
  %s3 = inlined_call_operand.vmem [shape: bf16[32,32], index: 3, kind: input, shape index: {}]
  %s4 = inlined_call_operand.vmem [shape: bf16[32,32], index: 4, kind: output, shape index: {}]
  %s5 = sld [smem:[#allocation0]]
  $region34: #{vit_forward.18} parent=0
    _
  %s7 = ssub.s32 1, %s5
  %s8 = scalar_select 0, %s7, %s5
  // Predicated region
  $region2: #{vit_forward.18} parent=0 // pred_check
    _
  $region3: #{vit_forward.18} parent=0 // pred_check_branch
    %10 = sbr.rel (0) target = $region5
  $region4: #{vit_forward.18} parent=0 // pred_region
    _
  $region5: #{vit_forward.18} parent=0 // pred_fallthru
    _
  // Predicated region
  $region6: #{vit_forward.18} parent=0 // pred_check
    _
  $region7: #{vit_forward.18} parent=0 // pred_check_branch
    %12 = sbr.rel (0) target = $region9
  $region8: #{vit_forward.18} parent=0 // pred_region
    _
  $region9: #{vit_forward.18} parent=0 // pred_fallthru
    _
  // Predicated region
  $region10: #{vit_forward.18} parent=0 // pred_check
    _
  $region11: #{vit_forward.18} parent=0 // pred_check_branch
    %14 = sbr.rel (0) target = $region13
  $region12: #{vit_forward.18} parent=0 // pred_region
    _
  $region13: #{vit_forward.18} parent=0 // pred_fallthru
    _
  // Predicated region
  $region14: #{vit_forward.18} parent=0 // pred_check
    _
  $region15: #{vit_forward.18} parent=0 // pred_check_branch
    %16 = sbr.rel (0) target = $region17
  $region16: #{vit_forward.18} parent=0 // pred_region
    _
  $region17: #{vit_forward.18} parent=0 // pred_fallthru
    _
  %p18 = scmp.eq.s32.totalorder 0, 0
  // Predicated region
  $region18: #{vit_forward.18} parent=0 // pred_check
    %p19 = pneg %p18
  $region19: #{vit_forward.18} parent=0 // pred_check_branch
    %21 = sbr.rel (%p19) target = $region21
  $region20: #{vit_forward.18} parent=0 // pred_region
    %vm22 = vcmask 261120
    %23 = vst.msk [vmem:[#allocation2] sm:$0xff] %vm22, 0.0
    %24 = vst.msk [vmem:[#allocation2 + $0x8] sm:$0xff] %vm22, 0.0
    %25 = vst.msk [vmem:[#allocation2 + $0x10] sm:$0xff] %vm22, 0.0
    %26 = vst.msk [vmem:[#allocation2 + $0x18] sm:$0xff] %vm22, 0.0
  $region21: #{vit_forward.18} parent=0 // pred_fallthru
    _
  %v27 = vld [vmem:[%s0] sm:$0xf]
  %v28 = vld [vmem:[%s0 + $0x4] sm:$0xf]
  %v29 = vld [vmem:[%s0 + $0x8] sm:$0xf]
  %v30 = vld [vmem:[%s0 + $0xc] sm:$0xf]
  %v31 = vld [vmem:[#allocation2] sm:$0xff]
  %v32 = vld [vmem:[#allocation2 + $0x8] sm:$0xff]
  %v33 = vld [vmem:[#allocation2 + $0x10] sm:$0xff]
  %v34 = vld [vmem:[#allocation2 + $0x18] sm:$0xff]
  %v35 = vld [vmem:[%s1] sm:$0xf]
  %v36 = vld [vmem:[%s1 + $0x4] sm:$0xf]
  %v37 = vld [vmem:[%s1 + $0x8] sm:$0xf]
  %v38 = vld [vmem:[%s1 + $0xc] sm:$0xf]
  %v39 = vld [vmem:[%s1 + $0x10] sm:$0xf]
  %v40 = vld [vmem:[%s1 + $0x14] sm:$0xf]
  %v41 = vld [vmem:[%s1 + $0x18] sm:$0xf]
  %v42 = vld [vmem:[%s1 + $0x1c] sm:$0xf]
  %v43 = vld [vmem:[%s1 + $0x20] sm:$0xf]
  %v44 = vld [vmem:[%s1 + $0x24] sm:$0xf]
  %v45 = vld [vmem:[%s1 + $0x28] sm:$0xf]
  %v46 = vld [vmem:[%s1 + $0x2c] sm:$0xf]
  %v47 = vld [vmem:[%s1 + $0x30] sm:$0xf]
  %v48 = vld [vmem:[%s1 + $0x34] sm:$0xf]
  %v49 = vld [vmem:[%s1 + $0x38] sm:$0xf]
  %v50 = vld [vmem:[%s1 + $0x3c] sm:$0xf]
  %v55 = vunpack.c.l.b16 %v27
  %v56 = vunpack.c.l.b16 %v28
  %v57 = vunpack.c.l.b16 %v29
  %v58 = vunpack.c.l.b16 %v30
  %v59 = vpack.c.b16 %v56, %v55
  %v60 = vpack.c.b16 %v58, %v57
  %v79 = vunpack.c.l.b16 %v35
  %v80 = vunpack.c.l.b16 %v36
  %v81 = vunpack.c.l.b16 %v37
  %v82 = vunpack.c.l.b16 %v38
  %v83 = vunpack.c.l.b16 %v39
  %v84 = vunpack.c.l.b16 %v40
  %v85 = vunpack.c.l.b16 %v41
  %v86 = vunpack.c.l.b16 %v42
  %v87 = vunpack.c.l.b16 %v43
  %v88 = vunpack.c.l.b16 %v44
  %v89 = vunpack.c.l.b16 %v45
  %v90 = vunpack.c.l.b16 %v46
  %v91 = vunpack.c.l.b16 %v47
  %v92 = vunpack.c.l.b16 %v48
  %v93 = vunpack.c.l.b16 %v49
  %v94 = vunpack.c.l.b16 %v50
  %v95 = vpack.c.b16 %v80, %v79
  %v96 = vpack.c.b16 %v82, %v81
  %v97 = vpack.c.b16 %v84, %v83
  %v98 = vpack.c.b16 %v86, %v85
  %v99 = vpack.c.b16 %v88, %v87
  %v100 = vpack.c.b16 %v90, %v89
  %v101 = vpack.c.b16 %v92, %v91
  %v102 = vpack.c.b16 %v94, %v93
  %111 = vmatprep.subr.bf16.mxu0 0
  %112 = vmatpush1.bf16.msra.mxu0 %v102
  %113 = vmatprep.subr.bf16.mxu0 0
  %114 = vmatpush1.bf16.msra.mxu0 %v101
  %115 = vmatprep.subr.bf16.mxu0 0
  %116 = vmatpush1.bf16.msra.mxu0 %v100
  %117 = vmatprep.subr.bf16.mxu0 0
  %118 = vmatpush1.bf16.msra.mxu0 %v99
  %119 = vmatprep.subr.bf16.mxu0 0
  %120 = vmatpush1.bf16.msra.mxu0 %v98
  %121 = vmatprep.subr.bf16.mxu0 0
  %122 = vmatpush1.bf16.msra.mxu0 %v97
  %123 = vmatprep.subr.bf16.mxu0 0
  %124 = vmatpush1.bf16.msra.mxu0 %v96
  %125 = vmatprep.subr.bf16.mxu0 0
  %126 = vmatpush1.bf16.msra.mxu0 %v95
  %127 = vmatprep.subr.bf16.mxu0 0
  %128 = vmatpush2.bf16.msra.mxu0 0
  %129 = vmatprep.subr.bf16.mxu0 0
  %130 = vmatpush2.bf16.msra.mxu0 0
  %131 = vmatprep.subr.bf16.mxu0 0
  %132 = vmatpush2.bf16.msra.mxu0 0
  %133 = vmatprep.subr.bf16.mxu0 0
  %134 = vmatpush2.bf16.msra.mxu0 0
  %135 = vmatprep.subr.bf16.mxu0 0
  %136 = vmatpush2.bf16.msra.mxu0 0
  %137 = vmatprep.subr.bf16.mxu0 0
  %138 = vmatpush2.bf16.msra.mxu0 0
  %139 = vmatprep.subr.bf16.mxu0 0
  %140 = vmatpush2.bf16.msra.mxu0 0
  %141 = vmatprep.subr.bf16.mxu0 0
  %142 = vmatpush2.bf16.msra.mxu0 0
  %143 = vmatprep.mubr.bf16.mxu0 0
  %144 = vmatmul.mubr.bf16.gmra.mxu0 %v59
  %v145 = vpop.f32.mrf.mxu0
  %v146 = vadd.f32 0.0, %v145
  %v147 = vpop.f32.mrf.mxu0
  %v148 = vpop.f32.mrf.mxu0
  %v149 = vadd.f32 0.0, %v148
  %v150 = vpop.f32.mrf.mxu0
  %151 = vmatprep.mubr.bf16.mxu0 0
  %152 = vmatmul.mubr.bf16.gmra.mxu0 %v60
  %v153 = vpop.f32.mrf.mxu0
  %v154 = vadd.f32 0.0, %v153
  %v155 = vpop.f32.mrf.mxu0
  %v156 = vpop.f32.mrf.mxu0
  %v157 = vadd.f32 0.0, %v156
  %v158 = vpop.f32.mrf.mxu0
  %159 = vdwg.mxu0
  %v160 = vadd.f32 %v31, %v146
  %v161 = vadd.f32 %v32, %v149
  %v162 = vadd.f32 %v33, %v154
  %v163 = vadd.f32 %v34, %v157
  %vm164 = vcmask 261120
  %165 = vst.msk [vmem:[#allocation2] sm:$0xff] %vm164, %v160
  %166 = vst.msk [vmem:[#allocation2 + $0x8] sm:$0xff] %vm164, %v161
  %167 = vst.msk [vmem:[#allocation2 + $0x10] sm:$0xff] %vm164, %v162
  %168 = vst.msk [vmem:[#allocation2 + $0x18] sm:$0xff] %vm164, %v163
  // Predicated region
  $region22: #{vit_forward.18} parent=0 // pred_check
    %p169 = pneg %p18
  $region23: #{vit_forward.18} parent=0 // pred_check_branch
    %171 = sbr.rel (%p169) target = $region25
  $region24: #{vit_forward.18} parent=0 // pred_region
    %v172 = vld [vmem:[#allocation2] sm:$0xff]
    %v173 = vld [vmem:[#allocation2 + $0x8] sm:$0xff]
    %v174 = vld [vmem:[#allocation2 + $0x10] sm:$0xff]
    %v175 = vld [vmem:[#allocation2 + $0x18] sm:$0xff]
    %v176 = vld [vmem:[%s2] sm:$0x1]
    %v178 = vlaneseq
    %v179 = vshrl.u32 %v178, 7
    %v180 = vsub.s32 0, %v179
    %v181 = vrot.slane %v176, %v180
    %v183 = vadd.f32 %v172, %v181
    %v184 = vadd.f32 %v173, %v181
    %v185 = vadd.f32 %v174, %v181
    %v186 = vadd.f32 %v175, %v181
    %v187 = vld [vmem:[%s3] sm:$0xf]
    %v188 = vld [vmem:[%s3 + $0x4] sm:$0xf]
    %v189 = vld [vmem:[%s3 + $0x8] sm:$0xf]
    %v190 = vld [vmem:[%s3 + $0xc] sm:$0xf]
    %v191 = vunpack.c.l.bf16 %v187
    %v192 = vunpack.c.l.bf16 %v188
    %v193 = vunpack.c.l.bf16 %v189
    %v194 = vunpack.c.l.bf16 %v190
    %v195 = vadd.f32 %v183, %v191
    %v196 = vadd.f32 %v184, %v192
    %v197 = vadd.f32 %v185, %v193
    %v198 = vadd.f32 %v186, %v194
    %v199 = vpack.c.bf16 %v196, %v195
    %v200 = vpack.c.bf16 %v198, %v197
    %v203 = vunpack.c.l.b16 %v199
    %v204 = vunpack.c.h.b16 %v199
    %v205 = vunpack.c.l.b16 %v200
    %v206 = vunpack.c.h.b16 %v200
    %v207 = vpack.c.b16 %v203, %v203
    %v208 = vpack.c.b16 %v204, %v204
    %v209 = vpack.c.b16 %v205, %v205
    %v210 = vpack.c.b16 %v206, %v206
    %vm215 = vcmask 257024
    %216 = vst.msk [vmem:[%s4] sm:$0xf] %vm215, %v207
    %217 = vst.msk [vmem:[%s4 + $0x4] sm:$0xf] %vm215, %v208
    %218 = vst.msk [vmem:[%s4 + $0x8] sm:$0xf] %vm215, %v209
    %219 = vst.msk [vmem:[%s4 + $0xc] sm:$0xf] %vm215, %v210
  $region25: #{vit_forward.18} parent=0 // pred_fallthru
    _
  // Predicated region
  $region26: #{vit_forward.18} parent=0 // pred_check
    _
  $region27: #{vit_forward.18} parent=0 // pred_check_branch
    %221 = sbr.rel (0) target = $region29
  $region28: #{vit_forward.18} parent=0 // pred_region
    _
  $region29: #{vit_forward.18} parent=0 // pred_fallthru
    _
  // Predicated region
  $region30: #{vit_forward.18} parent=0 // pred_check
    _
  $region31: #{vit_forward.18} parent=0 // pred_check_branch
    %223 = sbr.rel (0) target = $region33
  $region32: #{vit_forward.18} parent=0 // pred_region
    _
  $region33: #{vit_forward.18} parent=0 // pred_fallthru
    _

// kernel: vit_forward.17
$region0: #{vit_forward.17}
  #allocation0 [shape = 'u32[]', space=smem, size = 0x4, offset = 0x4, fixed_abs, tag = 'smem constant byte address 0x4 - core index']
  #allocation1 [shape = 'u32[144,128]{1,0:T(1,128)}', space=vmem, size = 0x12000, scoped, tag = 'internal scratch']
  #allocation2 [shape = 'f32[32,128]{1,0:T(8,128)}', space=vmem, size = 0x4000, scoped, tag = 'scratch operand']
  #allocation3 [shape = 'bf16[32,32]{1,0:T(8,128)(2,1)}', space=vmem, size = 0x2000, scoped, tag = 'scratch operand']
  %s0 = inlined_call_operand.vmem [shape: bf16[32,32], index: 0, kind: input, shape index: {}]
  %s1 = inlined_call_operand.vmem [shape: bf16[32,128], index: 1, kind: input, shape index: {}]
  %s2 = inlined_call_operand.vmem [shape: f32[1,128], index: 2, kind: input, shape index: {}]
  %s3 = inlined_call_operand.vmem [shape: f32[1,32], index: 3, kind: input, shape index: {}]
  %s4 = inlined_call_operand.vmem [shape: f32[1,32], index: 4, kind: input, shape index: {}]
  %s5 = inlined_call_operand.vmem [shape: bf16[32,128], index: 5, kind: output, shape index: {}]
  %s6 = sld [smem:[#allocation0]]
  $region42: #{vit_forward.17} parent=0
    _
  %s8 = ssub.s32 1, %s6
  %s9 = scalar_select 0, %s8, %s6
  // Predicated region
  $region2: #{vit_forward.17} parent=0 // pred_check
    _
  $region3: #{vit_forward.17} parent=0 // pred_check_branch
    %11 = sbr.rel (0) target = $region5
  $region4: #{vit_forward.17} parent=0 // pred_region
    _
  $region5: #{vit_forward.17} parent=0 // pred_fallthru
    _
  // Predicated region
  $region6: #{vit_forward.17} parent=0 // pred_check
    _
  $region7: #{vit_forward.17} parent=0 // pred_check_branch
    %13 = sbr.rel (0) target = $region9
  $region8: #{vit_forward.17} parent=0 // pred_region
    _
  $region9: #{vit_forward.17} parent=0 // pred_fallthru
    _
  // Predicated region
  $region10: #{vit_forward.17} parent=0 // pred_check
    _
  $region11: #{vit_forward.17} parent=0 // pred_check_branch
    %15 = sbr.rel (0) target = $region13
  $region12: #{vit_forward.17} parent=0 // pred_region
    _
  $region13: #{vit_forward.17} parent=0 // pred_fallthru
    _
  // Predicated region
  $region14: #{vit_forward.17} parent=0 // pred_check
    _
  $region15: #{vit_forward.17} parent=0 // pred_check_branch
    %17 = sbr.rel (0) target = $region17
  $region16: #{vit_forward.17} parent=0 // pred_region
    _
  $region17: #{vit_forward.17} parent=0 // pred_fallthru
    _
  // Predicated region
  $region18: #{vit_forward.17} parent=0 // pred_check
    _
  $region19: #{vit_forward.17} parent=0 // pred_check_branch
    %19 = sbr.rel (0) target = $region21
  $region20: #{vit_forward.17} parent=0 // pred_region
    _
  $region21: #{vit_forward.17} parent=0 // pred_fallthru
    _
  %p21 = scmp.eq.s32.totalorder 0, 0
  // Predicated region
  $region22: #{vit_forward.17} parent=0 // pred_check
    %p22 = pneg %p21
  $region23: #{vit_forward.17} parent=0 // pred_check_branch
    %24 = sbr.rel (%p22) target = $region25
  $region24: #{vit_forward.17} parent=0 // pred_region
    %25 = vst [vmem:[#allocation2] sm:$0xff] 0.0
    %26 = vst [vmem:[#allocation2 + $0x8] sm:$0xff] 0.0
    %27 = vst [vmem:[#allocation2 + $0x10] sm:$0xff] 0.0
    %28 = vst [vmem:[#allocation2 + $0x18] sm:$0xff] 0.0
  $region25: #{vit_forward.17} parent=0 // pred_fallthru
    _
  %p29 = scmp.eq.s32.totalorder 0, 0
  %p30 = pnand %p29, %p21
  %p31 = pneg %p30
  // Predicated region
  $region26: #{vit_forward.17} parent=0 // pred_check
    _
  $region27: #{vit_forward.17} parent=0 // pred_check_branch
    %33 = sbr.rel (%p30) target = $region29
  $region28: #{vit_forward.17} parent=0 // pred_region
    %v34 = vld [vmem:[%s0] sm:$0xf]
    %v35 = vld [vmem:[%s0 + $0x4] sm:$0xf]
    %v36 = vld [vmem:[%s0 + $0x8] sm:$0xf]
    %v37 = vld [vmem:[%s0 + $0xc] sm:$0xf]
    %v38 = vunpack.c.l.bf16 %v34
    %v39 = vunpack.c.l.bf16 %v35
    %v40 = vunpack.c.l.bf16 %v36
    %v41 = vunpack.c.l.bf16 %v37
    %vm42 = vcmask 261120
    %v43 = vsel %vm42, %v38, 0.0
    %44 = vadd.xlane.f32.xlu0 %v43
    %v45 = vpop.xlane.xlu0 %44
    %v46 = vsel %vm42, %v39, 0.0
    %47 = vadd.xlane.f32.xlu0 %v46
    %v48 = vpop.xlane.xlu0 %47
    %v49 = vsel %vm42, %v40, 0.0
    %50 = vadd.xlane.f32.xlu0 %v49
    %v51 = vpop.xlane.xlu0 %50
    %v52 = vsel %vm42, %v41, 0.0
    %53 = vadd.xlane.f32.xlu0 %v52
    %v54 = vpop.xlane.xlu0 %53
    %v55 = vrcp.pop 32.0
    %v56 = vmul.f32 %v45, %v55
    %v57 = vmul.f32 %v48, %v55
    %v58 = vmul.f32 %v51, %v55
    %v59 = vmul.f32 %v54, %v55
    %v60 = vsub.f32 %v38, %v56
    %v61 = vsub.f32 %v39, %v57
    %v62 = vsub.f32 %v40, %v58
    %v63 = vsub.f32 %v41, %v59
    %v64 = vmul.f32 %v60, %v60
    %v65 = vmul.f32 %v61, %v61
    %v66 = vmul.f32 %v62, %v62
    %v67 = vmul.f32 %v63, %v63
    %v68 = vsel %vm42, %v64, 0.0
    %69 = vadd.xlane.f32.xlu0 %v68
    %v70 = vpop.xlane.xlu0 %69
    %v71 = vsel %vm42, %v65, 0.0
    %72 = vadd.xlane.f32.xlu0 %v71
    %v73 = vpop.xlane.xlu0 %72
    %v74 = vsel %vm42, %v66, 0.0
    %75 = vadd.xlane.f32.xlu0 %v74
    %v76 = vpop.xlane.xlu0 %75
    %v77 = vsel %vm42, %v67, 0.0
    %78 = vadd.xlane.f32.xlu0 %v77
    %v79 = vpop.xlane.xlu0 %78
    %v80 = vmul.f32 %v70, %v55
    %v81 = vmul.f32 %v73, %v55
    %v82 = vmul.f32 %v76, %v55
    %v83 = vmul.f32 %v79, %v55
    %v84 = vadd.f32 %v80, 1e-05
    %v85 = vadd.f32 %v81, 1e-05
    %v86 = vadd.f32 %v82, 1e-05
    %v87 = vadd.f32 %v83, 1e-05
    %v88 = vrsqrt.pop %v84
    %v89 = vrsqrt.pop %v85
    %v90 = vrsqrt.pop %v86
    %v91 = vrsqrt.pop %v87
    %v92 = vmul.f32 %v60, %v88
    %v93 = vmul.f32 %v61, %v89
    %v94 = vmul.f32 %v62, %v90
    %v95 = vmul.f32 %v63, %v91
    %v96 = vld [vmem:[%s3] sm:$0x1]
    %v98 = vlaneseq
    %v99 = vshrl.u32 %v98, 7
    %v100 = vsub.s32 0, %v99
    %v101 = vrot.slane %v96, %v100
    %v103 = vmul.f32 %v92, %v101
    %v104 = vmul.f32 %v93, %v101
    %v105 = vmul.f32 %v94, %v101
    %v106 = vmul.f32 %v95, %v101
    %v107 = vld [vmem:[%s4] sm:$0x1]
    %v109 = vlaneseq
    %v110 = vshrl.u32 %v109, 7
    %v111 = vsub.s32 0, %v110
    %v112 = vrot.slane %v107, %v111
    %v114 = vadd.f32 %v103, %v112
    %v115 = vadd.f32 %v104, %v112
    %v116 = vadd.f32 %v105, %v112
    %v117 = vadd.f32 %v106, %v112
    %v118 = vpack.c.bf16 %v115, %v114
    %v119 = vpack.c.bf16 %v117, %v116
    %v122 = vunpack.c.l.b16 %v118
    %v123 = vunpack.c.h.b16 %v118
    %v124 = vunpack.c.l.b16 %v119
    %v125 = vunpack.c.h.b16 %v119
    %v126 = vpack.c.b16 %v122, %v122
    %v127 = vpack.c.b16 %v123, %v123
    %v128 = vpack.c.b16 %v124, %v124
    %v129 = vpack.c.b16 %v125, %v125
    %vm134 = vcmask 257024
    %135 = vst.msk [vmem:[#allocation3] sm:$0xf] %vm134, %v126
    %136 = vst.msk [vmem:[#allocation3 + $0x4] sm:$0xf] %vm134, %v127
    %137 = vst.msk [vmem:[#allocation3 + $0x8] sm:$0xf] %vm134, %v128
    %138 = vst.msk [vmem:[#allocation3 + $0xc] sm:$0xf] %vm134, %v129
  $region29: #{vit_forward.17} parent=0 // pred_fallthru
    _
  %v139 = vld [vmem:[#allocation3] sm:$0xf]
  %v140 = vld [vmem:[#allocation3 + $0x4] sm:$0xf]
  %v141 = vld [vmem:[#allocation3 + $0x8] sm:$0xf]
  %v142 = vld [vmem:[#allocation3 + $0xc] sm:$0xf]
  %v143 = vld [vmem:[#allocation2] sm:$0xff]
  %v144 = vld [vmem:[#allocation2 + $0x8] sm:$0xff]
  %v145 = vld [vmem:[#allocation2 + $0x10] sm:$0xff]
  %v146 = vld [vmem:[#allocation2 + $0x18] sm:$0xff]
  %v147 = vld [vmem:[%s1] sm:$0xf]
  %v148 = vld [vmem:[%s1 + $0x4] sm:$0xf]
  %v149 = vld [vmem:[%s1 + $0x8] sm:$0xf]
  %v150 = vld [vmem:[%s1 + $0xc] sm:$0xf]
  %v155 = vunpack.c.l.b16 %v139
  %v156 = vunpack.c.l.b16 %v140
  %v157 = vunpack.c.l.b16 %v141
  %v158 = vunpack.c.l.b16 %v142
  %v159 = vpack.c.b16 %v156, %v155
  %v160 = vpack.c.b16 %v158, %v157
  %v165 = vunpack.c.l.b16 %v147
  %v166 = vunpack.c.l.b16 %v148
  %v167 = vunpack.c.l.b16 %v149
  %v168 = vunpack.c.l.b16 %v150
  %v169 = vpack.c.b16 %v166, %v165
  %v170 = vpack.c.b16 %v168, %v167
  %vm173 = vcmask 261120
  %v175 = vsel %vm173, %v159, 0
  %v178 = vsel %vm173, %v160, 0
  %180 = vmatprep.subr.bf16.mxu0 0
  %181 = vmatpush1.bf16.msra.mxu0 0
  %182 = vmatprep.subr.bf16.mxu0 0
  %183 = vmatpush1.bf16.msra.mxu0 0
  %184 = vmatprep.subr.bf16.mxu0 0
  %185 = vmatpush1.bf16.msra.mxu0 0
  %186 = vmatprep.subr.bf16.mxu0 0
  %187 = vmatpush1.bf16.msra.mxu0 0
  %188 = vmatprep.subr.bf16.mxu0 0
  %189 = vmatpush1.bf16.msra.mxu0 0
  %190 = vmatprep.subr.bf16.mxu0 0
  %191 = vmatpush1.bf16.msra.mxu0 0
  %192 = vmatprep.subr.bf16.mxu0 0
  %193 = vmatpush1.bf16.msra.mxu0 %v170
  %194 = vmatprep.subr.bf16.mxu0 0
  %195 = vmatpush1.bf16.msra.mxu0 %v169
  %196 = vmatprep.subr.bf16.mxu0 0
  %197 = vmatpush2.bf16.msra.mxu0 0
  %198 = vmatprep.subr.bf16.mxu0 0
  %199 = vmatpush2.bf16.msra.mxu0 0
  %200 = vmatprep.subr.bf16.mxu0 0
  %201 = vmatpush2.bf16.msra.mxu0 0
  %202 = vmatprep.subr.bf16.mxu0 0
  %203 = vmatpush2.bf16.msra.mxu0 0
  %204 = vmatprep.subr.bf16.mxu0 0
  %205 = vmatpush2.bf16.msra.mxu0 0
  %206 = vmatprep.subr.bf16.mxu0 0
  %207 = vmatpush2.bf16.msra.mxu0 0
  %208 = vmatprep.subr.bf16.mxu0 0
  %209 = vmatpush2.bf16.msra.mxu0 0
  %210 = vmatprep.subr.bf16.mxu0 0
  %211 = vmatpush2.bf16.msra.mxu0 0
  %212 = vmatprep.mubr.bf16.mxu0 0
  %213 = vmatmul.mubr.bf16.gmra.mxu0 %v175
  %v214 = vpop.f32.mrf.mxu0
  %v215 = vadd.f32 0.0, %v214
  %v216 = vpop.f32.mrf.mxu0
  %v217 = vpop.f32.mrf.mxu0
  %v218 = vadd.f32 0.0, %v217
  %v219 = vpop.f32.mrf.mxu0
  %220 = vmatprep.mubr.bf16.mxu0 0
  %221 = vmatmul.mubr.bf16.gmra.mxu0 %v178
  %v222 = vpop.f32.mrf.mxu0
  %v223 = vadd.f32 0.0, %v222
  %v224 = vpop.f32.mrf.mxu0
  %v225 = vpop.f32.mrf.mxu0
  %v226 = vadd.f32 0.0, %v225
  %v227 = vpop.f32.mrf.mxu0
  %228 = vdwg.mxu0
  %v229 = vadd.f32 %v143, %v215
  %v230 = vadd.f32 %v144, %v218
  %v231 = vadd.f32 %v145, %v223
  %v232 = vadd.f32 %v146, %v226
  %233 = vst [vmem:[#allocation2] sm:$0xff] %v229
  %234 = vst [vmem:[#allocation2 + $0x8] sm:$0xff] %v230
  %235 = vst [vmem:[#allocation2 + $0x10] sm:$0xff] %v231
  %236 = vst [vmem:[#allocation2 + $0x18] sm:$0xff] %v232
  // Predicated region
  $region30: #{vit_forward.17} parent=0 // pred_check
    %p237 = pneg %p21
  $region31: #{vit_forward.17} parent=0 // pred_check_branch
    %239 = sbr.rel (%p237) target = $region33
  $region32: #{vit_forward.17} parent=0 // pred_region
    %v240 = vld [vmem:[#allocation2] sm:$0xff]
    %v241 = vld [vmem:[#allocation2 + $0x8] sm:$0xff]
    %v242 = vld [vmem:[#allocation2 + $0x10] sm:$0xff]
    %v243 = vld [vmem:[#allocation2 + $0x18] sm:$0xff]
    %v244 = vld [vmem:[%s2] sm:$0x1]
    %v246 = vlaneseq
    %v247 = vshrl.u32 %v246, 7
    %v248 = vsub.s32 0, %v247
    %v249 = vrot.slane %v244, %v248
    %v251 = vadd.f32 %v240, %v249
    %v252 = vadd.f32 %v241, %v249
    %v253 = vadd.f32 %v242, %v249
    %v254 = vadd.f32 %v243, %v249
    %v255 = vmul.f32 %v251, 0.5
    %v256 = vmul.f32 %v252, 0.5
    %v257 = vmul.f32 %v253, 0.5
    %v258 = vmul.f32 %v254, 0.5
    %v259 = vmul.f32 %v251, 0.70710677
    %v260 = vmul.f32 %v252, 0.70710677
    %v261 = vmul.f32 %v253, 0.70710677
    %v262 = vmul.f32 %v254, 0.70710677
    %vm263 = vcmp.ge.f32.partialorder %v259, 0.0
    %vm264 = vcmp.ge.f32.partialorder %v260, 0.0
    %vm265 = vcmp.ge.f32.partialorder %v261, 0.0
    %vm266 = vcmp.ge.f32.partialorder %v262, 0.0
    %v267 = vsel %vm263, 1.0, -1.0
    %v268 = vsel %vm264, 1.0, -1.0
    %v269 = vsel %vm265, 1.0, -1.0
    %v270 = vsel %vm266, 1.0, -1.0
    %v271 = vand.u32 2147483647, %v259
    %v272 = vand.u32 2147483647, %v260
    %v273 = vand.u32 2147483647, %v261
    %v274 = vand.u32 2147483647, %v262
    %v275 = vmul.f32 %v271, 0.3275911
    %v276 = vmul.f32 %v272, 0.3275911
    %v277 = vmul.f32 %v273, 0.3275911
    %v278 = vmul.f32 %v274, 0.3275911
    %v279 = vadd.f32 %v275, 1.0
    %v280 = vadd.f32 %v276, 1.0
    %v281 = vadd.f32 %v277, 1.0
    %v282 = vadd.f32 %v278, 1.0
    %v283 = vrcp.pop %v279
    %v284 = vmul.f32 1.0, %v283
    %v285 = vrcp.pop %v280
    %v286 = vmul.f32 1.0, %v285
    %v287 = vrcp.pop %v281
    %v288 = vmul.f32 1.0, %v287
    %v289 = vrcp.pop %v282
    %v290 = vmul.f32 1.0, %v289
    %v291 = vmul.f32 %v284, 1.0614054
    %v292 = vmul.f32 %v286, 1.0614054
    %v293 = vmul.f32 %v288, 1.0614054
    %v294 = vmul.f32 %v290, 1.0614054
    %v295 = vadd.f32 %v291, -1.4531521
    %v296 = vadd.f32 %v292, -1.4531521
    %v297 = vadd.f32 %v293, -1.4531521
    %v298 = vadd.f32 %v294, -1.4531521
    %v299 = vmul.f32 %v295, %v284
    %v300 = vmul.f32 %v296, %v286
    %v301 = vmul.f32 %v297, %v288
    %v302 = vmul.f32 %v298, %v290
    %v303 = vadd.f32 %v299, 1.4214138
    %v304 = vadd.f32 %v300, 1.4214138
    %v305 = vadd.f32 %v301, 1.4214138
    %v306 = vadd.f32 %v302, 1.4214138
    %v307 = vmul.f32 %v303, %v284
    %v308 = vmul.f32 %v304, %v286
    %v309 = vmul.f32 %v305, %v288
    %v310 = vmul.f32 %v306, %v290
    %v311 = vadd.f32 %v307, -0.28449672
    %v312 = vadd.f32 %v308, -0.28449672
    %v313 = vadd.f32 %v309, -0.28449672
    %v314 = vadd.f32 %v310, -0.28449672
    %v315 = vmul.f32 %v311, %v284
    %v316 = vmul.f32 %v312, %v286
    %v317 = vmul.f32 %v313, %v288
    %v318 = vmul.f32 %v314, %v290
    %v319 = vadd.f32 %v315, 0.2548296
    %v320 = vadd.f32 %v316, 0.2548296
    %v321 = vadd.f32 %v317, 0.2548296
    %v322 = vadd.f32 %v318, 0.2548296
    %v323 = vmul.f32 %v319, %v284
    %v324 = vmul.f32 %v320, %v286
    %v325 = vmul.f32 %v321, %v288
    %v326 = vmul.f32 %v322, %v290
    %v327 = vsub.f32 0.0, %v271
    %v328 = vsub.f32 0.0, %v272
    %v329 = vsub.f32 0.0, %v273
    %v330 = vsub.f32 0.0, %v274
    %v331 = vmul.f32 %v327, %v271
    %v332 = vmul.f32 %v328, %v272
    %v333 = vmul.f32 %v329, %v273
    %v334 = vmul.f32 %v330, %v274
    %v335 = vmul.f32 %v331, 1.442695
    %v336 = vpow.pop %v335
    %v337 = vmul.f32 %v332, 1.442695
    %v338 = vpow.pop %v337
    %v339 = vmul.f32 %v333, 1.442695
    %v340 = vpow.pop %v339
    %v341 = vmul.f32 %v334, 1.442695
    %v342 = vpow.pop %v341
    %v343 = vmul.f32 %v323, %v336
    %v344 = vmul.f32 %v324, %v338
    %v345 = vmul.f32 %v325, %v340
    %v346 = vmul.f32 %v326, %v342
    %v347 = vsub.f32 1.0, %v343
    %v348 = vsub.f32 1.0, %v344
    %v349 = vsub.f32 1.0, %v345
    %v350 = vsub.f32 1.0, %v346
    %v351 = vmul.f32 %v267, %v347
    %v352 = vmul.f32 %v268, %v348
    %v353 = vmul.f32 %v269, %v349
    %v354 = vmul.f32 %v270, %v350
    %v355 = vadd.f32 %v351, 1.0
    %v356 = vadd.f32 %v352, 1.0
    %v357 = vadd.f32 %v353, 1.0
    %v358 = vadd.f32 %v354, 1.0
    %v359 = vmul.f32 %v255, %v355
    %v360 = vmul.f32 %v256, %v356
    %v361 = vmul.f32 %v257, %v357
    %v362 = vmul.f32 %v258, %v358
    %v363 = vpack.c.bf16 %v360, %v359
    %v364 = vpack.c.bf16 %v362, %v361
    %v367 = vunpack.c.l.b16 %v363
    %v368 = vunpack.c.h.b16 %v363
    %v369 = vunpack.c.l.b16 %v364
    %v370 = vunpack.c.h.b16 %v364
    %v371 = vpack.c.b16 %v367, %v367
    %v372 = vpack.c.b16 %v368, %v368
    %v373 = vpack.c.b16 %v369, %v369
    %v374 = vpack.c.b16 %v370, %v370
    %379 = vst [vmem:[%s5] sm:$0xf] %v371
    %380 = vst [vmem:[%s5 + $0x4] sm:$0xf] %v372
    %381 = vst [vmem:[%s5 + $0x8] sm:$0xf] %v373
    %382 = vst [vmem:[%s5 + $0xc] sm:$0xf] %v374
  $region33: #{vit_forward.17} parent=0 // pred_fallthru
    _
  // Predicated region
  $region34: #{vit_forward.17} parent=0 // pred_check
    _
  $region35: #{vit_forward.17} parent=0 // pred_check_branch
    %384 = sbr.rel (0) target = $region37
  $region36: #{vit_forward.17} parent=0 // pred_region
    _
  $region37: #{vit_forward.17} parent=0 // pred_fallthru
    _
  // Predicated region
  $region38: #{vit_forward.17} parent=0 // pred_check
    _
  $region39: #{vit_forward.17} parent=0 // pred_check_branch
    %386 = sbr.rel (0) target = $region41
  $region40: #{vit_forward.17} parent=0 // pred_region
    _
  $region41: #{vit_forward.17} parent=0 // pred_fallthru
    _

// kernel: vit_forward.24
$region0: #{vit_forward.24}
  #allocation0 [shape = 'u32[]', space=smem, size = 0x4, offset = 0x4, fixed_abs, tag = 'smem constant byte address 0x4 - core index']
  #allocation1 [shape = 'u32[144,128]{1,0:T(1,128)}', space=vmem, size = 0x12000, scoped, tag = 'internal scratch']
  #allocation2 [shape = 'f32[32,16]{1,0:T(8,128)}', space=vmem, size = 0x4000, scoped, tag = 'scratch operand']
  %s0 = inlined_call_operand.vmem [shape: bf16[32,32], index: 0, kind: input, shape index: {}]
  %s1 = inlined_call_operand.vmem [shape: bf16[32,16], index: 1, kind: input, shape index: {}]
  %s2 = inlined_call_operand.vmem [shape: f32[1,16], index: 2, kind: input, shape index: {}]
  %s3 = inlined_call_operand.vmem [shape: f32[1,16], index: 3, kind: input, shape index: {}]
  %s4 = inlined_call_operand.vmem [shape: f32[1,16], index: 4, kind: input, shape index: {}]
  %s5 = inlined_call_operand.vmem [shape: bf16[32,16], index: 5, kind: output, shape index: {}]
  %s6 = sld [smem:[#allocation0]]
  $region38: #{vit_forward.24} parent=0
    _
  %s8 = ssub.s32 1, %s6
  %s9 = scalar_select 0, %s8, %s6
  // Predicated region
  $region2: #{vit_forward.24} parent=0 // pred_check
    _
  $region3: #{vit_forward.24} parent=0 // pred_check_branch
    %11 = sbr.rel (0) target = $region5
  $region4: #{vit_forward.24} parent=0 // pred_region
    _
  $region5: #{vit_forward.24} parent=0 // pred_fallthru
    _
  // Predicated region
  $region6: #{vit_forward.24} parent=0 // pred_check
    _
  $region7: #{vit_forward.24} parent=0 // pred_check_branch
    %13 = sbr.rel (0) target = $region9
  $region8: #{vit_forward.24} parent=0 // pred_region
    _
  $region9: #{vit_forward.24} parent=0 // pred_fallthru
    _
  // Predicated region
  $region10: #{vit_forward.24} parent=0 // pred_check
    _
  $region11: #{vit_forward.24} parent=0 // pred_check_branch
    %15 = sbr.rel (0) target = $region13
  $region12: #{vit_forward.24} parent=0 // pred_region
    _
  $region13: #{vit_forward.24} parent=0 // pred_fallthru
    _
  // Predicated region
  $region14: #{vit_forward.24} parent=0 // pred_check
    _
  $region15: #{vit_forward.24} parent=0 // pred_check_branch
    %17 = sbr.rel (0) target = $region17
  $region16: #{vit_forward.24} parent=0 // pred_region
    _
  $region17: #{vit_forward.24} parent=0 // pred_fallthru
    _
  // Predicated region
  $region18: #{vit_forward.24} parent=0 // pred_check
    _
  $region19: #{vit_forward.24} parent=0 // pred_check_branch
    %19 = sbr.rel (0) target = $region21
  $region20: #{vit_forward.24} parent=0 // pred_region
    _
  $region21: #{vit_forward.24} parent=0 // pred_fallthru
    _
  %p21 = scmp.eq.s32.totalorder 0, 0
  // Predicated region
  $region22: #{vit_forward.24} parent=0 // pred_check
    %p22 = pneg %p21
  $region23: #{vit_forward.24} parent=0 // pred_check_branch
    %24 = sbr.rel (%p22) target = $region25
  $region24: #{vit_forward.24} parent=0 // pred_region
    %vm25 = vcmask 130048
    %26 = vst.msk [vmem:[#allocation2] sm:$0xff] %vm25, 0.0
    %27 = vst.msk [vmem:[#allocation2 + $0x8] sm:$0xff] %vm25, 0.0
    %28 = vst.msk [vmem:[#allocation2 + $0x10] sm:$0xff] %vm25, 0.0
    %29 = vst.msk [vmem:[#allocation2 + $0x18] sm:$0xff] %vm25, 0.0
  $region25: #{vit_forward.24} parent=0 // pred_fallthru
    _
  %v30 = vld [vmem:[%s0] sm:$0xf]
  %v31 = vld [vmem:[%s0 + $0x4] sm:$0xf]
  %v32 = vld [vmem:[%s0 + $0x8] sm:$0xf]
  %v33 = vld [vmem:[%s0 + $0xc] sm:$0xf]
  %v34 = vld [vmem:[#allocation2] sm:$0xff]
  %v35 = vld [vmem:[#allocation2 + $0x8] sm:$0xff]
  %v36 = vld [vmem:[#allocation2 + $0x10] sm:$0xff]
  %v37 = vld [vmem:[#allocation2 + $0x18] sm:$0xff]
  %v38 = vld [vmem:[%s1] sm:$0xf]
  %v39 = vld [vmem:[%s1 + $0x4] sm:$0xf]
  %v40 = vld [vmem:[%s1 + $0x8] sm:$0xf]
  %v41 = vld [vmem:[%s1 + $0xc] sm:$0xf]
  %v46 = vunpack.c.l.b16 %v30
  %v47 = vunpack.c.l.b16 %v31
  %v48 = vunpack.c.l.b16 %v32
  %v49 = vunpack.c.l.b16 %v33
  %v50 = vpack.c.b16 %v47, %v46
  %v51 = vpack.c.b16 %v49, %v48
  %v56 = vunpack.c.l.b16 %v38
  %v57 = vunpack.c.l.b16 %v39
  %v58 = vunpack.c.l.b16 %v40
  %v59 = vunpack.c.l.b16 %v41
  %v60 = vpack.c.b16 %v57, %v56
  %v61 = vpack.c.b16 %v59, %v58
  %vm64 = vcmask 261120
  %v66 = vsel %vm64, %v50, 0
  %v69 = vsel %vm64, %v51, 0
  %71 = vmatprep.subr.bf16.mxu0 0
  %72 = vmatpush1.bf16.msra.mxu0 0
  %73 = vmatprep.subr.bf16.mxu0 0
  %74 = vmatpush1.bf16.msra.mxu0 0
  %75 = vmatprep.subr.bf16.mxu0 0
  %76 = vmatpush1.bf16.msra.mxu0 0
  %77 = vmatprep.subr.bf16.mxu0 0
  %78 = vmatpush1.bf16.msra.mxu0 0
  %79 = vmatprep.subr.bf16.mxu0 0
  %80 = vmatpush1.bf16.msra.mxu0 0
  %81 = vmatprep.subr.bf16.mxu0 0
  %82 = vmatpush1.bf16.msra.mxu0 0
  %83 = vmatprep.subr.bf16.mxu0 0
  %84 = vmatpush1.bf16.msra.mxu0 %v61
  %85 = vmatprep.subr.bf16.mxu0 0
  %86 = vmatpush1.bf16.msra.mxu0 %v60
  %87 = vmatprep.subr.bf16.mxu0 0
  %88 = vmatpush2.bf16.msra.mxu0 0
  %89 = vmatprep.subr.bf16.mxu0 0
  %90 = vmatpush2.bf16.msra.mxu0 0
  %91 = vmatprep.subr.bf16.mxu0 0
  %92 = vmatpush2.bf16.msra.mxu0 0
  %93 = vmatprep.subr.bf16.mxu0 0
  %94 = vmatpush2.bf16.msra.mxu0 0
  %95 = vmatprep.subr.bf16.mxu0 0
  %96 = vmatpush2.bf16.msra.mxu0 0
  %97 = vmatprep.subr.bf16.mxu0 0
  %98 = vmatpush2.bf16.msra.mxu0 0
  %99 = vmatprep.subr.bf16.mxu0 0
  %100 = vmatpush2.bf16.msra.mxu0 0
  %101 = vmatprep.subr.bf16.mxu0 0
  %102 = vmatpush2.bf16.msra.mxu0 0
  %103 = vmatprep.mubr.bf16.mxu0 0
  %104 = vmatmul.mubr.bf16.gmra.mxu0 %v66
  %v105 = vpop.f32.mrf.mxu0
  %v106 = vadd.f32 0.0, %v105
  %v107 = vpop.f32.mrf.mxu0
  %v108 = vpop.f32.mrf.mxu0
  %v109 = vadd.f32 0.0, %v108
  %v110 = vpop.f32.mrf.mxu0
  %111 = vmatprep.mubr.bf16.mxu0 0
  %112 = vmatmul.mubr.bf16.gmra.mxu0 %v69
  %v113 = vpop.f32.mrf.mxu0
  %v114 = vadd.f32 0.0, %v113
  %v115 = vpop.f32.mrf.mxu0
  %v116 = vpop.f32.mrf.mxu0
  %v117 = vadd.f32 0.0, %v116
  %v118 = vpop.f32.mrf.mxu0
  %119 = vdwg.mxu0
  %v120 = vadd.f32 %v34, %v106
  %v121 = vadd.f32 %v35, %v109
  %v122 = vadd.f32 %v36, %v114
  %v123 = vadd.f32 %v37, %v117
  %vm124 = vcmask 130048
  %125 = vst.msk [vmem:[#allocation2] sm:$0xff] %vm124, %v120
  %126 = vst.msk [vmem:[#allocation2 + $0x8] sm:$0xff] %vm124, %v121
  %127 = vst.msk [vmem:[#allocation2 + $0x10] sm:$0xff] %vm124, %v122
  %128 = vst.msk [vmem:[#allocation2 + $0x18] sm:$0xff] %vm124, %v123
  // Predicated region
  $region26: #{vit_forward.24} parent=0 // pred_check
    %p129 = pneg %p21
  $region27: #{vit_forward.24} parent=0 // pred_check_branch
    %131 = sbr.rel (%p129) target = $region29
  $region28: #{vit_forward.24} parent=0 // pred_region
    %v132 = vld [vmem:[#allocation2] sm:$0xff]
    %v133 = vld [vmem:[#allocation2 + $0x8] sm:$0xff]
    %v134 = vld [vmem:[#allocation2 + $0x10] sm:$0xff]
    %v135 = vld [vmem:[#allocation2 + $0x18] sm:$0xff]
    %v136 = vld [vmem:[%s2] sm:$0x1]
    %v138 = vlaneseq
    %v139 = vshrl.u32 %v138, 7
    %v140 = vsub.s32 0, %v139
    %v141 = vrot.slane %v136, %v140
    %v143 = vadd.f32 %v132, %v141
    %v144 = vadd.f32 %v133, %v141
    %v145 = vadd.f32 %v134, %v141
    %v146 = vadd.f32 %v135, %v141
    %v147 = vsel %vm124, %v143, 0.0
    %148 = vadd.xlane.f32.xlu0 %v147
    %v149 = vpop.xlane.xlu0 %148
    %v150 = vsel %vm124, %v144, 0.0
    %151 = vadd.xlane.f32.xlu0 %v150
    %v152 = vpop.xlane.xlu0 %151
    %v153 = vsel %vm124, %v145, 0.0
    %154 = vadd.xlane.f32.xlu0 %v153
    %v155 = vpop.xlane.xlu0 %154
    %v156 = vsel %vm124, %v146, 0.0
    %157 = vadd.xlane.f32.xlu0 %v156
    %v158 = vpop.xlane.xlu0 %157
    %v159 = vrcp.pop 16.0
    %v160 = vmul.f32 %v149, %v159
    %v161 = vmul.f32 %v152, %v159
    %v162 = vmul.f32 %v155, %v159
    %v163 = vmul.f32 %v158, %v159
    %v164 = vsub.f32 %v143, %v160
    %v165 = vsub.f32 %v144, %v161
    %v166 = vsub.f32 %v145, %v162
    %v167 = vsub.f32 %v146, %v163
    %v168 = vmul.f32 %v164, %v164
    %v169 = vmul.f32 %v165, %v165
    %v170 = vmul.f32 %v166, %v166
    %v171 = vmul.f32 %v167, %v167
    %v172 = vsel %vm124, %v168, 0.0
    %173 = vadd.xlane.f32.xlu0 %v172
    %v174 = vpop.xlane.xlu0 %173
    %v175 = vsel %vm124, %v169, 0.0
    %176 = vadd.xlane.f32.xlu0 %v175
    %v177 = vpop.xlane.xlu0 %176
    %v178 = vsel %vm124, %v170, 0.0
    %179 = vadd.xlane.f32.xlu0 %v178
    %v180 = vpop.xlane.xlu0 %179
    %v181 = vsel %vm124, %v171, 0.0
    %182 = vadd.xlane.f32.xlu0 %v181
    %v183 = vpop.xlane.xlu0 %182
    %v184 = vmul.f32 %v174, %v159
    %v185 = vmul.f32 %v177, %v159
    %v186 = vmul.f32 %v180, %v159
    %v187 = vmul.f32 %v183, %v159
    %v188 = vadd.f32 %v184, 1e-06
    %v189 = vadd.f32 %v185, 1e-06
    %v190 = vadd.f32 %v186, 1e-06
    %v191 = vadd.f32 %v187, 1e-06
    %v192 = vrsqrt.pop %v188
    %v193 = vrsqrt.pop %v189
    %v194 = vrsqrt.pop %v190
    %v195 = vrsqrt.pop %v191
    %v196 = vmul.f32 %v164, %v192
    %v197 = vmul.f32 %v165, %v193
    %v198 = vmul.f32 %v166, %v194
    %v199 = vmul.f32 %v167, %v195
    %v200 = vld [vmem:[%s3] sm:$0x1]
    %v202 = vlaneseq
    %v203 = vshrl.u32 %v202, 7
    %v204 = vsub.s32 0, %v203
    %v205 = vrot.slane %v200, %v204
    %v207 = vmul.f32 %v196, %v205
    %v208 = vmul.f32 %v197, %v205
    %v209 = vmul.f32 %v198, %v205
    %v210 = vmul.f32 %v199, %v205
    %v211 = vld [vmem:[%s4] sm:$0x1]
    %v213 = vlaneseq
    %v214 = vshrl.u32 %v213, 7
    %v215 = vsub.s32 0, %v214
    %v216 = vrot.slane %v211, %v215
    %v218 = vadd.f32 %v207, %v216
    %v219 = vadd.f32 %v208, %v216
    %v220 = vadd.f32 %v209, %v216
    %v221 = vadd.f32 %v210, %v216
    %v222 = vpack.c.bf16 %v219, %v218
    %v223 = vpack.c.bf16 %v221, %v220
    %v226 = vunpack.c.l.b16 %v222
    %v227 = vunpack.c.h.b16 %v222
    %v228 = vunpack.c.l.b16 %v223
    %v229 = vunpack.c.h.b16 %v223
    %v230 = vpack.c.b16 %v226, %v226
    %v231 = vpack.c.b16 %v227, %v227
    %v232 = vpack.c.b16 %v228, %v228
    %v233 = vpack.c.b16 %v229, %v229
    %vm238 = vcmask 125952
    %239 = vst.msk [vmem:[%s5] sm:$0xf] %vm238, %v230
    %240 = vst.msk [vmem:[%s5 + $0x4] sm:$0xf] %vm238, %v231
    %241 = vst.msk [vmem:[%s5 + $0x8] sm:$0xf] %vm238, %v232
    %242 = vst.msk [vmem:[%s5 + $0xc] sm:$0xf] %vm238, %v233
  $region29: #{vit_forward.24} parent=0 // pred_fallthru
    _
  // Predicated region
  $region30: #{vit_forward.24} parent=0 // pred_check
    _
  $region31: #{vit_forward.24} parent=0 // pred_check_branch
    %244 = sbr.rel (0) target = $region33
  $region32: #{vit_forward.24} parent=0 // pred_region
    _
  $region33: #{vit_forward.24} parent=0 // pred_fallthru
    _
  // Predicated region
  $region34: #{vit_forward.24} parent=0 // pred_check
    _
  $region35: #{vit_forward.24} parent=0 // pred_check_branch
    %246 = sbr.rel (0) target = $region37
  $region36: #{vit_forward.24} parent=0 // pred_region
    _
  $region37: #{vit_forward.24} parent=0 // pred_fallthru
    _

// kernel: vit_forward.25
$region0: #{vit_forward.25}
  #allocation0 [shape = 'u32[]', space=smem, size = 0x4, offset = 0x4, fixed_abs, tag = 'smem constant byte address 0x4 - core index']
  #allocation1 [shape = 'u32[144,128]{1,0:T(1,128)}', space=vmem, size = 0x12000, scoped, tag = 'internal scratch']
  #allocation2 [shape = 'f32[24,16]{1,0:T(8,128)}', space=vmem, size = 0x3000, scoped, tag = 'scratch operand']
  %s0 = inlined_call_operand.vmem [shape: bf16[2,44,16], index: 0, kind: input, shape index: {}]
  %s1 = inlined_call_operand.vmem [shape: bf16[3,3,16,16], index: 1, kind: input, shape index: {}]
  %s2 = inlined_call_operand.vmem [shape: f32[1,16], index: 2, kind: input, shape index: {}]
  %s3 = inlined_call_operand.vmem [shape: f32[1,16], index: 3, kind: input, shape index: {}]
  %s4 = inlined_call_operand.vmem [shape: f32[2,24,16], index: 4, kind: output, shape index: {}]
  %s5 = sld [smem:[#allocation0]]
  $region49: #{vit_forward.25} parent=0
    _
  %s7 = ssub.s32 1, %s5
  %s8 = scalar_select 0, %s7, %s5
  loop: start=0, step=1, limit=4
  $region2: #{vit_forward.25} parent=0 // loop_pre_header
    _
  $region3: #{vit_forward.25} parent=0 // loop_header
    %s10 = sphi 0, %s14
    %p11 = scmp.ge.s32.totalorder %s10, 4
    %s20 = sphi 0, %s22
    %s23 = sphi 0, %s20
    %s24 = sphi 0, %s23
    %s40 = sphi 0, %s24
    %s44 = sphi 0, %s44
    %s46 = sphi 0, %s44
    %s47 = sphi 0, %s46
    %s61 = sphi 0, %s47
    %s65 = sphi 0, %s65
    %s67 = sphi 0, %s65
    %s68 = sphi 0, %s67
    %s82 = sphi 0, %s68
    %s86 = sphi 0, %s86
    %s88 = sphi 0, %s86
    %s89 = sphi 0, %s88
    %s103 = sphi 0, %s89
    %s109 = sphi 0, %s111
    %s112 = sphi 0, %s109
    %s113 = sphi 0, %s112
    %s129 = sphi 0, %s113
  $region4: #{vit_forward.25} parent=0 // loop_header_branch
    %13 = sbr.rel (%p11) target = $region8
  $region5: #{vit_forward.25} parent=0 // loop_body
    %s15 = ssub.s32 %s10, 1
    %s16 = ssub.s32 %s10, 2
    %s17 = sadd.s32 %s10, 1
    %s18 = ssub.s32 %s10, %s17
    %p19 = scmp.eq.s32.totalorder %s18, 0
    %s21 = sadd.s32 %s20, 1
    %s22 = scalar_select %p19, %s20, %s21
    %p25 = pneg %p19
    %p26 = scmp.eq.s32.totalorder %s10, 1
    %p27 = por %p25, %p26
    %p28 = scmp.ne.s32.totalorder %s20, %s23
    %p29 = scmp.eq.s32.totalorder %s10, 0
    %p30 = por %p28, %p29
    %p31 = scmp.ne.s32.totalorder %s20, %s23
    %p32 = scmp.eq.s32.totalorder %s15, 1
    %p33 = por %p31, %p32
    %p34 = scmp.ne.s32.totalorder %s23, %s24
    %p35 = scmp.eq.s32.totalorder %s15, 0
    %p36 = por %p34, %p35
    %p37 = scmp.ne.s32.totalorder %s23, %s24
    %p38 = scmp.eq.s32.totalorder %s16, 1
    %p39 = por %p37, %p38
    %p41 = scmp.ne.s32.totalorder %s24, %s40
    %p42 = scmp.eq.s32.totalorder %s16, 0
    %p43 = por %p41, %p42
    %s45 = sadd.s32 %s44, 1
    %p48 = scmp.eq.s32.totalorder %s10, 1
    %p49 = scmp.ne.s32.totalorder %s44, %s46
    %p50 = scmp.eq.s32.totalorder %s10, 0
    %p51 = por %p49, %p50
    %p52 = scmp.ne.s32.totalorder %s44, %s46
    %p53 = scmp.eq.s32.totalorder %s15, 1
    %p54 = por %p52, %p53
    %p55 = scmp.ne.s32.totalorder %s46, %s47
    %p56 = scmp.eq.s32.totalorder %s15, 0
    %p57 = por %p55, %p56
    %p58 = scmp.ne.s32.totalorder %s46, %s47
    %p59 = scmp.eq.s32.totalorder %s16, 1
    %p60 = por %p58, %p59
    %p62 = scmp.ne.s32.totalorder %s47, %s61
    %p63 = scmp.eq.s32.totalorder %s16, 0
    %p64 = por %p62, %p63
    %s66 = sadd.s32 %s65, 1
    %p69 = scmp.eq.s32.totalorder %s10, 1
    %p70 = scmp.ne.s32.totalorder %s65, %s67
    %p71 = scmp.eq.s32.totalorder %s10, 0
    %p72 = por %p70, %p71
    %p73 = scmp.ne.s32.totalorder %s65, %s67
    %p74 = scmp.eq.s32.totalorder %s15, 1
    %p75 = por %p73, %p74
    %p76 = scmp.ne.s32.totalorder %s67, %s68
    %p77 = scmp.eq.s32.totalorder %s15, 0
    %p78 = por %p76, %p77
    %p79 = scmp.ne.s32.totalorder %s67, %s68
    %p80 = scmp.eq.s32.totalorder %s16, 1
    %p81 = por %p79, %p80
    %p83 = scmp.ne.s32.totalorder %s68, %s82
    %p84 = scmp.eq.s32.totalorder %s16, 0
    %p85 = por %p83, %p84
    %s87 = sadd.s32 %s86, 1
    %p90 = scmp.eq.s32.totalorder %s10, 1
    %p91 = scmp.ne.s32.totalorder %s86, %s88
    %p92 = scmp.eq.s32.totalorder %s10, 0
    %p93 = por %p91, %p92
    %p94 = scmp.ne.s32.totalorder %s86, %s88
    %p95 = scmp.eq.s32.totalorder %s15, 1
    %p96 = por %p94, %p95
    %p97 = scmp.ne.s32.totalorder %s88, %s89
    %p98 = scmp.eq.s32.totalorder %s15, 0
    %p99 = por %p97, %p98
    %p100 = scmp.ne.s32.totalorder %s88, %s89
    %p101 = scmp.eq.s32.totalorder %s16, 1
    %p102 = por %p100, %p101
    %p104 = scmp.ne.s32.totalorder %s89, %s103
    %p105 = scmp.eq.s32.totalorder %s16, 0
    %p106 = por %p104, %p105
    %s107 = ssub.s32 %s10, %s17
    %p108 = scmp.eq.s32.totalorder %s107, 0
    %s110 = sadd.s32 %s109, 1
    %s111 = scalar_select %p108, %s109, %s110
    %p114 = pneg %p108
    %p115 = scmp.eq.s32.totalorder %s10, 1
    %p116 = por %p114, %p115
    %p117 = scmp.ne.s32.totalorder %s109, %s112
    %p118 = scmp.eq.s32.totalorder %s10, 0
    %p119 = por %p117, %p118
    %p120 = scmp.ne.s32.totalorder %s109, %s112
    %p121 = scmp.eq.s32.totalorder %s15, 1
    %p122 = por %p120, %p121
    %p123 = scmp.ne.s32.totalorder %s112, %s113
    %p124 = scmp.eq.s32.totalorder %s15, 0
    %p125 = por %p123, %p124
    %p126 = scmp.ne.s32.totalorder %s112, %s113
    %p127 = scmp.eq.s32.totalorder %s16, 1
    %p128 = por %p126, %p127
    %p130 = scmp.ne.s32.totalorder %s113, %s129
    %p131 = scmp.eq.s32.totalorder %s16, 0
    %p132 = por %p130, %p131
    %p133 = scmp.le.s32.totalorder 1, %s10
    %p134 = scmp.lt.s32.totalorder %s10, 3
    %p135 = pnand %p133, %p134
    %p136 = pneg %p135
    // Predicated region
    $region9: #{vit_forward.25} parent=5 // pred_check
      _
    $region10: #{vit_forward.25} parent=5 // pred_check_branch
      %138 = sbr.rel (%p135) target = $region12
    $region11: #{vit_forward.25} parent=5 // pred_region
      %s139 = ssub.s32 %s10, 1
      // Predicated region
      $region13: #{vit_forward.25} parent=11 // pred_check
        %p140 = pneg %p57
      $region14: #{vit_forward.25} parent=11 // pred_check_branch
        %142 = sbr.rel (%p140) target = $region16
      $region15: #{vit_forward.25} parent=11 // pred_region
        _
      $region16: #{vit_forward.25} parent=11 // pred_fallthru
        _
      // Predicated region
      $region17: #{vit_forward.25} parent=11 // pred_check
        %p143 = pneg %p78
      $region18: #{vit_forward.25} parent=11 // pred_check_branch
        %145 = sbr.rel (%p143) target = $region20
      $region19: #{vit_forward.25} parent=11 // pred_region
        _
      $region20: #{vit_forward.25} parent=11 // pred_fallthru
        _
      // Predicated region
      $region21: #{vit_forward.25} parent=11 // pred_check
        %p146 = pneg %p99
      $region22: #{vit_forward.25} parent=11 // pred_check_branch
        %148 = sbr.rel (%p146) target = $region24
      $region23: #{vit_forward.25} parent=11 // pred_region
        _
      $region24: #{vit_forward.25} parent=11 // pred_fallthru
        _
    $region12: #{vit_forward.25} parent=5 // pred_fallthru
      _
    %p149 = scmp.lt.s32.totalorder %s10, 2
    // Predicated region
    $region25: #{vit_forward.25} parent=5 // pred_check
      %p150 = pneg %p149
    $region26: #{vit_forward.25} parent=5 // pred_check_branch
      %152 = sbr.rel (%p150) target = $region28
    $region27: #{vit_forward.25} parent=5 // pred_region
      // Predicated region
      $region29: #{vit_forward.25} parent=27 // pred_check
        %p153 = pneg %p30
      $region30: #{vit_forward.25} parent=27 // pred_check_branch
        %155 = sbr.rel (%p153) target = $region32
      $region31: #{vit_forward.25} parent=27 // pred_region
        %p156 = scmp.lt.s32.totalorder %s10, 1
        %s157 = scalar_select %p156, %s10, 1
        %s158 = smul.addr %s157, 6
        %s159 = smul.addr %s158, 4
        %s160 = scalar_lea.vmem %s0, %s159
      $region32: #{vit_forward.25} parent=27 // pred_fallthru
        _
    $region28: #{vit_forward.25} parent=5 // pred_fallthru
      _
    %p161 = scmp.le.s32.totalorder 1, %s10
    %p162 = scmp.lt.s32.totalorder %s10, 3
    %p163 = pnand %p161, %p162
    %p164 = pneg %p163
    // Predicated region
    $region33: #{vit_forward.25} parent=5 // pred_check
      _
    $region34: #{vit_forward.25} parent=5 // pred_check_branch
      %166 = sbr.rel (%p163) target = $region36
    $region35: #{vit_forward.25} parent=5 // pred_region
      %s167 = ssub.s32 %s10, 1
      %p168 = scmp.lt.s32.totalorder %s15, 1
      %s169 = scalar_select %p168, %s15, 1
      %s170 = smul.addr %s169, 6
      %s171 = smul.addr %s170, 4
      %s172 = scalar_lea.vmem %s0, %s171
      %p173 = pneg %p36
      %p174 = pneg %p33
      %p175 = pneg %p57
      %p176 = pneg %p54
      %p177 = pneg %p78
      %p178 = pneg %p75
      %p179 = pneg %p99
      %p180 = pneg %p96
      %p181 = pneg %p125
      %p182 = pneg %p122
      %p183 = scmp.lt.s32.totalorder %s15, 1
      %s184 = scalar_select %p183, %s15, 1
      %s185 = smul.addr %s184, 3
      %s186 = smul.addr %s185, 8
      %s187 = scalar_lea.vmem %s4, %s186
      %p188 = scmp.lt.s32.totalorder %s15, 1
      %s189 = scalar_select %p188, %s15, 1
      %s190 = smul.addr %s189, 6
      %s191 = smul.addr %s190, 4
      %s192 = scalar_lea.vmem %s0, %s191
      %p193 = scmp.lt.s32.totalorder %s15, 1
      %s194 = scalar_select %p193, %s15, 1
      %s195 = smul.addr %s194, 3
      %s196 = smul.addr %s195, 8
      %s197 = scalar_lea.vmem %s4, %s196
      %vm199 = vcmask 130048
      %200 = vst.msk [vmem:[#allocation2] sm:$0xff] %vm199, 0.0
      %201 = vst.msk [vmem:[#allocation2 + $0x8] sm:$0xff] %vm199, 0.0
      %202 = vst.msk [vmem:[#allocation2 + $0x10] sm:$0xff] %vm199, 0.0
      %v203 = vld [vmem:[%s192] sm:$0xf]
      %v204 = vld [vmem:[%s192 + $0x4] sm:$0xf]
      %v205 = vld [vmem:[%s192 + $0x8] sm:$0xf]
      %v206 = vld [vmem:[#allocation2] sm:$0xff]
      %v207 = vld [vmem:[#allocation2 + $0x8] sm:$0xff]
      %v208 = vld [vmem:[#allocation2 + $0x10] sm:$0xff]
      %v209 = vld [vmem:[%s1] sm:$0xf]
      %v210 = vld [vmem:[%s1 + $0x4] sm:$0xf]
      %v214 = vunpack.c.l.b16 %v203
      %v215 = vunpack.c.l.b16 %v204
      %v216 = vunpack.c.l.b16 %v205
      %v217 = vpack.c.b16 %v215, %v214
      %v218 = vpack.c.b16 %v216, %v216
      %v221 = vunpack.c.l.b16 %v209
      %v222 = vunpack.c.l.b16 %v210
      %v223 = vpack.c.b16 %v222, %v221
      %v226 = vsel %vm199, %v217, 0
      %v229 = vsel %vm199, %v218, 0
      %231 = vmatprep.subr.bf16.mxu0 0
      %232 = vmatpush1.bf16.msra.mxu0 0
      %233 = vmatprep.subr.bf16.mxu0 0
      %234 = vmatpush1.bf16.msra.mxu0 0
      %235 = vmatprep.subr.bf16.mxu0 0
      %236 = vmatpush1.bf16.msra.mxu0 0
      %237 = vmatprep.subr.bf16.mxu0 0
      %238 = vmatpush1.bf16.msra.mxu0 0
      %239 = vmatprep.subr.bf16.mxu0 0
      %240 = vmatpush1.bf16.msra.mxu0 0
      %241 = vmatprep.subr.bf16.mxu0 0
      %242 = vmatpush1.bf16.msra.mxu0 0
      %243 = vmatprep.subr.bf16.mxu0 0
      %244 = vmatpush1.bf16.msra.mxu0 0
      %245 = vmatprep.subr.bf16.mxu0 0
      %246 = vmatpush1.bf16.msra.mxu0 %v223
      %247 = vmatprep.subr.bf16.mxu0 0
      %248 = vmatpush2.bf16.msra.mxu0 0
      %249 = vmatprep.subr.bf16.mxu0 0
      %250 = vmatpush2.bf16.msra.mxu0 0
      %251 = vmatprep.subr.bf16.mxu0 0
      %252 = vmatpush2.bf16.msra.mxu0 0
      %253 = vmatprep.subr.bf16.mxu0 0
      %254 = vmatpush2.bf16.msra.mxu0 0
      %255 = vmatprep.subr.bf16.mxu0 0
      %256 = vmatpush2.bf16.msra.mxu0 0
      %257 = vmatprep.subr.bf16.mxu0 0
      %258 = vmatpush2.bf16.msra.mxu0 0
      %259 = vmatprep.subr.bf16.mxu0 0
      %260 = vmatpush2.bf16.msra.mxu0 0
      %261 = vmatprep.subr.bf16.mxu0 0
      %262 = vmatpush2.bf16.msra.mxu0 0
      %263 = vmatprep.mubr.bf16.mxu0 0
      %264 = vmatmul.mubr.bf16.gmra.mxu0 %v226
      %v265 = vpop.f32.mrf.mxu0
      %v266 = vadd.f32 0.0, %v265
      %v267 = vpop.f32.mrf.mxu0
      %v268 = vpop.f32.mrf.mxu0
      %v269 = vadd.f32 0.0, %v268
      %v270 = vpop.f32.mrf.mxu0
      %271 = vmatprep.mubr.bf16.mxu0 0
      %272 = vmatmul.mubr.bf16.gmra.mxu0 %v229
      %v273 = vpop.f32.mrf.mxu0
      %v274 = vadd.f32 0.0, %v273
      %v275 = vpop.f32.mrf.mxu0
      %v276 = vpop.f32.mrf.mxu0
      %v277 = vpop.f32.mrf.mxu0
      %278 = vdwg.mxu0
      %v279 = vadd.f32 %v206, %v266
      %v280 = vadd.f32 %v207, %v269
      %v281 = vadd.f32 %v208, %v274
      %282 = vst.msk [vmem:[#allocation2] sm:$0xff] %vm199, %v279
      %283 = vst.msk [vmem:[#allocation2 + $0x8] sm:$0xff] %vm199, %v280
      %284 = vst.msk [vmem:[#allocation2 + $0x10] sm:$0xff] %vm199, %v281
      %v285 = vld [vmem:[%s192] sm:$0xf]
      %v286 = vld [vmem:[%s192 + $0x4] sm:$0xf]
      %v287 = vld [vmem:[%s192 + $0x8] sm:$0xf]
      %v288 = vld [vmem:[%s192 + $0xc] sm:$0x1]
      %v289 = vld [vmem:[#allocation2] sm:$0xff]
      %v290 = vld [vmem:[#allocation2 + $0x8] sm:$0xff]
      %v291 = vld [vmem:[#allocation2 + $0x10] sm:$0xff]
      %s292 = scalar_lea.vmem %s1, 8
      %v293 = vld [vmem:[%s292] sm:$0xf]
      %v294 = vld [vmem:[%s292 + $0x4] sm:$0xf]
      %v299 = vunpack.c.l.b16 %v285
      %v300 = vunpack.c.l.b16 %v286
      %v301 = vunpack.c.l.b16 %v287
      %v302 = vunpack.c.l.b16 %v288
      %v303 = vpack.c.b16 %v300, %v299
      %v304 = vpack.c.b16 %v302, %v301
      %vm305 = vsmask.f32 7424
      %v307 = vshrl.u32 %v303, 16
      %v309 = vshll.u32 %v303, 16
      %v311 = vrot.slane %v309, 1
      %v312 = vor.u32 %v307, %v311
      %v314 = vshll.u32 %v304, 16
      %v316 = vrot.slane %v314, 1
      %v317 = vsel %vm305, %v312, %v316
      %v318 = vshrl.u32 %v304, 16
      %v320 = vor.u32 %v318, %v316
      %v323 = vunpack.c.l.b16 %v293
      %v324 = vunpack.c.l.b16 %v294
      %v325 = vpack.c.b16 %v324, %v323
      %v328 = vsel %vm199, %v317, 0
      %v331 = vsel %vm199, %v320, 0
      %333 = vmatprep.subr.bf16.mxu0 0
      %334 = vmatpush1.bf16.msra.mxu0 0
      %335 = vmatprep.subr.bf16.mxu0 0
      %336 = vmatpush1.bf16.msra.mxu0 0
      %337 = vmatprep.subr.bf16.mxu0 0
      %338 = vmatpush1.bf16.msra.mxu0 0
      %339 = vmatprep.subr.bf16.mxu0 0
      %340 = vmatpush1.bf16.msra.mxu0 0
      %341 = vmatprep.subr.bf16.mxu0 0
      %342 = vmatpush1.bf16.msra.mxu0 0
      %343 = vmatprep.subr.bf16.mxu0 0
      %344 = vmatpush1.bf16.msra.mxu0 0
      %345 = vmatprep.subr.bf16.mxu0 0
      %346 = vmatpush1.bf16.msra.mxu0 0
      %347 = vmatprep.subr.bf16.mxu0 0
      %348 = vmatpush1.bf16.msra.mxu0 %v325
      %349 = vmatprep.subr.bf16.mxu0 0
      %350 = vmatpush2.bf16.msra.mxu0 0
      %351 = vmatprep.subr.bf16.mxu0 0
      %352 = vmatpush2.bf16.msra.mxu0 0
      %353 = vmatprep.subr.bf16.mxu0 0
      %354 = vmatpush2.bf16.msra.mxu0 0
      %355 = vmatprep.subr.bf16.mxu0 0
      %356 = vmatpush2.bf16.msra.mxu0 0
      %357 = vmatprep.subr.bf16.mxu0 0
      %358 = vmatpush2.bf16.msra.mxu0 0
      %359 = vmatprep.subr.bf16.mxu0 0
      %360 = vmatpush2.bf16.msra.mxu0 0
      %361 = vmatprep.subr.bf16.mxu0 0
      %362 = vmatpush2.bf16.msra.mxu0 0
      %363 = vmatprep.subr.bf16.mxu0 0
      %364 = vmatpush2.bf16.msra.mxu0 0
      %365 = vmatprep.mubr.bf16.mxu0 0
      %366 = vmatmul.mubr.bf16.gmra.mxu0 %v328
      %v367 = vpop.f32.mrf.mxu0
      %v368 = vadd.f32 0.0, %v367
      %v369 = vpop.f32.mrf.mxu0
      %v370 = vpop.f32.mrf.mxu0
      %v371 = vadd.f32 0.0, %v370
      %v372 = vpop.f32.mrf.mxu0
      %373 = vmatprep.mubr.bf16.mxu0 0
      %374 = vmatmul.mubr.bf16.gmra.mxu0 %v331
      %v375 = vpop.f32.mrf.mxu0
      %v376 = vadd.f32 0.0, %v375
      %v377 = vpop.f32.mrf.mxu0
      %v378 = vpop.f32.mrf.mxu0
      %v379 = vpop.f32.mrf.mxu0
      %380 = vdwg.mxu0
      %v381 = vadd.f32 %v289, %v368
      %v382 = vadd.f32 %v290, %v371
      %v383 = vadd.f32 %v291, %v376
      %384 = vst.msk [vmem:[#allocation2] sm:$0xff] %vm199, %v381
      %385 = vst.msk [vmem:[#allocation2 + $0x8] sm:$0xff] %vm199, %v382
      %386 = vst.msk [vmem:[#allocation2 + $0x10] sm:$0xff] %vm199, %v383
      %v387 = vld [vmem:[%s192] sm:$0xe]
      %v388 = vld [vmem:[%s192 + $0x4] sm:$0xf]
      %v389 = vld [vmem:[%s192 + $0x8] sm:$0xf]
      %v390 = vld [vmem:[%s192 + $0xc] sm:$0x1]
      %v391 = vld [vmem:[#allocation2] sm:$0xff]
      %v392 = vld [vmem:[#allocation2 + $0x8] sm:$0xff]
      %v393 = vld [vmem:[#allocation2 + $0x10] sm:$0xff]
      %s394 = scalar_lea.vmem %s1, 16
      %v395 = vld [vmem:[%s394] sm:$0xf]
      %v396 = vld [vmem:[%s394 + $0x4] sm:$0xf]
      %v401 = vunpack.c.l.b16 %v387
      %v402 = vunpack.c.l.b16 %v388
      %v403 = vunpack.c.l.b16 %v389
      %v404 = vunpack.c.l.b16 %v390
      %v405 = vpack.c.b16 %v402, %v401
      %v406 = vpack.c.b16 %v404, %v403
      %vm407 = vcmask 1046528
      %v408 = vrot.slane %v405, 1
      %v409 = vrot.slane %v406, 1
      %v410 = vsel %vm407, %v408, %v409
      %v413 = vunpack.c.l.b16 %v395
      %v414 = vunpack.c.l.b16 %v396
      %v415 = vpack.c.b16 %v414, %v413
      %v418 = vsel %vm199, %v410, 0
      %v421 = vsel %vm199, %v409, 0
      %423 = vmatprep.subr.bf16.mxu0 0
      %424 = vmatpush1.bf16.msra.mxu0 0
      %425 = vmatprep.subr.bf16.mxu0 0
      %426 = vmatpush1.bf16.msra.mxu0 0
      %427 = vmatprep.subr.bf16.mxu0 0
      %428 = vmatpush1.bf16.msra.mxu0 0
      %429 = vmatprep.subr.bf16.mxu0 0
      %430 = vmatpush1.bf16.msra.mxu0 0
      %431 = vmatprep.subr.bf16.mxu0 0
      %432 = vmatpush1.bf16.msra.mxu0 0
      %433 = vmatprep.subr.bf16.mxu0 0
      %434 = vmatpush1.bf16.msra.mxu0 0
      %435 = vmatprep.subr.bf16.mxu0 0
      %436 = vmatpush1.bf16.msra.mxu0 0
      %437 = vmatprep.subr.bf16.mxu0 0
      %438 = vmatpush1.bf16.msra.mxu0 %v415
      %439 = vmatprep.subr.bf16.mxu0 0
      %440 = vmatpush2.bf16.msra.mxu0 0
      %441 = vmatprep.subr.bf16.mxu0 0
      %442 = vmatpush2.bf16.msra.mxu0 0
      %443 = vmatprep.subr.bf16.mxu0 0
      %444 = vmatpush2.bf16.msra.mxu0 0
      %445 = vmatprep.subr.bf16.mxu0 0
      %446 = vmatpush2.bf16.msra.mxu0 0
      %447 = vmatprep.subr.bf16.mxu0 0
      %448 = vmatpush2.bf16.msra.mxu0 0
      %449 = vmatprep.subr.bf16.mxu0 0
      %450 = vmatpush2.bf16.msra.mxu0 0
      %451 = vmatprep.subr.bf16.mxu0 0
      %452 = vmatpush2.bf16.msra.mxu0 0
      %453 = vmatprep.subr.bf16.mxu0 0
      %454 = vmatpush2.bf16.msra.mxu0 0
      %455 = vmatprep.mubr.bf16.mxu0 0
      %456 = vmatmul.mubr.bf16.gmra.mxu0 %v418
      %v457 = vpop.f32.mrf.mxu0
      %v458 = vadd.f32 0.0, %v457
      %v459 = vpop.f32.mrf.mxu0
      %v460 = vpop.f32.mrf.mxu0
      %v461 = vadd.f32 0.0, %v460
      %v462 = vpop.f32.mrf.mxu0
      %463 = vmatprep.mubr.bf16.mxu0 0
      %464 = vmatmul.mubr.bf16.gmra.mxu0 %v421
      %v465 = vpop.f32.mrf.mxu0
      %v466 = vadd.f32 0.0, %v465
      %v467 = vpop.f32.mrf.mxu0
      %v468 = vpop.f32.mrf.mxu0
      %v469 = vpop.f32.mrf.mxu0
      %470 = vdwg.mxu0
      %v471 = vadd.f32 %v391, %v458
      %v472 = vadd.f32 %v392, %v461
      %v473 = vadd.f32 %v393, %v466
      %474 = vst.msk [vmem:[#allocation2] sm:$0xff] %vm199, %v471
      %475 = vst.msk [vmem:[#allocation2 + $0x8] sm:$0xff] %vm199, %v472
      %476 = vst.msk [vmem:[#allocation2 + $0x10] sm:$0xff] %vm199, %v473
      %v477 = vld [vmem:[%s192] sm:$0x8]
      %v478 = vld [vmem:[%s192 + $0x4] sm:$0xf]
      %v479 = vld [vmem:[%s192 + $0x8] sm:$0xf]
      %v480 = vld [vmem:[%s192 + $0xc] sm:$0x7]
      %v481 = vld [vmem:[#allocation2] sm:$0xff]
      %v482 = vld [vmem:[#allocation2 + $0x8] sm:$0xff]
      %v483 = vld [vmem:[#allocation2 + $0x10] sm:$0xff]
      %s484 = scalar_lea.vmem %s1, 24
      %v485 = vld [vmem:[%s484] sm:$0xf]
      %v486 = vld [vmem:[%s484 + $0x4] sm:$0xf]
      %v491 = vunpack.c.l.b16 %v477
      %v492 = vunpack.c.l.b16 %v478
      %v493 = vunpack.c.l.b16 %v479
      %v494 = vunpack.c.l.b16 %v480
      %v495 = vpack.c.b16 %v492, %v491
      %v496 = vpack.c.b16 %v494, %v493
      %vm497 = vcmask 1044480
      %v498 = vrot.slane %v495, 3
      %v499 = vrot.slane %v496, 3
      %v500 = vsel %vm497, %v498, %v499
      %v503 = vunpack.c.l.b16 %v485
      %v504 = vunpack.c.l.b16 %v486
      %v505 = vpack.c.b16 %v504, %v503
      %v508 = vsel %vm199, %v500, 0
      %v511 = vsel %vm199, %v499, 0
      %513 = vmatprep.subr.bf16.mxu0 0
      %514 = vmatpush1.bf16.msra.mxu0 0
      %515 = vmatprep.subr.bf16.mxu0 0
      %516 = vmatpush1.bf16.msra.mxu0 0
      %517 = vmatprep.subr.bf16.mxu0 0
      %518 = vmatpush1.bf16.msra.mxu0 0
      %519 = vmatprep.subr.bf16.mxu0 0
      %520 = vmatpush1.bf16.msra.mxu0 0
      %521 = vmatprep.subr.bf16.mxu0 0
      %522 = vmatpush1.bf16.msra.mxu0 0
      %523 = vmatprep.subr.bf16.mxu0 0
      %524 = vmatpush1.bf16.msra.mxu0 0
      %525 = vmatprep.subr.bf16.mxu0 0
      %526 = vmatpush1.bf16.msra.mxu0 0
      %527 = vmatprep.subr.bf16.mxu0 0
      %528 = vmatpush1.bf16.msra.mxu0 %v505
      %529 = vmatprep.subr.bf16.mxu0 0
      %530 = vmatpush2.bf16.msra.mxu0 0
      %531 = vmatprep.subr.bf16.mxu0 0
      %532 = vmatpush2.bf16.msra.mxu0 0
      %533 = vmatprep.subr.bf16.mxu0 0
      %534 = vmatpush2.bf16.msra.mxu0 0
      %535 = vmatprep.subr.bf16.mxu0 0
      %536 = vmatpush2.bf16.msra.mxu0 0
      %537 = vmatprep.subr.bf16.mxu0 0
      %538 = vmatpush2.bf16.msra.mxu0 0
      %539 = vmatprep.subr.bf16.mxu0 0
      %540 = vmatpush2.bf16.msra.mxu0 0
      %541 = vmatprep.subr.bf16.mxu0 0
      %542 = vmatpush2.bf16.msra.mxu0 0
      %543 = vmatprep.subr.bf16.mxu0 0
      %544 = vmatpush2.bf16.msra.mxu0 0
      %545 = vmatprep.mubr.bf16.mxu0 0
      %546 = vmatmul.mubr.bf16.gmra.mxu0 %v508
      %v547 = vpop.f32.mrf.mxu0
      %v548 = vadd.f32 0.0, %v547
      %v549 = vpop.f32.mrf.mxu0
      %v550 = vpop.f32.mrf.mxu0
      %v551 = vadd.f32 0.0, %v550
      %v552 = vpop.f32.mrf.mxu0
      %553 = vmatprep.mubr.bf16.mxu0 0
      %554 = vmatmul.mubr.bf16.gmra.mxu0 %v511
      %v555 = vpop.f32.mrf.mxu0
      %v556 = vadd.f32 0.0, %v555
      %v557 = vpop.f32.mrf.mxu0
      %v558 = vpop.f32.mrf.mxu0
      %v559 = vpop.f32.mrf.mxu0
      %560 = vdwg.mxu0
      %v561 = vadd.f32 %v481, %v548
      %v562 = vadd.f32 %v482, %v551
      %v563 = vadd.f32 %v483, %v556
      %564 = vst.msk [vmem:[#allocation2] sm:$0xff] %vm199, %v561
      %565 = vst.msk [vmem:[#allocation2 + $0x8] sm:$0xff] %vm199, %v562
      %566 = vst.msk [vmem:[#allocation2 + $0x10] sm:$0xff] %vm199, %v563
      %v567 = vld [vmem:[%s192] sm:$0x8]
      %v568 = vld [vmem:[%s192 + $0x4] sm:$0xf]
      %v569 = vld [vmem:[%s192 + $0x8] sm:$0xf]
      %v570 = vld [vmem:[%s192 + $0xc] sm:$0xf]
      %v571 = vld [vmem:[#allocation2] sm:$0xff]
      %v572 = vld [vmem:[#allocation2 + $0x8] sm:$0xff]
      %v573 = vld [vmem:[#allocation2 + $0x10] sm:$0xff]
      %s574 = scalar_lea.vmem %s1, 32
      %v575 = vld [vmem:[%s574] sm:$0xf]
      %v576 = vld [vmem:[%s574 + $0x4] sm:$0xf]
      %v581 = vunpack.c.l.b16 %v567
      %v582 = vunpack.c.l.b16 %v568
      %v583 = vunpack.c.l.b16 %v569
      %v584 = vunpack.c.l.b16 %v570
      %v585 = vpack.c.b16 %v582, %v581
      %v586 = vpack.c.b16 %v584, %v583
      %vm587 = vsmask.f32 4352
      %v589 = vshrl.u32 %v585, 16
      %v591 = vrot.slane %v589, 3
      %v592 = vshll.u32 %v585, 16
      %v594 = vrot.slane %v592, 4
      %v595 = vor.u32 %v591, %v594
      %v597 = vshrl.u32 %v586, 16
      %v599 = vrot.slane %v597, 3
      %v600 = vshll.u32 %v586, 16
      %v602 = vrot.slane %v600, 4
      %v603 = vor.u32 %v599, %v602
      %v604 = vsel %vm587, %v595, %v603
      %v607 = vunpack.c.l.b16 %v575
      %v608 = vunpack.c.l.b16 %v576
      %v609 = vpack.c.b16 %v608, %v607
      %v612 = vsel %vm199, %v604, 0
      %v615 = vsel %vm199, %v603, 0
      %617 = vmatprep.subr.bf16.mxu0 0
      %618 = vmatpush1.bf16.msra.mxu0 0
      %619 = vmatprep.subr.bf16.mxu0 0
      %620 = vmatpush1.bf16.msra.mxu0 0
      %621 = vmatprep.subr.bf16.mxu0 0
      %622 = vmatpush1.bf16.msra.mxu0 0
      %623 = vmatprep.subr.bf16.mxu0 0
      %624 = vmatpush1.bf16.msra.mxu0 0
      %625 = vmatprep.subr.bf16.mxu0 0
      %626 = vmatpush1.bf16.msra.mxu0 0
      %627 = vmatprep.subr.bf16.mxu0 0
      %628 = vmatpush1.bf16.msra.mxu0 0
      %629 = vmatprep.subr.bf16.mxu0 0
      %630 = vmatpush1.bf16.msra.mxu0 0
      %631 = vmatprep.subr.bf16.mxu0 0
      %632 = vmatpush1.bf16.msra.mxu0 %v609
      %633 = vmatprep.subr.bf16.mxu0 0
      %634 = vmatpush2.bf16.msra.mxu0 0
      %635 = vmatprep.subr.bf16.mxu0 0
      %636 = vmatpush2.bf16.msra.mxu0 0
      %637 = vmatprep.subr.bf16.mxu0 0
      %638 = vmatpush2.bf16.msra.mxu0 0
      %639 = vmatprep.subr.bf16.mxu0 0
      %640 = vmatpush2.bf16.msra.mxu0 0
      %641 = vmatprep.subr.bf16.mxu0 0
      %642 = vmatpush2.bf16.msra.mxu0 0
      %643 = vmatprep.subr.bf16.mxu0 0
      %644 = vmatpush2.bf16.msra.mxu0 0
      %645 = vmatprep.subr.bf16.mxu0 0
      %646 = vmatpush2.bf16.msra.mxu0 0
      %647 = vmatprep.subr.bf16.mxu0 0
      %648 = vmatpush2.bf16.msra.mxu0 0
      %649 = vmatprep.mubr.bf16.mxu0 0
      %650 = vmatmul.mubr.bf16.gmra.mxu0 %v612
      %v651 = vpop.f32.mrf.mxu0
      %v652 = vadd.f32 0.0, %v651
      %v653 = vpop.f32.mrf.mxu0
      %v654 = vpop.f32.mrf.mxu0
      %v655 = vadd.f32 0.0, %v654
      %v656 = vpop.f32.mrf.mxu0
      %657 = vmatprep.mubr.bf16.mxu0 0
      %658 = vmatmul.mubr.bf16.gmra.mxu0 %v615
      %v659 = vpop.f32.mrf.mxu0
      %v660 = vadd.f32 0.0, %v659
      %v661 = vpop.f32.mrf.mxu0
      %v662 = vpop.f32.mrf.mxu0
      %v663 = vpop.f32.mrf.mxu0
      %664 = vdwg.mxu0
      %v665 = vadd.f32 %v571, %v652
      %v666 = vadd.f32 %v572, %v655
      %v667 = vadd.f32 %v573, %v660
      %668 = vst.msk [vmem:[#allocation2] sm:$0xff] %vm199, %v665
      %669 = vst.msk [vmem:[#allocation2 + $0x8] sm:$0xff] %vm199, %v666
      %670 = vst.msk [vmem:[#allocation2 + $0x10] sm:$0xff] %vm199, %v667
      %v671 = vld [vmem:[%s192 + $0x4] sm:$0xf]
      %v672 = vld [vmem:[%s192 + $0x8] sm:$0xf]
      %v673 = vld [vmem:[%s192 + $0xc] sm:$0xf]
      %v674 = vld [vmem:[#allocation2] sm:$0xff]
      %v675 = vld [vmem:[#allocation2 + $0x8] sm:$0xff]
      %v676 = vld [vmem:[#allocation2 + $0x10] sm:$0xff]
      %s677 = scalar_lea.vmem %s1, 40
      %v678 = vld [vmem:[%s677] sm:$0xf]
      %v679 = vld [vmem:[%s677 + $0x4] sm:$0xf]
      %v683 = vunpack.c.l.b16 %v671
      %v684 = vunpack.c.l.b16 %v672
      %v685 = vunpack.c.l.b16 %v673
      %v686 = vpack.c.b16 %v684, %v683
      %v687 = vpack.c.b16 %v685, %v685
      %v690 = vunpack.c.l.b16 %v678
      %v691 = vunpack.c.l.b16 %v679
      %v692 = vpack.c.b16 %v691, %v690
      %v695 = vsel %vm199, %v686, 0
      %v698 = vsel %vm199, %v687, 0
      %700 = vmatprep.subr.bf16.mxu0 0
      %701 = vmatpush1.bf16.msra.mxu0 0
      %702 = vmatprep.subr.bf16.mxu0 0
      %703 = vmatpush1.bf16.msra.mxu0 0
      %704 = vmatprep.subr.bf16.mxu0 0
      %705 = vmatpush1.bf16.msra.mxu0 0
      %706 = vmatprep.subr.bf16.mxu0 0
      %707 = vmatpush1.bf16.msra.mxu0 0
      %708 = vmatprep.subr.bf16.mxu0 0
      %709 = vmatpush1.bf16.msra.mxu0 0
      %710 = vmatprep.subr.bf16.mxu0 0
      %711 = vmatpush1.bf16.msra.mxu0 0
      %712 = vmatprep.subr.bf16.mxu0 0
      %713 = vmatpush1.bf16.msra.mxu0 0
      %714 = vmatprep.subr.bf16.mxu0 0
      %715 = vmatpush1.bf16.msra.mxu0 %v692
      %716 = vmatprep.subr.bf16.mxu0 0
      %717 = vmatpush2.bf16.msra.mxu0 0
      %718 = vmatprep.subr.bf16.mxu0 0
      %719 = vmatpush2.bf16.msra.mxu0 0
      %720 = vmatprep.subr.bf16.mxu0 0
      %721 = vmatpush2.bf16.msra.mxu0 0
      %722 = vmatprep.subr.bf16.mxu0 0
      %723 = vmatpush2.bf16.msra.mxu0 0
      %724 = vmatprep.subr.bf16.mxu0 0
      %725 = vmatpush2.bf16.msra.mxu0 0
      %726 = vmatprep.subr.bf16.mxu0 0
      %727 = vmatpush2.bf16.msra.mxu0 0
      %728 = vmatprep.subr.bf16.mxu0 0
      %729 = vmatpush2.bf16.msra.mxu0 0
      %730 = vmatprep.subr.bf16.mxu0 0
      %731 = vmatpush2.bf16.msra.mxu0 0
      %732 = vmatprep.mubr.bf16.mxu0 0
      %733 = vmatmul.mubr.bf16.gmra.mxu0 %v695
      %v734 = vpop.f32.mrf.mxu0
      %v735 = vadd.f32 0.0, %v734
      %v736 = vpop.f32.mrf.mxu0
      %v737 = vpop.f32.mrf.mxu0
      %v738 = vadd.f32 0.0, %v737
      %v739 = vpop.f32.mrf.mxu0
      %740 = vmatprep.mubr.bf16.mxu0 0
      %741 = vmatmul.mubr.bf16.gmra.mxu0 %v698
      %v742 = vpop.f32.mrf.mxu0
      %v743 = vadd.f32 0.0, %v742
      %v744 = vpop.f32.mrf.mxu0
      %v745 = vpop.f32.mrf.mxu0
      %v746 = vpop.f32.mrf.mxu0
      %747 = vdwg.mxu0
      %v748 = vadd.f32 %v674, %v735
      %v749 = vadd.f32 %v675, %v738
      %v750 = vadd.f32 %v676, %v743
      %751 = vst.msk [vmem:[#allocation2] sm:$0xff] %vm199, %v748
      %752 = vst.msk [vmem:[#allocation2 + $0x8] sm:$0xff] %vm199, %v749
      %753 = vst.msk [vmem:[#allocation2 + $0x10] sm:$0xff] %vm199, %v750
      %v754 = vld [vmem:[%s192 + $0x4] sm:$0xc]
      %v755 = vld [vmem:[%s192 + $0x8] sm:$0xf]
      %v756 = vld [vmem:[%s192 + $0xc] sm:$0xf]
      %v757 = vld [vmem:[%s192 + $0x10] sm:$0x3]
      %v758 = vld [vmem:[#allocation2] sm:$0xff]
      %v759 = vld [vmem:[#allocation2 + $0x8] sm:$0xff]
      %v760 = vld [vmem:[#allocation2 + $0x10] sm:$0xff]
      %s761 = scalar_lea.vmem %s1, 48
      %v762 = vld [vmem:[%s761] sm:$0xf]
      %v763 = vld [vmem:[%s761 + $0x4] sm:$0xf]
      %v768 = vunpack.c.l.b16 %v754
      %v769 = vunpack.c.l.b16 %v755
      %v770 = vunpack.c.l.b16 %v756
      %v771 = vunpack.c.l.b16 %v757
      %v772 = vpack.c.b16 %v769, %v768
      %v773 = vpack.c.b16 %v771, %v770
      %vm774 = vcmask 1045504
      %v775 = vrot.slane %v772, 2
      %v776 = vrot.slane %v773, 2
      %v777 = vsel %vm774, %v775, %v776
      %v780 = vunpack.c.l.b16 %v762
      %v781 = vunpack.c.l.b16 %v763
      %v782 = vpack.c.b16 %v781, %v780
      %v785 = vsel %vm199, %v777, 0
      %v788 = vsel %vm199, %v776, 0
      %790 = vmatprep.subr.bf16.mxu0 0
      %791 = vmatpush1.bf16.msra.mxu0 0
      %792 = vmatprep.subr.bf16.mxu0 0
      %793 = vmatpush1.bf16.msra.mxu0 0
      %794 = vmatprep.subr.bf16.mxu0 0
      %795 = vmatpush1.bf16.msra.mxu0 0
      %796 = vmatprep.subr.bf16.mxu0 0
      %797 = vmatpush1.bf16.msra.mxu0 0
      %798 = vmatprep.subr.bf16.mxu0 0
      %799 = vmatpush1.bf16.msra.mxu0 0
      %800 = vmatprep.subr.bf16.mxu0 0
      %801 = vmatpush1.bf16.msra.mxu0 0
      %802 = vmatprep.subr.bf16.mxu0 0
      %803 = vmatpush1.bf16.msra.mxu0 0
      %804 = vmatprep.subr.bf16.mxu0 0
      %805 = vmatpush1.bf16.msra.mxu0 %v782
      %806 = vmatprep.subr.bf16.mxu0 0
      %807 = vmatpush2.bf16.msra.mxu0 0
      %808 = vmatprep.subr.bf16.mxu0 0
      %809 = vmatpush2.bf16.msra.mxu0 0
      %810 = vmatprep.subr.bf16.mxu0 0
      %811 = vmatpush2.bf16.msra.mxu0 0
      %812 = vmatprep.subr.bf16.mxu0 0
      %813 = vmatpush2.bf16.msra.mxu0 0
      %814 = vmatprep.subr.bf16.mxu0 0
      %815 = vmatpush2.bf16.msra.mxu0 0
      %816 = vmatprep.subr.bf16.mxu0 0
      %817 = vmatpush2.bf16.msra.mxu0 0
      %818 = vmatprep.subr.bf16.mxu0 0
      %819 = vmatpush2.bf16.msra.mxu0 0
      %820 = vmatprep.subr.bf16.mxu0 0
      %821 = vmatpush2.bf16.msra.mxu0 0
      %822 = vmatprep.mubr.bf16.mxu0 0
      %823 = vmatmul.mubr.bf16.gmra.mxu0 %v785
      %v824 = vpop.f32.mrf.mxu0
      %v825 = vadd.f32 0.0, %v824
      %v826 = vpop.f32.mrf.mxu0
      %v827 = vpop.f32.mrf.mxu0
      %v828 = vadd.f32 0.0, %v827
      %v829 = vpop.f32.mrf.mxu0
      %830 = vmatprep.mubr.bf16.mxu0 0
      %831 = vmatmul.mubr.bf16.gmra.mxu0 %v788
      %v832 = vpop.f32.mrf.mxu0
      %v833 = vadd.f32 0.0, %v832
      %v834 = vpop.f32.mrf.mxu0
      %v835 = vpop.f32.mrf.mxu0
      %v836 = vpop.f32.mrf.mxu0
      %837 = vdwg.mxu0
      %v838 = vadd.f32 %v758, %v825
      %v839 = vadd.f32 %v759, %v828
      %v840 = vadd.f32 %v760, %v833
      %841 = vst.msk [vmem:[#allocation2] sm:$0xff] %vm199, %v838
      %842 = vst.msk [vmem:[#allocation2 + $0x8] sm:$0xff] %vm199, %v839
      %843 = vst.msk [vmem:[#allocation2 + $0x10] sm:$0xff] %vm199, %v840
      %v844 = vld [vmem:[%s192 + $0x4] sm:$0xc]
      %v845 = vld [vmem:[%s192 + $0x8] sm:$0xf]
      %v846 = vld [vmem:[%s192 + $0xc] sm:$0xf]
      %v847 = vld [vmem:[%s192 + $0x10] sm:$0x7]
      %v848 = vld [vmem:[#allocation2] sm:$0xff]
      %v849 = vld [vmem:[#allocation2 + $0x8] sm:$0xff]
      %v850 = vld [vmem:[#allocation2 + $0x10] sm:$0xff]
      %s851 = scalar_lea.vmem %s1, 56
      %v852 = vld [vmem:[%s851] sm:$0xf]
      %v853 = vld [vmem:[%s851 + $0x4] sm:$0xf]
      %v858 = vunpack.c.l.b16 %v844
      %v859 = vunpack.c.l.b16 %v845
      %v860 = vunpack.c.l.b16 %v846
      %v861 = vunpack.c.l.b16 %v847
      %v862 = vpack.c.b16 %v859, %v858
      %v863 = vpack.c.b16 %v861, %v860
      %vm864 = vsmask.f32 5376
      %v866 = vshrl.u32 %v862, 16
      %v868 = vrot.slane %v866, 2
      %v869 = vshll.u32 %v862, 16
      %v871 = vrot.slane %v869, 3
      %v872 = vor.u32 %v868, %v871
      %v874 = vshrl.u32 %v863, 16
      %v876 = vrot.slane %v874, 2
      %v877 = vshll.u32 %v863, 16
      %v879 = vrot.slane %v877, 3
      %v880 = vor.u32 %v876, %v879
      %v881 = vsel %vm864, %v872, %v880
      %v884 = vunpack.c.l.b16 %v852
      %v885 = vunpack.c.l.b16 %v853
      %v886 = vpack.c.b16 %v885, %v884
      %v889 = vsel %vm199, %v881, 0
      %v892 = vsel %vm199, %v880, 0
      %894 = vmatprep.subr.bf16.mxu0 0
      %895 = vmatpush1.bf16.msra.mxu0 0
      %896 = vmatprep.subr.bf16.mxu0 0
      %897 = vmatpush1.bf16.msra.mxu0 0
      %898 = vmatprep.subr.bf16.mxu0 0
      %899 = vmatpush1.bf16.msra.mxu0 0
      %900 = vmatprep.subr.bf16.mxu0 0
      %901 = vmatpush1.bf16.msra.mxu0 0
      %902 = vmatprep.subr.bf16.mxu0 0
      %903 = vmatpush1.bf16.msra.mxu0 0
      %904 = vmatprep.subr.bf16.mxu0 0
      %905 = vmatpush1.bf16.msra.mxu0 0
      %906 = vmatprep.subr.bf16.mxu0 0
      %907 = vmatpush1.bf16.msra.mxu0 0
      %908 = vmatprep.subr.bf16.mxu0 0
      %909 = vmatpush1.bf16.msra.mxu0 %v886
      %910 = vmatprep.subr.bf16.mxu0 0
      %911 = vmatpush2.bf16.msra.mxu0 0
      %912 = vmatprep.subr.bf16.mxu0 0
      %913 = vmatpush2.bf16.msra.mxu0 0
      %914 = vmatprep.subr.bf16.mxu0 0
      %915 = vmatpush2.bf16.msra.mxu0 0
      %916 = vmatprep.subr.bf16.mxu0 0
      %917 = vmatpush2.bf16.msra.mxu0 0
      %918 = vmatprep.subr.bf16.mxu0 0
      %919 = vmatpush2.bf16.msra.mxu0 0
      %920 = vmatprep.subr.bf16.mxu0 0
      %921 = vmatpush2.bf16.msra.mxu0 0
      %922 = vmatprep.subr.bf16.mxu0 0
      %923 = vmatpush2.bf16.msra.mxu0 0
      %924 = vmatprep.subr.bf16.mxu0 0
      %925 = vmatpush2.bf16.msra.mxu0 0
      %926 = vmatprep.mubr.bf16.mxu0 0
      %927 = vmatmul.mubr.bf16.gmra.mxu0 %v889
      %v928 = vpop.f32.mrf.mxu0
      %v929 = vadd.f32 0.0, %v928
      %v930 = vpop.f32.mrf.mxu0
      %v931 = vpop.f32.mrf.mxu0
      %v932 = vadd.f32 0.0, %v931
      %v933 = vpop.f32.mrf.mxu0
      %934 = vmatprep.mubr.bf16.mxu0 0
      %935 = vmatmul.mubr.bf16.gmra.mxu0 %v892
      %v936 = vpop.f32.mrf.mxu0
      %v937 = vadd.f32 0.0, %v936
      %v938 = vpop.f32.mrf.mxu0
      %v939 = vpop.f32.mrf.mxu0
      %v940 = vpop.f32.mrf.mxu0
      %941 = vdwg.mxu0
      %v942 = vadd.f32 %v848, %v929
      %v943 = vadd.f32 %v849, %v932
      %v944 = vadd.f32 %v850, %v937
      %945 = vst.msk [vmem:[#allocation2] sm:$0xff] %vm199, %v942
      %946 = vst.msk [vmem:[#allocation2 + $0x8] sm:$0xff] %vm199, %v943
      %947 = vst.msk [vmem:[#allocation2 + $0x10] sm:$0xff] %vm199, %v944
      %v948 = vld [vmem:[%s192 + $0x4] sm:$0x8]
      %v949 = vld [vmem:[%s192 + $0x8] sm:$0xf]
      %v950 = vld [vmem:[%s192 + $0xc] sm:$0xf]
      %v951 = vld [vmem:[%s192 + $0x10] sm:$0x7]
      %v952 = vld [vmem:[#allocation2] sm:$0xff]
      %v953 = vld [vmem:[#allocation2 + $0x8] sm:$0xff]
      %v954 = vld [vmem:[#allocation2 + $0x10] sm:$0xff]
      %s955 = scalar_lea.vmem %s1, 64
      %v956 = vld [vmem:[%s955] sm:$0xf]
      %v957 = vld [vmem:[%s955 + $0x4] sm:$0xf]
      %v962 = vunpack.c.l.b16 %v948
      %v963 = vunpack.c.l.b16 %v949
      %v964 = vunpack.c.l.b16 %v950
      %v965 = vunpack.c.l.b16 %v951
      %v966 = vpack.c.b16 %v963, %v962
      %v967 = vpack.c.b16 %v965, %v964
      %v968 = vrot.slane %v966, 3
      %v969 = vrot.slane %v967, 3
      %v970 = vsel %vm497, %v968, %v969
      %v973 = vunpack.c.l.b16 %v956
      %v974 = vunpack.c.l.b16 %v957
      %v975 = vpack.c.b16 %v974, %v973
      %v978 = vsel %vm199, %v970, 0
      %v981 = vsel %vm199, %v969, 0
      %983 = vmatprep.subr.bf16.mxu0 0
      %984 = vmatpush1.bf16.msra.mxu0 0
      %985 = vmatprep.subr.bf16.mxu0 0
      %986 = vmatpush1.bf16.msra.mxu0 0
      %987 = vmatprep.subr.bf16.mxu0 0
      %988 = vmatpush1.bf16.msra.mxu0 0
      %989 = vmatprep.subr.bf16.mxu0 0
      %990 = vmatpush1.bf16.msra.mxu0 0
      %991 = vmatprep.subr.bf16.mxu0 0
      %992 = vmatpush1.bf16.msra.mxu0 0
      %993 = vmatprep.subr.bf16.mxu0 0
      %994 = vmatpush1.bf16.msra.mxu0 0
      %995 = vmatprep.subr.bf16.mxu0 0
      %996 = vmatpush1.bf16.msra.mxu0 0
      %997 = vmatprep.subr.bf16.mxu0 0
      %998 = vmatpush1.bf16.msra.mxu0 %v975
      %999 = vmatprep.subr.bf16.mxu0 0
      %1000 = vmatpush2.bf16.msra.mxu0 0
      %1001 = vmatprep.subr.bf16.mxu0 0
      %1002 = vmatpush2.bf16.msra.mxu0 0
      %1003 = vmatprep.subr.bf16.mxu0 0
      %1004 = vmatpush2.bf16.msra.mxu0 0
      %1005 = vmatprep.subr.bf16.mxu0 0
      %1006 = vmatpush2.bf16.msra.mxu0 0
      %1007 = vmatprep.subr.bf16.mxu0 0
      %1008 = vmatpush2.bf16.msra.mxu0 0
      %1009 = vmatprep.subr.bf16.mxu0 0
      %1010 = vmatpush2.bf16.msra.mxu0 0
      %1011 = vmatprep.subr.bf16.mxu0 0
      %1012 = vmatpush2.bf16.msra.mxu0 0
      %1013 = vmatprep.subr.bf16.mxu0 0
      %1014 = vmatpush2.bf16.msra.mxu0 0
      %1015 = vmatprep.mubr.bf16.mxu0 0
      %1016 = vmatmul.mubr.bf16.gmra.mxu0 %v978
      %v1017 = vpop.f32.mrf.mxu0
      %v1018 = vadd.f32 0.0, %v1017
      %v1019 = vpop.f32.mrf.mxu0
      %v1020 = vpop.f32.mrf.mxu0
      %v1021 = vadd.f32 0.0, %v1020
      %v1022 = vpop.f32.mrf.mxu0
      %1023 = vmatprep.mubr.bf16.mxu0 0
      %1024 = vmatmul.mubr.bf16.gmra.mxu0 %v981
      %v1025 = vpop.f32.mrf.mxu0
      %v1026 = vadd.f32 0.0, %v1025
      %v1027 = vpop.f32.mrf.mxu0
      %v1028 = vpop.f32.mrf.mxu0
      %v1029 = vpop.f32.mrf.mxu0
      %1030 = vdwg.mxu0
      %v1031 = vadd.f32 %v952, %v1018
      %v1032 = vadd.f32 %v953, %v1021
      %v1033 = vadd.f32 %v954, %v1026
      %1034 = vst.msk [vmem:[#allocation2] sm:$0xff] %vm199, %v1031
      %1035 = vst.msk [vmem:[#allocation2 + $0x8] sm:$0xff] %vm199, %v1032
      %1036 = vst.msk [vmem:[#allocation2 + $0x10] sm:$0xff] %vm199, %v1033
      %v1037 = vld [vmem:[#allocation2] sm:$0xff]
      %v1038 = vld [vmem:[#allocation2 + $0x8] sm:$0xff]
      %v1039 = vld [vmem:[#allocation2 + $0x10] sm:$0xff]
      %v1040 = vsel %vm199, %v1037, 0.0
      %1041 = vadd.xlane.f32.xlu0 %v1040
      %v1042 = vpop.xlane.xlu0 %1041
      %v1043 = vsel %vm199, %v1038, 0.0
      %1044 = vadd.xlane.f32.xlu0 %v1043
      %v1045 = vpop.xlane.xlu0 %1044
      %v1046 = vsel %vm199, %v1039, 0.0
      %1047 = vadd.xlane.f32.xlu0 %v1046
      %v1048 = vpop.xlane.xlu0 %1047
      %v1049 = vrcp.pop 16.0
      %v1050 = vmul.f32 %v1042, %v1049
      %v1051 = vmul.f32 %v1045, %v1049
      %v1052 = vmul.f32 %v1048, %v1049
      %v1053 = vsub.f32 %v1037, %v1050
      %v1054 = vsub.f32 %v1038, %v1051
      %v1055 = vsub.f32 %v1039, %v1052
      %v1056 = vmul.f32 %v1053, %v1053
      %v1057 = vmul.f32 %v1054, %v1054
      %v1058 = vmul.f32 %v1055, %v1055
      %v1059 = vsel %vm199, %v1056, 0.0
      %1060 = vadd.xlane.f32.xlu0 %v1059
      %v1061 = vpop.xlane.xlu0 %1060
      %v1062 = vsel %vm199, %v1057, 0.0
      %1063 = vadd.xlane.f32.xlu0 %v1062
      %v1064 = vpop.xlane.xlu0 %1063
      %v1065 = vsel %vm199, %v1058, 0.0
      %1066 = vadd.xlane.f32.xlu0 %v1065
      %v1067 = vpop.xlane.xlu0 %1066
      %v1068 = vmul.f32 %v1061, %v1049
      %v1069 = vmul.f32 %v1064, %v1049
      %v1070 = vmul.f32 %v1067, %v1049
      %v1071 = vadd.f32 %v1068, 1e-06
      %v1072 = vadd.f32 %v1069, 1e-06
      %v1073 = vadd.f32 %v1070, 1e-06
      %v1074 = vrsqrt.pop %v1071
      %v1075 = vrsqrt.pop %v1072
      %v1076 = vrsqrt.pop %v1073
      %v1077 = vmul.f32 %v1053, %v1074
      %v1078 = vmul.f32 %v1054, %v1075
      %v1079 = vmul.f32 %v1055, %v1076
      %v1080 = vld [vmem:[%s2] sm:$0x1]
      %v1082 = vlaneseq
      %v1083 = vshrl.u32 %v1082, 7
      %v1084 = vsub.s32 0, %v1083
      %v1085 = vrot.slane %v1080, %v1084
      %v1087 = vmul.f32 %v1077, %v1085
      %v1088 = vmul.f32 %v1078, %v1085
      %v1089 = vmul.f32 %v1079, %v1085
      %v1090 = vld [vmem:[%s3] sm:$0x1]
      %v1092 = vlaneseq
      %v1093 = vshrl.u32 %v1092, 7
      %v1094 = vsub.s32 0, %v1093
      %v1095 = vrot.slane %v1090, %v1094
      %v1097 = vadd.f32 %v1087, %v1095
      %v1098 = vadd.f32 %v1088, %v1095
      %v1099 = vadd.f32 %v1089, %v1095
      %1100 = vst.msk [vmem:[%s197] sm:$0xff] %vm199, %v1097
      %1101 = vst.msk [vmem:[%s197 + $0x8] sm:$0xff] %vm199, %v1098
      %1102 = vst.msk [vmem:[%s197 + $0x10] sm:$0xff] %vm199, %v1099
      %p1103 = scmp.lt.s32.totalorder %s15, 1
      %s1104 = scalar_select %p1103, %s15, 1
      %s1105 = smul.addr %s1104, 3
      %s1106 = smul.addr %s1105, 8
      %s1107 = scalar_lea.vmem %s4, %s1106
      // Predicated region
      $region37: #{vit_forward.25} parent=35 // pred_check
        %p1108 = pneg %p122
      $region38: #{vit_forward.25} parent=35 // pred_check_branch
        %1110 = sbr.rel (%p1108) target = $region40
      $region39: #{vit_forward.25} parent=35 // pred_region
        _
      $region40: #{vit_forward.25} parent=35 // pred_fallthru
        _
    $region36: #{vit_forward.25} parent=5 // pred_fallthru
      _
    %p1111 = scmp.le.s32.totalorder 2, %s10
    // Predicated region
    $region41: #{vit_forward.25} parent=5 // pred_check
      %p1112 = pneg %p1111
    $region42: #{vit_forward.25} parent=5 // pred_check_branch
      %1114 = sbr.rel (%p1112) target = $region44
    $region43: #{vit_forward.25} parent=5 // pred_region
      %s1115 = ssub.s32 %s10, 2
      // Predicated region
      $region45: #{vit_forward.25} parent=43 // pred_check
        %p1116 = pneg %p128
      $region46: #{vit_forward.25} parent=43 // pred_check_branch
        %1118 = sbr.rel (%p1116) target = $region48
      $region47: #{vit_forward.25} parent=43 // pred_region
        %p1119 = scmp.lt.s32.totalorder %s16, 1
        %s1120 = scalar_select %p1119, %s16, 1
        %s1121 = smul.addr %s1120, 3
        %s1122 = smul.addr %s1121, 8
        %s1123 = scalar_lea.vmem %s4, %s1122
      $region48: #{vit_forward.25} parent=43 // pred_fallthru
        _
    $region44: #{vit_forward.25} parent=5 // pred_fallthru
      _
  $region6: #{vit_forward.25} parent=0 // loop_footer
    %s14 = sadd.s32 1, %s10
  $region7: #{vit_forward.25} parent=0 // loop_footer_branch
    %9 = sbr.rel target = $region3
  $region8: #{vit_forward.25} parent=0 // loop_exit
    _

</llo_original>
